<compile_context>
chip_gen: v5e
topology: v5e:2x2
jax: 0.10.0
libtpu: 0.0.40
codegen_flags: <defaults>
</compile_context>

<pallas_src>
import functools

import jax
import jax.numpy as jnp
from jax.experimental import pallas as pl
from jax.experimental.pallas import tpu as pltpu


def _make_kernel(num_steps, i_per_y, j_per_x, w_pad, offset, vmin, vmax, umin, umax):
    """Builds the time-loop kernel with every parameter baked in as a closure constant."""
    i_per_y = float(i_per_y)
    j_per_x = float(j_per_x)
    vmin, vmax = float(vmin), float(vmax)
    umin, umax = float(umin), float(umax)
    w_pad = int(w_pad)
    offset = int(offset)

    def kernel(icv_ref, icu_ref, axon_ref, vt_ref, st_ref):
        v = jnp.float32(0.0)
        u = jnp.float32(0.0)
        # Fully unrolled time loop: num_steps is static and the body is ~12 scalar ops,
        # so full unroll is tiny in code size and gives the scheduler full visibility.
        for t in range(num_steps):
            # fetch_current: truncate-toward-zero index (matches python int()); the
            # negative-index wrap and the out-of-range clamp are already baked into the
            # padded tables, so only trunc -> scale -> add remains on the serial chain.
            i = (u * i_per_y).astype(jnp.int32)
            j = (v * j_per_x).astype(jnp.int32)
            idx = i * w_pad + j + offset          # w_pad is a power of 2 -> shift
            # Spike trace = axon at the *pre-update* state (reference ordering);
            # this load/store sits off the serial v/u chain.
            st_ref[t] = axon_ref[idx]
            # Membrane update; dt/C and the injected current are folded into the tables:
            #   icv_eff = (iCv + input)/Cv*dt ,  icu_eff = iCu/Cu*dt
            v_new = v + icv_ref[idx]
            u_new = u + icu_ref[idx]
            # rail_out (reference semantics, both conditions test the pre-rail value):
            #   v -> clamp to [vmin, vmax];  u keeps the quirk (u > umax -> set to *vmax*).
            v = jnp.minimum(jnp.maximum(v_new, vmin), vmax)
            u = jnp.where(u_new > umax, vmax, u_new)
            u = jnp.where(u_new < umin, umin, u)
            # record after rail_out (reference ordering).
            vt_ref[t] = v

    return kernel


@functools.partial(
    jax.jit,
    static_argnames=("dt", "Tsim", "Cv", "Cu", "vmin", "vmax", "umin", "umax"))
def spiking_net(input_current, icv, icu, axon, *, dt, Tsim, Cv, Cu,
                vmin, vmax, umin, umax):
    """Net.forward equivalent: returns (v_t, s_t), each of shape (num_steps,)."""
    H, W = icv.shape
    # Matches the reference exactly (float truncation semantics kept on purpose).
    num_steps = int(Tsim / dt) + 1
    j_per_x = (W - 1) / (vmax - vmin)
    i_per_y = (H - 1) / (umax - umin)

    # ---- static index ranges reachable under the rails (+ safety margin) -------------
    # After rail_out: v in [vmin, vmax];  u in [umin, umax] or {vmax, umin} (quirk);
    # the initial state is (0, 0).
    u_lo, u_hi = min(umin, vmax, 0.0), max(umax, vmax, 0.0)
    v_lo, v_hi = min(vmin, 0.0), max(vmax, 0.0)
    i_lo = int(u_lo * i_per_y) - 2
    i_hi = int(u_hi * i_per_y) + 2
    j_lo = int(v_lo * j_per_x) - 2
    j_hi = int(v_hi * j_per_x) + 2
    h_pad = i_hi - i_lo + 1
    w_raw = j_hi - j_lo + 1
    w_pad = 1 << (w_raw - 1).bit_length()          # power of 2 -> idx multiply is a shift
    offset = (-i_lo) * w_pad + (-j_lo)

    # ---- one-time table prep (inside jit -> fuses into a single dispatch) ------------
    inp = jnp.asarray(input_current, jnp.float32)
    icv_eff = (icv.astype(jnp.float32) + inp) / jnp.float32(Cv) * jnp.float32(dt)
    icu_eff = icu.astype(jnp.float32) / jnp.float32(Cu) * jnp.float32(dt)
    axon_f = axon.astype(jnp.float32)

    # Pre-padded tables addressed by (i - i_lo, j - j_lo): entries already encode the
    # python-style negative-index wrap and the clamp of positive out-of-range indices.
    # TODO(synk): positive out-of-range indices (e.g. from the u > umax -> vmax quirk)
    # raise IndexError in torch; they are clamped to the table edge here.
    # TODO(synk): indices below -H / -W would wrap once then clamp instead of erroring;
    # unreachable with the current rail bounds.
    ii = jnp.arange(h_pad, dtype=jnp.int32) + i_lo
    jj = jnp.arange(w_pad, dtype=jnp.int32) + j_lo
    ii = jnp.clip(jnp.where(ii < 0, ii + H, ii), 0, H - 1)
    jj = jnp.clip(jnp.where(jj < 0, jj + W, jj), 0, W - 1)
    icv_pad = icv_eff[ii[:, None], jj[None, :]].reshape(-1)
    icu_pad = icu_eff[ii[:, None], jj[None, :]].reshape(-1)
    axon_pad = axon_f[ii[:, None], jj[None, :]].reshape(-1)

    kernel = _make_kernel(num_steps, i_per_y, j_per_x, w_pad, offset,
                          vmin, vmax, umin, umax)

    smem = pl.BlockSpec(memory_space=pltpu.MemorySpace.SMEM)
    # TODO(synk): for very long simulations (num_steps >> 1e4) move the traces to
    # lane-dense VMEM chunks via a time-axis grid; at ~100 steps SMEM is optimal.
    vt, st = pl.pallas_call(
        kernel,
        out_shape=(jax.ShapeDtypeStruct((num_steps,), jnp.float32),
                   jax.ShapeDtypeStruct((num_steps,), jnp.float32)),
        in_specs=[smem, smem, smem],
        out_specs=(smem, smem),
    )(icv_pad, icu_pad, axon_pad)
    return vt, st


if __name__ == "__main__":
    # ---- deterministic synthetic NeuronMeshGrid (replaces 'neuron.pickle') ----------
    # TODO(synk): original phase-plane data comes from a pickle file; synthesized here.
    key = jax.random.PRNGKey(0)
    k1, k2 = jax.random.split(key)
    H, W = 32, 64                          # phase-plane grid (u rows, v cols)
    vmin, vmax = -0.08, 0.05               # membrane-potential range [V]
    umin, umax = -0.02, 0.02               # recovery-variable range
    v_axis = jnp.linspace(vmin, vmax, W)
    u_axis = jnp.linspace(umin, umax, H)
    vv, uu = jnp.meshgrid(v_axis, u_axis)  # each (H, W)
    icv = (1e-12 * (jnp.sin(40.0 * vv) - 5.0 * uu / umax)
           + 1e-13 * jax.random.normal(k1, (H, W))).astype(jnp.float32)
    icu = (1e-12 * (0.5 * vv / vmax - uu / umax)
           + 1e-13 * jax.random.normal(k2, (H, W))).astype(jnp.float32)
    axon = (vv > 0.03).astype(jnp.float32)  # spike indicator on the phase plane

    # ---- Net parameters (module defaults, small Tsim so num_steps stays small) ------
    dt = 1e-6
    Tsim = 1e-4                             # -> num_steps = 101
    Cv, Cu = 5e-14, 3e-14
    input_current = 3e-12                   # matches `input = torch.tensor([[3e-12]])`

    v_t, s_t = spiking_net(jnp.float32(input_current), icv, icu, axon,
                           dt=dt, Tsim=Tsim, Cv=Cv, Cu=Cu,
                           vmin=vmin, vmax=vmax, umin=umin, umax=umax)
    jax.block_until_ready((v_t, s_t))

    num_steps = int(Tsim / dt) + 1
    assert v_t.shape == (num_steps,)
    assert s_t.shape == (num_steps,)
    assert bool(jnp.all(jnp.isfinite(v_t)))
    assert bool(jnp.all(jnp.isfinite(s_t)))
    assert bool(jnp.all(v_t >= vmin)) and bool(jnp.all(v_t <= vmax))
    print("KERNEL_OK")
</pallas_src>

<mosaic_0001>
module attributes {stable_mosaic.version = 11 : i64} {
  func.func @kernel(%arg0: memref<7424xf32, #tpu.memory_space<smem>>, %arg1: memref<7424xf32, #tpu.memory_space<smem>>, %arg2: memref<7424xf32, #tpu.memory_space<smem>>, %arg3: memref<101xf32, #tpu.memory_space<smem>>, %arg4: memref<101xf32, #tpu.memory_space<smem>>) attributes {dimension_semantics = [], scalar_prefetch = 0 : i64, scratch_operands = 0 : i64, tpu.core_type = #tpu.core_type<tc>} {
    %cst = arith.constant 0.000000e+00 : f32
    %cst_0 = arith.constant 7.750000e+02 : f32
    %0 = arith.mulf %cst, %cst_0 : f32
    %1 = arith.fptosi %0 : f32 to i32
    %cst_1 = arith.constant 0.000000e+00 : f32
    %cst_2 = arith.constant 484.615387 : f32
    %2 = arith.mulf %cst_1, %cst_2 : f32
    %3 = arith.fptosi %2 : f32 to i32
    %c128_i32 = arith.constant 128 : i32
    %4 = arith.muli %1, %c128_i32 : i32
    %5 = arith.addi %4, %3 : i32
    %c2216_i32 = arith.constant 2216 : i32
    %6 = arith.addi %5, %c2216_i32 : i32
    %7 = arith.index_cast %6 : i32 to index
    %8 = memref.load %arg2[%7] : memref<7424xf32, #tpu.memory_space<smem>>
    %c0 = arith.constant 0 : index
    %9 = memref.load %arg4[%c0] : memref<101xf32, #tpu.memory_space<smem>>
    memref.store %8, %arg4[%c0] : memref<101xf32, #tpu.memory_space<smem>>
    %10 = arith.index_cast %6 : i32 to index
    %11 = memref.load %arg0[%10] : memref<7424xf32, #tpu.memory_space<smem>>
    %cst_3 = arith.constant 0.000000e+00 : f32
    %12 = arith.addf %cst_3, %11 : f32
    %13 = arith.index_cast %6 : i32 to index
    %14 = memref.load %arg1[%13] : memref<7424xf32, #tpu.memory_space<smem>>
    %cst_4 = arith.constant 0.000000e+00 : f32
    %15 = arith.addf %cst_4, %14 : f32
    %cst_5 = arith.constant -8.000000e-02 : f32
    %16 = arith.maximumf %12, %cst_5 : f32
    %cst_6 = arith.constant 5.000000e-02 : f32
    %17 = arith.minimumf %16, %cst_6 : f32
    %cst_7 = arith.constant 2.000000e-02 : f32
    %18 = arith.cmpf ogt, %15, %cst_7 : f32
    %cst_8 = arith.constant 5.000000e-02 : f32
    %19 = arith.select %18, %cst_8, %15 : f32
    %cst_9 = arith.constant -2.000000e-02 : f32
    %20 = arith.cmpf olt, %15, %cst_9 : f32
    %cst_10 = arith.constant -2.000000e-02 : f32
    %21 = arith.select %20, %cst_10, %19 : f32
    %c0_11 = arith.constant 0 : index
    %22 = memref.load %arg3[%c0_11] : memref<101xf32, #tpu.memory_space<smem>>
    memref.store %17, %arg3[%c0_11] : memref<101xf32, #tpu.memory_space<smem>>
    %cst_12 = arith.constant 7.750000e+02 : f32
    %23 = arith.mulf %21, %cst_12 : f32
    %24 = arith.fptosi %23 : f32 to i32
    %cst_13 = arith.constant 484.615387 : f32
    %25 = arith.mulf %17, %cst_13 : f32
    %26 = arith.fptosi %25 : f32 to i32
    %c128_i32_14 = arith.constant 128 : i32
    %27 = arith.muli %24, %c128_i32_14 : i32
    %28 = arith.addi %27, %26 : i32
    %c2216_i32_15 = arith.constant 2216 : i32
    %29 = arith.addi %28, %c2216_i32_15 : i32
    %30 = arith.index_cast %29 : i32 to index
    %31 = memref.load %arg2[%30] : memref<7424xf32, #tpu.memory_space<smem>>
    %c1 = arith.constant 1 : index
    %32 = memref.load %arg4[%c1] : memref<101xf32, #tpu.memory_space<smem>>
    memref.store %31, %arg4[%c1] : memref<101xf32, #tpu.memory_space<smem>>
    %33 = arith.index_cast %29 : i32 to index
    %34 = memref.load %arg0[%33] : memref<7424xf32, #tpu.memory_space<smem>>
    %35 = arith.addf %17, %34 : f32
    %36 = arith.index_cast %29 : i32 to index
    %37 = memref.load %arg1[%36] : memref<7424xf32, #tpu.memory_space<smem>>
    %38 = arith.addf %21, %37 : f32
    %cst_16 = arith.constant -8.000000e-02 : f32
    %39 = arith.maximumf %35, %cst_16 : f32
    %cst_17 = arith.constant 5.000000e-02 : f32
    %40 = arith.minimumf %39, %cst_17 : f32
    %cst_18 = arith.constant 2.000000e-02 : f32
    %41 = arith.cmpf ogt, %38, %cst_18 : f32
    %cst_19 = arith.constant 5.000000e-02 : f32
    %42 = arith.select %41, %cst_19, %38 : f32
    %cst_20 = arith.constant -2.000000e-02 : f32
    %43 = arith.cmpf olt, %38, %cst_20 : f32
    %cst_21 = arith.constant -2.000000e-02 : f32
    %44 = arith.select %43, %cst_21, %42 : f32
    %c1_22 = arith.constant 1 : index
    %45 = memref.load %arg3[%c1_22] : memref<101xf32, #tpu.memory_space<smem>>
    memref.store %40, %arg3[%c1_22] : memref<101xf32, #tpu.memory_space<smem>>
    %cst_23 = arith.constant 7.750000e+02 : f32
    %46 = arith.mulf %44, %cst_23 : f32
    %47 = arith.fptosi %46 : f32 to i32
    %cst_24 = arith.constant 484.615387 : f32
    %48 = arith.mulf %40, %cst_24 : f32
    %49 = arith.fptosi %48 : f32 to i32
    %c128_i32_25 = arith.constant 128 : i32
    %50 = arith.muli %47, %c128_i32_25 : i32
    %51 = arith.addi %50, %49 : i32
    %c2216_i32_26 = arith.constant 2216 : i32
    %52 = arith.addi %51, %c2216_i32_26 : i32
    %53 = arith.index_cast %52 : i32 to index
    %54 = memref.load %arg2[%53] : memref<7424xf32, #tpu.memory_space<smem>>
    %c2 = arith.constant 2 : index
    %55 = memref.load %arg4[%c2] : memref<101xf32, #tpu.memory_space<smem>>
    memref.store %54, %arg4[%c2] : memref<101xf32, #tpu.memory_space<smem>>
    %56 = arith.index_cast %52 : i32 to index
    %57 = memref.load %arg0[%56] : memref<7424xf32, #tpu.memory_space<smem>>
    %58 = arith.addf %40, %57 : f32
    %59 = arith.index_cast %52 : i32 to index
    %60 = memref.load %arg1[%59] : memref<7424xf32, #tpu.memory_space<smem>>
    %61 = arith.addf %44, %60 : f32
    %cst_27 = arith.constant -8.000000e-02 : f32
    %62 = arith.maximumf %58, %cst_27 : f32
    %cst_28 = arith.constant 5.000000e-02 : f32
    %63 = arith.minimumf %62, %cst_28 : f32
    %cst_29 = arith.constant 2.000000e-02 : f32
    %64 = arith.cmpf ogt, %61, %cst_29 : f32
    %cst_30 = arith.constant 5.000000e-02 : f32
    %65 = arith.select %64, %cst_30, %61 : f32
    %cst_31 = arith.constant -2.000000e-02 : f32
    %66 = arith.cmpf olt, %61, %cst_31 : f32
    %cst_32 = arith.constant -2.000000e-02 : f32
    %67 = arith.select %66, %cst_32, %65 : f32
    %c2_33 = arith.constant 2 : index
    %68 = memref.load %arg3[%c2_33] : memref<101xf32, #tpu.memory_space<smem>>
    memref.store %63, %arg3[%c2_33] : memref<101xf32, #tpu.memory_space<smem>>
    %cst_34 = arith.constant 7.750000e+02 : f32
    %69 = arith.mulf %67, %cst_34 : f32
    %70 = arith.fptosi %69 : f32 to i32
    %cst_35 = arith.constant 484.615387 : f32
    %71 = arith.mulf %63, %cst_35 : f32
    %72 = arith.fptosi %71 : f32 to i32
    %c128_i32_36 = arith.constant 128 : i32
    %73 = arith.muli %70, %c128_i32_36 : i32
    %74 = arith.addi %73, %72 : i32
    %c2216_i32_37 = arith.constant 2216 : i32
    %75 = arith.addi %74, %c2216_i32_37 : i32
    %76 = arith.index_cast %75 : i32 to index
    %77 = memref.load %arg2[%76] : memref<7424xf32, #tpu.memory_space<smem>>
    %c3 = arith.constant 3 : index
    %78 = memref.load %arg4[%c3] : memref<101xf32, #tpu.memory_space<smem>>
    memref.store %77, %arg4[%c3] : memref<101xf32, #tpu.memory_space<smem>>
    %79 = arith.index_cast %75 : i32 to index
    %80 = memref.load %arg0[%79] : memref<7424xf32, #tpu.memory_space<smem>>
    %81 = arith.addf %63, %80 : f32
    %82 = arith.index_cast %75 : i32 to index
    %83 = memref.load %arg1[%82] : memref<7424xf32, #tpu.memory_space<smem>>
    %84 = arith.addf %67, %83 : f32
    %cst_38 = arith.constant -8.000000e-02 : f32
    %85 = arith.maximumf %81, %cst_38 : f32
    %cst_39 = arith.constant 5.000000e-02 : f32
    %86 = arith.minimumf %85, %cst_39 : f32
    %cst_40 = arith.constant 2.000000e-02 : f32
    %87 = arith.cmpf ogt, %84, %cst_40 : f32
    %cst_41 = arith.constant 5.000000e-02 : f32
    %88 = arith.select %87, %cst_41, %84 : f32
    %cst_42 = arith.constant -2.000000e-02 : f32
    %89 = arith.cmpf olt, %84, %cst_42 : f32
    %cst_43 = arith.constant -2.000000e-02 : f32
    %90 = arith.select %89, %cst_43, %88 : f32
    %c3_44 = arith.constant 3 : index
    %91 = memref.load %arg3[%c3_44] : memref<101xf32, #tpu.memory_space<smem>>
    memref.store %86, %arg3[%c3_44] : memref<101xf32, #tpu.memory_space<smem>>
    %cst_45 = arith.constant 7.750000e+02 : f32
    %92 = arith.mulf %90, %cst_45 : f32
    %93 = arith.fptosi %92 : f32 to i32
    %cst_46 = arith.constant 484.615387 : f32
    %94 = arith.mulf %86, %cst_46 : f32
    %95 = arith.fptosi %94 : f32 to i32
    %c128_i32_47 = arith.constant 128 : i32
    %96 = arith.muli %93, %c128_i32_47 : i32
    %97 = arith.addi %96, %95 : i32
    %c2216_i32_48 = arith.constant 2216 : i32
    %98 = arith.addi %97, %c2216_i32_48 : i32
    %99 = arith.index_cast %98 : i32 to index
    %100 = memref.load %arg2[%99] : memref<7424xf32, #tpu.memory_space<smem>>
    %c4 = arith.constant 4 : index
    %101 = memref.load %arg4[%c4] : memref<101xf32, #tpu.memory_space<smem>>
    memref.store %100, %arg4[%c4] : memref<101xf32, #tpu.memory_space<smem>>
    %102 = arith.index_cast %98 : i32 to index
    %103 = memref.load %arg0[%102] : memref<7424xf32, #tpu.memory_space<smem>>
    %104 = arith.addf %86, %103 : f32
    %105 = arith.index_cast %98 : i32 to index
    %106 = memref.load %arg1[%105] : memref<7424xf32, #tpu.memory_space<smem>>
    %107 = arith.addf %90, %106 : f32
    %cst_49 = arith.constant -8.000000e-02 : f32
    %108 = arith.maximumf %104, %cst_49 : f32
    %cst_50 = arith.constant 5.000000e-02 : f32
    %109 = arith.minimumf %108, %cst_50 : f32
    %cst_51 = arith.constant 2.000000e-02 : f32
    %110 = arith.cmpf ogt, %107, %cst_51 : f32
    %cst_52 = arith.constant 5.000000e-02 : f32
    %111 = arith.select %110, %cst_52, %107 : f32
    %cst_53 = arith.constant -2.000000e-02 : f32
    %112 = arith.cmpf olt, %107, %cst_53 : f32
    %cst_54 = arith.constant -2.000000e-02 : f32
    %113 = arith.select %112, %cst_54, %111 : f32
    %c4_55 = arith.constant 4 : index
    %114 = memref.load %arg3[%c4_55] : memref<101xf32, #tpu.memory_space<smem>>
    memref.store %109, %arg3[%c4_55] : memref<101xf32, #tpu.memory_space<smem>>
    %cst_56 = arith.constant 7.750000e+02 : f32
    %115 = arith.mulf %113, %cst_56 : f32
    %116 = arith.fptosi %115 : f32 to i32
    %cst_57 = arith.constant 484.615387 : f32
    %117 = arith.mulf %109, %cst_57 : f32
    %118 = arith.fptosi %117 : f32 to i32
    %c128_i32_58 = arith.constant 128 : i32
    %119 = arith.muli %116, %c128_i32_58 : i32
    %120 = arith.addi %119, %118 : i32
    %c2216_i32_59 = arith.constant 2216 : i32
    %121 = arith.addi %120, %c2216_i32_59 : i32
    %122 = arith.index_cast %121 : i32 to index
    %123 = memref.load %arg2[%122] : memref<7424xf32, #tpu.memory_space<smem>>
    %c5 = arith.constant 5 : index
    %124 = memref.load %arg4[%c5] : memref<101xf32, #tpu.memory_space<smem>>
    memref.store %123, %arg4[%c5] : memref<101xf32, #tpu.memory_space<smem>>
    %125 = arith.index_cast %121 : i32 to index
    %126 = memref.load %arg0[%125] : memref<7424xf32, #tpu.memory_space<smem>>
    %127 = arith.addf %109, %126 : f32
    %128 = arith.index_cast %121 : i32 to index
    %129 = memref.load %arg1[%128] : memref<7424xf32, #tpu.memory_space<smem>>
    %130 = arith.addf %113, %129 : f32
    %cst_60 = arith.constant -8.000000e-02 : f32
    %131 = arith.maximumf %127, %cst_60 : f32
    %cst_61 = arith.constant 5.000000e-02 : f32
    %132 = arith.minimumf %131, %cst_61 : f32
    %cst_62 = arith.constant 2.000000e-02 : f32
    %133 = arith.cmpf ogt, %130, %cst_62 : f32
    %cst_63 = arith.constant 5.000000e-02 : f32
    %134 = arith.select %133, %cst_63, %130 : f32
    %cst_64 = arith.constant -2.000000e-02 : f32
    %135 = arith.cmpf olt, %130, %cst_64 : f32
    %cst_65 = arith.constant -2.000000e-02 : f32
    %136 = arith.select %135, %cst_65, %134 : f32
    %c5_66 = arith.constant 5 : index
    %137 = memref.load %arg3[%c5_66] : memref<101xf32, #tpu.memory_space<smem>>
    memref.store %132, %arg3[%c5_66] : memref<101xf32, #tpu.memory_space<smem>>
    %cst_67 = arith.constant 7.750000e+02 : f32
    %138 = arith.mulf %136, %cst_67 : f32
    %139 = arith.fptosi %138 : f32 to i32
    %cst_68 = arith.constant 484.615387 : f32
    %140 = arith.mulf %132, %cst_68 : f32
    %141 = arith.fptosi %140 : f32 to i32
    %c128_i32_69 = arith.constant 128 : i32
    %142 = arith.muli %139, %c128_i32_69 : i32
    %143 = arith.addi %142, %141 : i32
    %c2216_i32_70 = arith.constant 2216 : i32
    %144 = arith.addi %143, %c2216_i32_70 : i32
    %145 = arith.index_cast %144 : i32 to index
    %146 = memref.load %arg2[%145] : memref<7424xf32, #tpu.memory_space<smem>>
    %c6 = arith.constant 6 : index
    %147 = memref.load %arg4[%c6] : memref<101xf32, #tpu.memory_space<smem>>
    memref.store %146, %arg4[%c6] : memref<101xf32, #tpu.memory_space<smem>>
    %148 = arith.index_cast %144 : i32 to index
    %149 = memref.load %arg0[%148] : memref<7424xf32, #tpu.memory_space<smem>>
    %150 = arith.addf %132, %149 : f32
    %151 = arith.index_cast %144 : i32 to index
    %152 = memref.load %arg1[%151] : memref<7424xf32, #tpu.memory_space<smem>>
    %153 = arith.addf %136, %152 : f32
    %cst_71 = arith.constant -8.000000e-02 : f32
    %154 = arith.maximumf %150, %cst_71 : f32
    %cst_72 = arith.constant 5.000000e-02 : f32
    %155 = arith.minimumf %154, %cst_72 : f32
    %cst_73 = arith.constant 2.000000e-02 : f32
    %156 = arith.cmpf ogt, %153, %cst_73 : f32
    %cst_74 = arith.constant 5.000000e-02 : f32
    %157 = arith.select %156, %cst_74, %153 : f32
    %cst_75 = arith.constant -2.000000e-02 : f32
    %158 = arith.cmpf olt, %153, %cst_75 : f32
    %cst_76 = arith.constant -2.000000e-02 : f32
    %159 = arith.select %158, %cst_76, %157 : f32
    %c6_77 = arith.constant 6 : index
    %160 = memref.load %arg3[%c6_77] : memref<101xf32, #tpu.memory_space<smem>>
    memref.store %155, %arg3[%c6_77] : memref<101xf32, #tpu.memory_space<smem>>
    %cst_78 = arith.constant 7.750000e+02 : f32
    %161 = arith.mulf %159, %cst_78 : f32
    %162 = arith.fptosi %161 : f32 to i32
    %cst_79 = arith.constant 484.615387 : f32
    %163 = arith.mulf %155, %cst_79 : f32
    %164 = arith.fptosi %163 : f32 to i32
    %c128_i32_80 = arith.constant 128 : i32
    %165 = arith.muli %162, %c128_i32_80 : i32
    %166 = arith.addi %165, %164 : i32
    %c2216_i32_81 = arith.constant 2216 : i32
    %167 = arith.addi %166, %c2216_i32_81 : i32
    %168 = arith.index_cast %167 : i32 to index
    %169 = memref.load %arg2[%168] : memref<7424xf32, #tpu.memory_space<smem>>
    %c7 = arith.constant 7 : index
    %170 = memref.load %arg4[%c7] : memref<101xf32, #tpu.memory_space<smem>>
    memref.store %169, %arg4[%c7] : memref<101xf32, #tpu.memory_space<smem>>
    %171 = arith.index_cast %167 : i32 to index
    %172 = memref.load %arg0[%171] : memref<7424xf32, #tpu.memory_space<smem>>
    %173 = arith.addf %155, %172 : f32
    %174 = arith.index_cast %167 : i32 to index
    %175 = memref.load %arg1[%174] : memref<7424xf32, #tpu.memory_space<smem>>
    %176 = arith.addf %159, %175 : f32
    %cst_82 = arith.constant -8.000000e-02 : f32
    %177 = arith.maximumf %173, %cst_82 : f32
    %cst_83 = arith.constant 5.000000e-02 : f32
    %178 = arith.minimumf %177, %cst_83 : f32
    %cst_84 = arith.constant 2.000000e-02 : f32
    %179 = arith.cmpf ogt, %176, %cst_84 : f32
    %cst_85 = arith.constant 5.000000e-02 : f32
    %180 = arith.select %179, %cst_85, %176 : f32
    %cst_86 = arith.constant -2.000000e-02 : f32
    %181 = arith.cmpf olt, %176, %cst_86 : f32
    %cst_87 = arith.constant -2.000000e-02 : f32
    %182 = arith.select %181, %cst_87, %180 : f32
    %c7_88 = arith.constant 7 : index
    %183 = memref.load %arg3[%c7_88] : memref<101xf32, #tpu.memory_space<smem>>
    memref.store %178, %arg3[%c7_88] : memref<101xf32, #tpu.memory_space<smem>>
    %cst_89 = arith.constant 7.750000e+02 : f32
    %184 = arith.mulf %182, %cst_89 : f32
    %185 = arith.fptosi %184 : f32 to i32
    %cst_90 = arith.constant 484.615387 : f32
    %186 = arith.mulf %178, %cst_90 : f32
    %187 = arith.fptosi %186 : f32 to i32
    %c128_i32_91 = arith.constant 128 : i32
    %188 = arith.muli %185, %c128_i32_91 : i32
    %189 = arith.addi %188, %187 : i32
    %c2216_i32_92 = arith.constant 2216 : i32
    %190 = arith.addi %189, %c2216_i32_92 : i32
    %191 = arith.index_cast %190 : i32 to index
    %192 = memref.load %arg2[%191] : memref<7424xf32, #tpu.memory_space<smem>>
    %c8 = arith.constant 8 : index
    %193 = memref.load %arg4[%c8] : memref<101xf32, #tpu.memory_space<smem>>
    memref.store %192, %arg4[%c8] : memref<101xf32, #tpu.memory_space<smem>>
    %194 = arith.index_cast %190 : i32 to index
    %195 = memref.load %arg0[%194] : memref<7424xf32, #tpu.memory_space<smem>>
    %196 = arith.addf %178, %195 : f32
    %197 = arith.index_cast %190 : i32 to index
    %198 = memref.load %arg1[%197] : memref<7424xf32, #tpu.memory_space<smem>>
    %199 = arith.addf %182, %198 : f32
    %cst_93 = arith.constant -8.000000e-02 : f32
    %200 = arith.maximumf %196, %cst_93 : f32
    %cst_94 = arith.constant 5.000000e-02 : f32
    %201 = arith.minimumf %200, %cst_94 : f32
    %cst_95 = arith.constant 2.000000e-02 : f32
    %202 = arith.cmpf ogt, %199, %cst_95 : f32
    %cst_96 = arith.constant 5.000000e-02 : f32
    %203 = arith.select %202, %cst_96, %199 : f32
    %cst_97 = arith.constant -2.000000e-02 : f32
    %204 = arith.cmpf olt, %199, %cst_97 : f32
    %cst_98 = arith.constant -2.000000e-02 : f32
    %205 = arith.select %204, %cst_98, %203 : f32
    %c8_99 = arith.constant 8 : index
    %206 = memref.load %arg3[%c8_99] : memref<101xf32, #tpu.memory_space<smem>>
    memref.store %201, %arg3[%c8_99] : memref<101xf32, #tpu.memory_space<smem>>
    %cst_100 = arith.constant 7.750000e+02 : f32
    %207 = arith.mulf %205, %cst_100 : f32
    %208 = arith.fptosi %207 : f32 to i32
    %cst_101 = arith.constant 484.615387 : f32
    %209 = arith.mulf %201, %cst_101 : f32
    %210 = arith.fptosi %209 : f32 to i32
    %c128_i32_102 = arith.constant 128 : i32
    %211 = arith.muli %208, %c128_i32_102 : i32
    %212 = arith.addi %211, %210 : i32
    %c2216_i32_103 = arith.constant 2216 : i32
    %213 = arith.addi %212, %c2216_i32_103 : i32
    %214 = arith.index_cast %213 : i32 to index
    %215 = memref.load %arg2[%214] : memref<7424xf32, #tpu.memory_space<smem>>
    %c9 = arith.constant 9 : index
    %216 = memref.load %arg4[%c9] : memref<101xf32, #tpu.memory_space<smem>>
    memref.store %215, %arg4[%c9] : memref<101xf32, #tpu.memory_space<smem>>
    %217 = arith.index_cast %213 : i32 to index
    %218 = memref.load %arg0[%217] : memref<7424xf32, #tpu.memory_space<smem>>
    %219 = arith.addf %201, %218 : f32
    %220 = arith.index_cast %213 : i32 to index
    %221 = memref.load %arg1[%220] : memref<7424xf32, #tpu.memory_space<smem>>
    %222 = arith.addf %205, %221 : f32
    %cst_104 = arith.constant -8.000000e-02 : f32
    %223 = arith.maximumf %219, %cst_104 : f32
    %cst_105 = arith.constant 5.000000e-02 : f32
    %224 = arith.minimumf %223, %cst_105 : f32
    %cst_106 = arith.constant 2.000000e-02 : f32
    %225 = arith.cmpf ogt, %222, %cst_106 : f32
    %cst_107 = arith.constant 5.000000e-02 : f32
    %226 = arith.select %225, %cst_107, %222 : f32
    %cst_108 = arith.constant -2.000000e-02 : f32
    %227 = arith.cmpf olt, %222, %cst_108 : f32
    %cst_109 = arith.constant -2.000000e-02 : f32
    %228 = arith.select %227, %cst_109, %226 : f32
    %c9_110 = arith.constant 9 : index
    %229 = memref.load %arg3[%c9_110] : memref<101xf32, #tpu.memory_space<smem>>
    memref.store %224, %arg3[%c9_110] : memref<101xf32, #tpu.memory_space<smem>>
    %cst_111 = arith.constant 7.750000e+02 : f32
    %230 = arith.mulf %228, %cst_111 : f32
    %231 = arith.fptosi %230 : f32 to i32
    %cst_112 = arith.constant 484.615387 : f32
    %232 = arith.mulf %224, %cst_112 : f32
    %233 = arith.fptosi %232 : f32 to i32
    %c128_i32_113 = arith.constant 128 : i32
    %234 = arith.muli %231, %c128_i32_113 : i32
    %235 = arith.addi %234, %233 : i32
    %c2216_i32_114 = arith.constant 2216 : i32
    %236 = arith.addi %235, %c2216_i32_114 : i32
    %237 = arith.index_cast %236 : i32 to index
    %238 = memref.load %arg2[%237] : memref<7424xf32, #tpu.memory_space<smem>>
    %c10 = arith.constant 10 : index
    %239 = memref.load %arg4[%c10] : memref<101xf32, #tpu.memory_space<smem>>
    memref.store %238, %arg4[%c10] : memref<101xf32, #tpu.memory_space<smem>>
    %240 = arith.index_cast %236 : i32 to index
    %241 = memref.load %arg0[%240] : memref<7424xf32, #tpu.memory_space<smem>>
    %242 = arith.addf %224, %241 : f32
    %243 = arith.index_cast %236 : i32 to index
    %244 = memref.load %arg1[%243] : memref<7424xf32, #tpu.memory_space<smem>>
    %245 = arith.addf %228, %244 : f32
    %cst_115 = arith.constant -8.000000e-02 : f32
    %246 = arith.maximumf %242, %cst_115 : f32
    %cst_116 = arith.constant 5.000000e-02 : f32
    %247 = arith.minimumf %246, %cst_116 : f32
    %cst_117 = arith.constant 2.000000e-02 : f32
    %248 = arith.cmpf ogt, %245, %cst_117 : f32
    %cst_118 = arith.constant 5.000000e-02 : f32
    %249 = arith.select %248, %cst_118, %245 : f32
    %cst_119 = arith.constant -2.000000e-02 : f32
    %250 = arith.cmpf olt, %245, %cst_119 : f32
    %cst_120 = arith.constant -2.000000e-02 : f32
    %251 = arith.select %250, %cst_120, %249 : f32
    %c10_121 = arith.constant 10 : index
    %252 = memref.load %arg3[%c10_121] : memref<101xf32, #tpu.memory_space<smem>>
    memref.store %247, %arg3[%c10_121] : memref<101xf32, #tpu.memory_space<smem>>
    %cst_122 = arith.constant 7.750000e+02 : f32
    %253 = arith.mulf %251, %cst_122 : f32
    %254 = arith.fptosi %253 : f32 to i32
    %cst_123 = arith.constant 484.615387 : f32
    %255 = arith.mulf %247, %cst_123 : f32
    %256 = arith.fptosi %255 : f32 to i32
    %c128_i32_124 = arith.constant 128 : i32
    %257 = arith.muli %254, %c128_i32_124 : i32
    %258 = arith.addi %257, %256 : i32
    %c2216_i32_125 = arith.constant 2216 : i32
    %259 = arith.addi %258, %c2216_i32_125 : i32
    %260 = arith.index_cast %259 : i32 to index
    %261 = memref.load %arg2[%260] : memref<7424xf32, #tpu.memory_space<smem>>
    %c11 = arith.constant 11 : index
    %262 = memref.load %arg4[%c11] : memref<101xf32, #tpu.memory_space<smem>>
    memref.store %261, %arg4[%c11] : memref<101xf32, #tpu.memory_space<smem>>
    %263 = arith.index_cast %259 : i32 to index
    %264 = memref.load %arg0[%263] : memref<7424xf32, #tpu.memory_space<smem>>
    %265 = arith.addf %247, %264 : f32
    %266 = arith.index_cast %259 : i32 to index
    %267 = memref.load %arg1[%266] : memref<7424xf32, #tpu.memory_space<smem>>
    %268 = arith.addf %251, %267 : f32
    %cst_126 = arith.constant -8.000000e-02 : f32
    %269 = arith.maximumf %265, %cst_126 : f32
    %cst_127 = arith.constant 5.000000e-02 : f32
    %270 = arith.minimumf %269, %cst_127 : f32
    %cst_128 = arith.constant 2.000000e-02 : f32
    %271 = arith.cmpf ogt, %268, %cst_128 : f32
    %cst_129 = arith.constant 5.000000e-02 : f32
    %272 = arith.select %271, %cst_129, %268 : f32
    %cst_130 = arith.constant -2.000000e-02 : f32
    %273 = arith.cmpf olt, %268, %cst_130 : f32
    %cst_131 = arith.constant -2.000000e-02 : f32
    %274 = arith.select %273, %cst_131, %272 : f32
    %c11_132 = arith.constant 11 : index
    %275 = memref.load %arg3[%c11_132] : memref<101xf32, #tpu.memory_space<smem>>
    memref.store %270, %arg3[%c11_132] : memref<101xf32, #tpu.memory_space<smem>>
    %cst_133 = arith.constant 7.750000e+02 : f32
    %276 = arith.mulf %274, %cst_133 : f32
    %277 = arith.fptosi %276 : f32 to i32
    %cst_134 = arith.constant 484.615387 : f32
    %278 = arith.mulf %270, %cst_134 : f32
    %279 = arith.fptosi %278 : f32 to i32
    %c128_i32_135 = arith.constant 128 : i32
    %280 = arith.muli %277, %c128_i32_135 : i32
    %281 = arith.addi %280, %279 : i32
    %c2216_i32_136 = arith.constant 2216 : i32
    %282 = arith.addi %281, %c2216_i32_136 : i32
    %283 = arith.index_cast %282 : i32 to index
    %284 = memref.load %arg2[%283] : memref<7424xf32, #tpu.memory_space<smem>>
    %c12 = arith.constant 12 : index
    %285 = memref.load %arg4[%c12] : memref<101xf32, #tpu.memory_space<smem>>
    memref.store %284, %arg4[%c12] : memref<101xf32, #tpu.memory_space<smem>>
    %286 = arith.index_cast %282 : i32 to index
    %287 = memref.load %arg0[%286] : memref<7424xf32, #tpu.memory_space<smem>>
    %288 = arith.addf %270, %287 : f32
    %289 = arith.index_cast %282 : i32 to index
    %290 = memref.load %arg1[%289] : memref<7424xf32, #tpu.memory_space<smem>>
    %291 = arith.addf %274, %290 : f32
    %cst_137 = arith.constant -8.000000e-02 : f32
    %292 = arith.maximumf %288, %cst_137 : f32
    %cst_138 = arith.constant 5.000000e-02 : f32
    %293 = arith.minimumf %292, %cst_138 : f32
    %cst_139 = arith.constant 2.000000e-02 : f32
    %294 = arith.cmpf ogt, %291, %cst_139 : f32
    %cst_140 = arith.constant 5.000000e-02 : f32
    %295 = arith.select %294, %cst_140, %291 : f32
    %cst_141 = arith.constant -2.000000e-02 : f32
    %296 = arith.cmpf olt, %291, %cst_141 : f32
    %cst_142 = arith.constant -2.000000e-02 : f32
    %297 = arith.select %296, %cst_142, %295 : f32
    %c12_143 = arith.constant 12 : index
    %298 = memref.load %arg3[%c12_143] : memref<101xf32, #tpu.memory_space<smem>>
    memref.store %293, %arg3[%c12_143] : memref<101xf32, #tpu.memory_space<smem>>
    %cst_144 = arith.constant 7.750000e+02 : f32
    %299 = arith.mulf %297, %cst_144 : f32
    %300 = arith.fptosi %299 : f32 to i32
    %cst_145 = arith.constant 484.615387 : f32
    %301 = arith.mulf %293, %cst_145 : f32
    %302 = arith.fptosi %301 : f32 to i32
    %c128_i32_146 = arith.constant 128 : i32
    %303 = arith.muli %300, %c128_i32_146 : i32
    %304 = arith.addi %303, %302 : i32
    %c2216_i32_147 = arith.constant 2216 : i32
    %305 = arith.addi %304, %c2216_i32_147 : i32
    %306 = arith.index_cast %305 : i32 to index
    %307 = memref.load %arg2[%306] : memref<7424xf32, #tpu.memory_space<smem>>
    %c13 = arith.constant 13 : index
    %308 = memref.load %arg4[%c13] : memref<101xf32, #tpu.memory_space<smem>>
    memref.store %307, %arg4[%c13] : memref<101xf32, #tpu.memory_space<smem>>
    %309 = arith.index_cast %305 : i32 to index
    %310 = memref.load %arg0[%309] : memref<7424xf32, #tpu.memory_space<smem>>
    %311 = arith.addf %293, %310 : f32
    %312 = arith.index_cast %305 : i32 to index
    %313 = memref.load %arg1[%312] : memref<7424xf32, #tpu.memory_space<smem>>
    %314 = arith.addf %297, %313 : f32
    %cst_148 = arith.constant -8.000000e-02 : f32
    %315 = arith.maximumf %311, %cst_148 : f32
    %cst_149 = arith.constant 5.000000e-02 : f32
    %316 = arith.minimumf %315, %cst_149 : f32
    %cst_150 = arith.constant 2.000000e-02 : f32
    %317 = arith.cmpf ogt, %314, %cst_150 : f32
    %cst_151 = arith.constant 5.000000e-02 : f32
    %318 = arith.select %317, %cst_151, %314 : f32
    %cst_152 = arith.constant -2.000000e-02 : f32
    %319 = arith.cmpf olt, %314, %cst_152 : f32
    %cst_153 = arith.constant -2.000000e-02 : f32
    %320 = arith.select %319, %cst_153, %318 : f32
    %c13_154 = arith.constant 13 : index
    %321 = memref.load %arg3[%c13_154] : memref<101xf32, #tpu.memory_space<smem>>
    memref.store %316, %arg3[%c13_154] : memref<101xf32, #tpu.memory_space<smem>>
    %cst_155 = arith.constant 7.750000e+02 : f32
    %322 = arith.mulf %320, %cst_155 : f32
    %323 = arith.fptosi %322 : f32 to i32
    %cst_156 = arith.constant 484.615387 : f32
    %324 = arith.mulf %316, %cst_156 : f32
    %325 = arith.fptosi %324 : f32 to i32
    %c128_i32_157 = arith.constant 128 : i32
    %326 = arith.muli %323, %c128_i32_157 : i32
    %327 = arith.addi %326, %325 : i32
    %c2216_i32_158 = arith.constant 2216 : i32
    %328 = arith.addi %327, %c2216_i32_158 : i32
    %329 = arith.index_cast %328 : i32 to index
    %330 = memref.load %arg2[%329] : memref<7424xf32, #tpu.memory_space<smem>>
    %c14 = arith.constant 14 : index
    %331 = memref.load %arg4[%c14] : memref<101xf32, #tpu.memory_space<smem>>
    memref.store %330, %arg4[%c14] : memref<101xf32, #tpu.memory_space<smem>>
    %332 = arith.index_cast %328 : i32 to index
    %333 = memref.load %arg0[%332] : memref<7424xf32, #tpu.memory_space<smem>>
    %334 = arith.addf %316, %333 : f32
    %335 = arith.index_cast %328 : i32 to index
    %336 = memref.load %arg1[%335] : memref<7424xf32, #tpu.memory_space<smem>>
    %337 = arith.addf %320, %336 : f32
    %cst_159 = arith.constant -8.000000e-02 : f32
    %338 = arith.maximumf %334, %cst_159 : f32
    %cst_160 = arith.constant 5.000000e-02 : f32
    %339 = arith.minimumf %338, %cst_160 : f32
    %cst_161 = arith.constant 2.000000e-02 : f32
    %340 = arith.cmpf ogt, %337, %cst_161 : f32
    %cst_162 = arith.constant 5.000000e-02 : f32
    %341 = arith.select %340, %cst_162, %337 : f32
    %cst_163 = arith.constant -2.000000e-02 : f32
    %342 = arith.cmpf olt, %337, %cst_163 : f32
    %cst_164 = arith.constant -2.000000e-02 : f32
    %343 = arith.select %342, %cst_164, %341 : f32
    %c14_165 = arith.constant 14 : index
    %344 = memref.load %arg3[%c14_165] : memref<101xf32, #tpu.memory_space<smem>>
    memref.store %339, %arg3[%c14_165] : memref<101xf32, #tpu.memory_space<smem>>
    %cst_166 = arith.constant 7.750000e+02 : f32
    %345 = arith.mulf %343, %cst_166 : f32
    %346 = arith.fptosi %345 : f32 to i32
    %cst_167 = arith.constant 484.615387 : f32
    %347 = arith.mulf %339, %cst_167 : f32
    %348 = arith.fptosi %347 : f32 to i32
    %c128_i32_168 = arith.constant 128 : i32
    %349 = arith.muli %346, %c128_i32_168 : i32
    %350 = arith.addi %349, %348 : i32
    %c2216_i32_169 = arith.constant 2216 : i32
    %351 = arith.addi %350, %c2216_i32_169 : i32
    %352 = arith.index_cast %351 : i32 to index
    %353 = memref.load %arg2[%352] : memref<7424xf32, #tpu.memory_space<smem>>
    %c15 = arith.constant 15 : index
    %354 = memref.load %arg4[%c15] : memref<101xf32, #tpu.memory_space<smem>>
    memref.store %353, %arg4[%c15] : memref<101xf32, #tpu.memory_space<smem>>
    %355 = arith.index_cast %351 : i32 to index
    %356 = memref.load %arg0[%355] : memref<7424xf32, #tpu.memory_space<smem>>
    %357 = arith.addf %339, %356 : f32
    %358 = arith.index_cast %351 : i32 to index
    %359 = memref.load %arg1[%358] : memref<7424xf32, #tpu.memory_space<smem>>
    %360 = arith.addf %343, %359 : f32
    %cst_170 = arith.constant -8.000000e-02 : f32
    %361 = arith.maximumf %357, %cst_170 : f32
    %cst_171 = arith.constant 5.000000e-02 : f32
    %362 = arith.minimumf %361, %cst_171 : f32
    %cst_172 = arith.constant 2.000000e-02 : f32
    %363 = arith.cmpf ogt, %360, %cst_172 : f32
    %cst_173 = arith.constant 5.000000e-02 : f32
    %364 = arith.select %363, %cst_173, %360 : f32
    %cst_174 = arith.constant -2.000000e-02 : f32
    %365 = arith.cmpf olt, %360, %cst_174 : f32
    %cst_175 = arith.constant -2.000000e-02 : f32
    %366 = arith.select %365, %cst_175, %364 : f32
    %c15_176 = arith.constant 15 : index
    %367 = memref.load %arg3[%c15_176] : memref<101xf32, #tpu.memory_space<smem>>
    memref.store %362, %arg3[%c15_176] : memref<101xf32, #tpu.memory_space<smem>>
    %cst_177 = arith.constant 7.750000e+02 : f32
    %368 = arith.mulf %366, %cst_177 : f32
    %369 = arith.fptosi %368 : f32 to i32
    %cst_178 = arith.constant 484.615387 : f32
    %370 = arith.mulf %362, %cst_178 : f32
    %371 = arith.fptosi %370 : f32 to i32
    %c128_i32_179 = arith.constant 128 : i32
    %372 = arith.muli %369, %c128_i32_179 : i32
    %373 = arith.addi %372, %371 : i32
    %c2216_i32_180 = arith.constant 2216 : i32
    %374 = arith.addi %373, %c2216_i32_180 : i32
    %375 = arith.index_cast %374 : i32 to index
    %376 = memref.load %arg2[%375] : memref<7424xf32, #tpu.memory_space<smem>>
    %c16 = arith.constant 16 : index
    %377 = memref.load %arg4[%c16] : memref<101xf32, #tpu.memory_space<smem>>
    memref.store %376, %arg4[%c16] : memref<101xf32, #tpu.memory_space<smem>>
    %378 = arith.index_cast %374 : i32 to index
    %379 = memref.load %arg0[%378] : memref<7424xf32, #tpu.memory_space<smem>>
    %380 = arith.addf %362, %379 : f32
    %381 = arith.index_cast %374 : i32 to index
    %382 = memref.load %arg1[%381] : memref<7424xf32, #tpu.memory_space<smem>>
    %383 = arith.addf %366, %382 : f32
    %cst_181 = arith.constant -8.000000e-02 : f32
    %384 = arith.maximumf %380, %cst_181 : f32
    %cst_182 = arith.constant 5.000000e-02 : f32
    %385 = arith.minimumf %384, %cst_182 : f32
    %cst_183 = arith.constant 2.000000e-02 : f32
    %386 = arith.cmpf ogt, %383, %cst_183 : f32
    %cst_184 = arith.constant 5.000000e-02 : f32
    %387 = arith.select %386, %cst_184, %383 : f32
    %cst_185 = arith.constant -2.000000e-02 : f32
    %388 = arith.cmpf olt, %383, %cst_185 : f32
    %cst_186 = arith.constant -2.000000e-02 : f32
    %389 = arith.select %388, %cst_186, %387 : f32
    %c16_187 = arith.constant 16 : index
    %390 = memref.load %arg3[%c16_187] : memref<101xf32, #tpu.memory_space<smem>>
    memref.store %385, %arg3[%c16_187] : memref<101xf32, #tpu.memory_space<smem>>
    %cst_188 = arith.constant 7.750000e+02 : f32
    %391 = arith.mulf %389, %cst_188 : f32
    %392 = arith.fptosi %391 : f32 to i32
    %cst_189 = arith.constant 484.615387 : f32
    %393 = arith.mulf %385, %cst_189 : f32
    %394 = arith.fptosi %393 : f32 to i32
    %c128_i32_190 = arith.constant 128 : i32
    %395 = arith.muli %392, %c128_i32_190 : i32
    %396 = arith.addi %395, %394 : i32
    %c2216_i32_191 = arith.constant 2216 : i32
    %397 = arith.addi %396, %c2216_i32_191 : i32
    %398 = arith.index_cast %397 : i32 to index
    %399 = memref.load %arg2[%398] : memref<7424xf32, #tpu.memory_space<smem>>
    %c17 = arith.constant 17 : index
    %400 = memref.load %arg4[%c17] : memref<101xf32, #tpu.memory_space<smem>>
    memref.store %399, %arg4[%c17] : memref<101xf32, #tpu.memory_space<smem>>
    %401 = arith.index_cast %397 : i32 to index
    %402 = memref.load %arg0[%401] : memref<7424xf32, #tpu.memory_space<smem>>
    %403 = arith.addf %385, %402 : f32
    %404 = arith.index_cast %397 : i32 to index
    %405 = memref.load %arg1[%404] : memref<7424xf32, #tpu.memory_space<smem>>
    %406 = arith.addf %389, %405 : f32
    %cst_192 = arith.constant -8.000000e-02 : f32
    %407 = arith.maximumf %403, %cst_192 : f32
    %cst_193 = arith.constant 5.000000e-02 : f32
    %408 = arith.minimumf %407, %cst_193 : f32
    %cst_194 = arith.constant 2.000000e-02 : f32
    %409 = arith.cmpf ogt, %406, %cst_194 : f32
    %cst_195 = arith.constant 5.000000e-02 : f32
    %410 = arith.select %409, %cst_195, %406 : f32
    %cst_196 = arith.constant -2.000000e-02 : f32
    %411 = arith.cmpf olt, %406, %cst_196 : f32
    %cst_197 = arith.constant -2.000000e-02 : f32
    %412 = arith.select %411, %cst_197, %410 : f32
    %c17_198 = arith.constant 17 : index
    %413 = memref.load %arg3[%c17_198] : memref<101xf32, #tpu.memory_space<smem>>
    memref.store %408, %arg3[%c17_198] : memref<101xf32, #tpu.memory_space<smem>>
    %cst_199 = arith.constant 7.750000e+02 : f32
    %414 = arith.mulf %412, %cst_199 : f32
    %415 = arith.fptosi %414 : f32 to i32
    %cst_200 = arith.constant 484.615387 : f32
    %416 = arith.mulf %408, %cst_200 : f32
    %417 = arith.fptosi %416 : f32 to i32
    %c128_i32_201 = arith.constant 128 : i32
    %418 = arith.muli %415, %c128_i32_201 : i32
    %419 = arith.addi %418, %417 : i32
    %c2216_i32_202 = arith.constant 2216 : i32
    %420 = arith.addi %419, %c2216_i32_202 : i32
    %421 = arith.index_cast %420 : i32 to index
    %422 = memref.load %arg2[%421] : memref<7424xf32, #tpu.memory_space<smem>>
    %c18 = arith.constant 18 : index
    %423 = memref.load %arg4[%c18] : memref<101xf32, #tpu.memory_space<smem>>
    memref.store %422, %arg4[%c18] : memref<101xf32, #tpu.memory_space<smem>>
    %424 = arith.index_cast %420 : i32 to index
    %425 = memref.load %arg0[%424] : memref<7424xf32, #tpu.memory_space<smem>>
    %426 = arith.addf %408, %425 : f32
    %427 = arith.index_cast %420 : i32 to index
    %428 = memref.load %arg1[%427] : memref<7424xf32, #tpu.memory_space<smem>>
    %429 = arith.addf %412, %428 : f32
    %cst_203 = arith.constant -8.000000e-02 : f32
    %430 = arith.maximumf %426, %cst_203 : f32
    %cst_204 = arith.constant 5.000000e-02 : f32
    %431 = arith.minimumf %430, %cst_204 : f32
    %cst_205 = arith.constant 2.000000e-02 : f32
    %432 = arith.cmpf ogt, %429, %cst_205 : f32
    %cst_206 = arith.constant 5.000000e-02 : f32
    %433 = arith.select %432, %cst_206, %429 : f32
    %cst_207 = arith.constant -2.000000e-02 : f32
    %434 = arith.cmpf olt, %429, %cst_207 : f32
    %cst_208 = arith.constant -2.000000e-02 : f32
    %435 = arith.select %434, %cst_208, %433 : f32
    %c18_209 = arith.constant 18 : index
    %436 = memref.load %arg3[%c18_209] : memref<101xf32, #tpu.memory_space<smem>>
    memref.store %431, %arg3[%c18_209] : memref<101xf32, #tpu.memory_space<smem>>
    %cst_210 = arith.constant 7.750000e+02 : f32
    %437 = arith.mulf %435, %cst_210 : f32
    %438 = arith.fptosi %437 : f32 to i32
    %cst_211 = arith.constant 484.615387 : f32
    %439 = arith.mulf %431, %cst_211 : f32
    %440 = arith.fptosi %439 : f32 to i32
    %c128_i32_212 = arith.constant 128 : i32
    %441 = arith.muli %438, %c128_i32_212 : i32
    %442 = arith.addi %441, %440 : i32
    %c2216_i32_213 = arith.constant 2216 : i32
    %443 = arith.addi %442, %c2216_i32_213 : i32
    %444 = arith.index_cast %443 : i32 to index
    %445 = memref.load %arg2[%444] : memref<7424xf32, #tpu.memory_space<smem>>
    %c19 = arith.constant 19 : index
    %446 = memref.load %arg4[%c19] : memref<101xf32, #tpu.memory_space<smem>>
    memref.store %445, %arg4[%c19] : memref<101xf32, #tpu.memory_space<smem>>
    %447 = arith.index_cast %443 : i32 to index
    %448 = memref.load %arg0[%447] : memref<7424xf32, #tpu.memory_space<smem>>
    %449 = arith.addf %431, %448 : f32
    %450 = arith.index_cast %443 : i32 to index
    %451 = memref.load %arg1[%450] : memref<7424xf32, #tpu.memory_space<smem>>
    %452 = arith.addf %435, %451 : f32
    %cst_214 = arith.constant -8.000000e-02 : f32
    %453 = arith.maximumf %449, %cst_214 : f32
    %cst_215 = arith.constant 5.000000e-02 : f32
    %454 = arith.minimumf %453, %cst_215 : f32
    %cst_216 = arith.constant 2.000000e-02 : f32
    %455 = arith.cmpf ogt, %452, %cst_216 : f32
    %cst_217 = arith.constant 5.000000e-02 : f32
    %456 = arith.select %455, %cst_217, %452 : f32
    %cst_218 = arith.constant -2.000000e-02 : f32
    %457 = arith.cmpf olt, %452, %cst_218 : f32
    %cst_219 = arith.constant -2.000000e-02 : f32
    %458 = arith.select %457, %cst_219, %456 : f32
    %c19_220 = arith.constant 19 : index
    %459 = memref.load %arg3[%c19_220] : memref<101xf32, #tpu.memory_space<smem>>
    memref.store %454, %arg3[%c19_220] : memref<101xf32, #tpu.memory_space<smem>>
    %cst_221 = arith.constant 7.750000e+02 : f32
    %460 = arith.mulf %458, %cst_221 : f32
    %461 = arith.fptosi %460 : f32 to i32
    %cst_222 = arith.constant 484.615387 : f32
    %462 = arith.mulf %454, %cst_222 : f32
    %463 = arith.fptosi %462 : f32 to i32
    %c128_i32_223 = arith.constant 128 : i32
    %464 = arith.muli %461, %c128_i32_223 : i32
    %465 = arith.addi %464, %463 : i32
    %c2216_i32_224 = arith.constant 2216 : i32
    %466 = arith.addi %465, %c2216_i32_224 : i32
    %467 = arith.index_cast %466 : i32 to index
    %468 = memref.load %arg2[%467] : memref<7424xf32, #tpu.memory_space<smem>>
    %c20 = arith.constant 20 : index
    %469 = memref.load %arg4[%c20] : memref<101xf32, #tpu.memory_space<smem>>
    memref.store %468, %arg4[%c20] : memref<101xf32, #tpu.memory_space<smem>>
    %470 = arith.index_cast %466 : i32 to index
    %471 = memref.load %arg0[%470] : memref<7424xf32, #tpu.memory_space<smem>>
    %472 = arith.addf %454, %471 : f32
    %473 = arith.index_cast %466 : i32 to index
    %474 = memref.load %arg1[%473] : memref<7424xf32, #tpu.memory_space<smem>>
    %475 = arith.addf %458, %474 : f32
    %cst_225 = arith.constant -8.000000e-02 : f32
    %476 = arith.maximumf %472, %cst_225 : f32
    %cst_226 = arith.constant 5.000000e-02 : f32
    %477 = arith.minimumf %476, %cst_226 : f32
    %cst_227 = arith.constant 2.000000e-02 : f32
    %478 = arith.cmpf ogt, %475, %cst_227 : f32
    %cst_228 = arith.constant 5.000000e-02 : f32
    %479 = arith.select %478, %cst_228, %475 : f32
    %cst_229 = arith.constant -2.000000e-02 : f32
    %480 = arith.cmpf olt, %475, %cst_229 : f32
    %cst_230 = arith.constant -2.000000e-02 : f32
    %481 = arith.select %480, %cst_230, %479 : f32
    %c20_231 = arith.constant 20 : index
    %482 = memref.load %arg3[%c20_231] : memref<101xf32, #tpu.memory_space<smem>>
    memref.store %477, %arg3[%c20_231] : memref<101xf32, #tpu.memory_space<smem>>
    %cst_232 = arith.constant 7.750000e+02 : f32
    %483 = arith.mulf %481, %cst_232 : f32
    %484 = arith.fptosi %483 : f32 to i32
    %cst_233 = arith.constant 484.615387 : f32
    %485 = arith.mulf %477, %cst_233 : f32
    %486 = arith.fptosi %485 : f32 to i32
    %c128_i32_234 = arith.constant 128 : i32
    %487 = arith.muli %484, %c128_i32_234 : i32
    %488 = arith.addi %487, %486 : i32
    %c2216_i32_235 = arith.constant 2216 : i32
    %489 = arith.addi %488, %c2216_i32_235 : i32
    %490 = arith.index_cast %489 : i32 to index
    %491 = memref.load %arg2[%490] : memref<7424xf32, #tpu.memory_space<smem>>
    %c21 = arith.constant 21 : index
    %492 = memref.load %arg4[%c21] : memref<101xf32, #tpu.memory_space<smem>>
    memref.store %491, %arg4[%c21] : memref<101xf32, #tpu.memory_space<smem>>
    %493 = arith.index_cast %489 : i32 to index
    %494 = memref.load %arg0[%493] : memref<7424xf32, #tpu.memory_space<smem>>
    %495 = arith.addf %477, %494 : f32
    %496 = arith.index_cast %489 : i32 to index
    %497 = memref.load %arg1[%496] : memref<7424xf32, #tpu.memory_space<smem>>
    %498 = arith.addf %481, %497 : f32
    %cst_236 = arith.constant -8.000000e-02 : f32
    %499 = arith.maximumf %495, %cst_236 : f32
    %cst_237 = arith.constant 5.000000e-02 : f32
    %500 = arith.minimumf %499, %cst_237 : f32
    %cst_238 = arith.constant 2.000000e-02 : f32
    %501 = arith.cmpf ogt, %498, %cst_238 : f32
    %cst_239 = arith.constant 5.000000e-02 : f32
    %502 = arith.select %501, %cst_239, %498 : f32
    %cst_240 = arith.constant -2.000000e-02 : f32
    %503 = arith.cmpf olt, %498, %cst_240 : f32
    %cst_241 = arith.constant -2.000000e-02 : f32
    %504 = arith.select %503, %cst_241, %502 : f32
    %c21_242 = arith.constant 21 : index
    %505 = memref.load %arg3[%c21_242] : memref<101xf32, #tpu.memory_space<smem>>
    memref.store %500, %arg3[%c21_242] : memref<101xf32, #tpu.memory_space<smem>>
    %cst_243 = arith.constant 7.750000e+02 : f32
    %506 = arith.mulf %504, %cst_243 : f32
    %507 = arith.fptosi %506 : f32 to i32
    %cst_244 = arith.constant 484.615387 : f32
    %508 = arith.mulf %500, %cst_244 : f32
    %509 = arith.fptosi %508 : f32 to i32
    %c128_i32_245 = arith.constant 128 : i32
    %510 = arith.muli %507, %c128_i32_245 : i32
    %511 = arith.addi %510, %509 : i32
    %c2216_i32_246 = arith.constant 2216 : i32
    %512 = arith.addi %511, %c2216_i32_246 : i32
    %513 = arith.index_cast %512 : i32 to index
    %514 = memref.load %arg2[%513] : memref<7424xf32, #tpu.memory_space<smem>>
    %c22 = arith.constant 22 : index
    %515 = memref.load %arg4[%c22] : memref<101xf32, #tpu.memory_space<smem>>
    memref.store %514, %arg4[%c22] : memref<101xf32, #tpu.memory_space<smem>>
    %516 = arith.index_cast %512 : i32 to index
    %517 = memref.load %arg0[%516] : memref<7424xf32, #tpu.memory_space<smem>>
    %518 = arith.addf %500, %517 : f32
    %519 = arith.index_cast %512 : i32 to index
    %520 = memref.load %arg1[%519] : memref<7424xf32, #tpu.memory_space<smem>>
    %521 = arith.addf %504, %520 : f32
    %cst_247 = arith.constant -8.000000e-02 : f32
    %522 = arith.maximumf %518, %cst_247 : f32
    %cst_248 = arith.constant 5.000000e-02 : f32
    %523 = arith.minimumf %522, %cst_248 : f32
    %cst_249 = arith.constant 2.000000e-02 : f32
    %524 = arith.cmpf ogt, %521, %cst_249 : f32
    %cst_250 = arith.constant 5.000000e-02 : f32
    %525 = arith.select %524, %cst_250, %521 : f32
    %cst_251 = arith.constant -2.000000e-02 : f32
    %526 = arith.cmpf olt, %521, %cst_251 : f32
    %cst_252 = arith.constant -2.000000e-02 : f32
    %527 = arith.select %526, %cst_252, %525 : f32
    %c22_253 = arith.constant 22 : index
    %528 = memref.load %arg3[%c22_253] : memref<101xf32, #tpu.memory_space<smem>>
    memref.store %523, %arg3[%c22_253] : memref<101xf32, #tpu.memory_space<smem>>
    %cst_254 = arith.constant 7.750000e+02 : f32
    %529 = arith.mulf %527, %cst_254 : f32
    %530 = arith.fptosi %529 : f32 to i32
    %cst_255 = arith.constant 484.615387 : f32
    %531 = arith.mulf %523, %cst_255 : f32
    %532 = arith.fptosi %531 : f32 to i32
    %c128_i32_256 = arith.constant 128 : i32
    %533 = arith.muli %530, %c128_i32_256 : i32
    %534 = arith.addi %533, %532 : i32
    %c2216_i32_257 = arith.constant 2216 : i32
    %535 = arith.addi %534, %c2216_i32_257 : i32
    %536 = arith.index_cast %535 : i32 to index
    %537 = memref.load %arg2[%536] : memref<7424xf32, #tpu.memory_space<smem>>
    %c23 = arith.constant 23 : index
    %538 = memref.load %arg4[%c23] : memref<101xf32, #tpu.memory_space<smem>>
    memref.store %537, %arg4[%c23] : memref<101xf32, #tpu.memory_space<smem>>
    %539 = arith.index_cast %535 : i32 to index
    %540 = memref.load %arg0[%539] : memref<7424xf32, #tpu.memory_space<smem>>
    %541 = arith.addf %523, %540 : f32
    %542 = arith.index_cast %535 : i32 to index
    %543 = memref.load %arg1[%542] : memref<7424xf32, #tpu.memory_space<smem>>
    %544 = arith.addf %527, %543 : f32
    %cst_258 = arith.constant -8.000000e-02 : f32
    %545 = arith.maximumf %541, %cst_258 : f32
    %cst_259 = arith.constant 5.000000e-02 : f32
    %546 = arith.minimumf %545, %cst_259 : f32
    %cst_260 = arith.constant 2.000000e-02 : f32
    %547 = arith.cmpf ogt, %544, %cst_260 : f32
    %cst_261 = arith.constant 5.000000e-02 : f32
    %548 = arith.select %547, %cst_261, %544 : f32
    %cst_262 = arith.constant -2.000000e-02 : f32
    %549 = arith.cmpf olt, %544, %cst_262 : f32
    %cst_263 = arith.constant -2.000000e-02 : f32
    %550 = arith.select %549, %cst_263, %548 : f32
    %c23_264 = arith.constant 23 : index
    %551 = memref.load %arg3[%c23_264] : memref<101xf32, #tpu.memory_space<smem>>
    memref.store %546, %arg3[%c23_264] : memref<101xf32, #tpu.memory_space<smem>>
    %cst_265 = arith.constant 7.750000e+02 : f32
    %552 = arith.mulf %550, %cst_265 : f32
    %553 = arith.fptosi %552 : f32 to i32
    %cst_266 = arith.constant 484.615387 : f32
    %554 = arith.mulf %546, %cst_266 : f32
    %555 = arith.fptosi %554 : f32 to i32
    %c128_i32_267 = arith.constant 128 : i32
    %556 = arith.muli %553, %c128_i32_267 : i32
    %557 = arith.addi %556, %555 : i32
    %c2216_i32_268 = arith.constant 2216 : i32
    %558 = arith.addi %557, %c2216_i32_268 : i32
    %559 = arith.index_cast %558 : i32 to index
    %560 = memref.load %arg2[%559] : memref<7424xf32, #tpu.memory_space<smem>>
    %c24 = arith.constant 24 : index
    %561 = memref.load %arg4[%c24] : memref<101xf32, #tpu.memory_space<smem>>
    memref.store %560, %arg4[%c24] : memref<101xf32, #tpu.memory_space<smem>>
    %562 = arith.index_cast %558 : i32 to index
    %563 = memref.load %arg0[%562] : memref<7424xf32, #tpu.memory_space<smem>>
    %564 = arith.addf %546, %563 : f32
    %565 = arith.index_cast %558 : i32 to index
    %566 = memref.load %arg1[%565] : memref<7424xf32, #tpu.memory_space<smem>>
    %567 = arith.addf %550, %566 : f32
    %cst_269 = arith.constant -8.000000e-02 : f32
    %568 = arith.maximumf %564, %cst_269 : f32
    %cst_270 = arith.constant 5.000000e-02 : f32
    %569 = arith.minimumf %568, %cst_270 : f32
    %cst_271 = arith.constant 2.000000e-02 : f32
    %570 = arith.cmpf ogt, %567, %cst_271 : f32
    %cst_272 = arith.constant 5.000000e-02 : f32
    %571 = arith.select %570, %cst_272, %567 : f32
    %cst_273 = arith.constant -2.000000e-02 : f32
    %572 = arith.cmpf olt, %567, %cst_273 : f32
    %cst_274 = arith.constant -2.000000e-02 : f32
    %573 = arith.select %572, %cst_274, %571 : f32
    %c24_275 = arith.constant 24 : index
    %574 = memref.load %arg3[%c24_275] : memref<101xf32, #tpu.memory_space<smem>>
    memref.store %569, %arg3[%c24_275] : memref<101xf32, #tpu.memory_space<smem>>
    %cst_276 = arith.constant 7.750000e+02 : f32
    %575 = arith.mulf %573, %cst_276 : f32
    %576 = arith.fptosi %575 : f32 to i32
    %cst_277 = arith.constant 484.615387 : f32
    %577 = arith.mulf %569, %cst_277 : f32
    %578 = arith.fptosi %577 : f32 to i32
    %c128_i32_278 = arith.constant 128 : i32
    %579 = arith.muli %576, %c128_i32_278 : i32
    %580 = arith.addi %579, %578 : i32
    %c2216_i32_279 = arith.constant 2216 : i32
    %581 = arith.addi %580, %c2216_i32_279 : i32
    %582 = arith.index_cast %581 : i32 to index
    %583 = memref.load %arg2[%582] : memref<7424xf32, #tpu.memory_space<smem>>
    %c25 = arith.constant 25 : index
    %584 = memref.load %arg4[%c25] : memref<101xf32, #tpu.memory_space<smem>>
    memref.store %583, %arg4[%c25] : memref<101xf32, #tpu.memory_space<smem>>
    %585 = arith.index_cast %581 : i32 to index
    %586 = memref.load %arg0[%585] : memref<7424xf32, #tpu.memory_space<smem>>
    %587 = arith.addf %569, %586 : f32
    %588 = arith.index_cast %581 : i32 to index
    %589 = memref.load %arg1[%588] : memref<7424xf32, #tpu.memory_space<smem>>
    %590 = arith.addf %573, %589 : f32
    %cst_280 = arith.constant -8.000000e-02 : f32
    %591 = arith.maximumf %587, %cst_280 : f32
    %cst_281 = arith.constant 5.000000e-02 : f32
    %592 = arith.minimumf %591, %cst_281 : f32
    %cst_282 = arith.constant 2.000000e-02 : f32
    %593 = arith.cmpf ogt, %590, %cst_282 : f32
    %cst_283 = arith.constant 5.000000e-02 : f32
    %594 = arith.select %593, %cst_283, %590 : f32
    %cst_284 = arith.constant -2.000000e-02 : f32
    %595 = arith.cmpf olt, %590, %cst_284 : f32
    %cst_285 = arith.constant -2.000000e-02 : f32
    %596 = arith.select %595, %cst_285, %594 : f32
    %c25_286 = arith.constant 25 : index
    %597 = memref.load %arg3[%c25_286] : memref<101xf32, #tpu.memory_space<smem>>
    memref.store %592, %arg3[%c25_286] : memref<101xf32, #tpu.memory_space<smem>>
    %cst_287 = arith.constant 7.750000e+02 : f32
    %598 = arith.mulf %596, %cst_287 : f32
    %599 = arith.fptosi %598 : f32 to i32
    %cst_288 = arith.constant 484.615387 : f32
    %600 = arith.mulf %592, %cst_288 : f32
    %601 = arith.fptosi %600 : f32 to i32
    %c128_i32_289 = arith.constant 128 : i32
    %602 = arith.muli %599, %c128_i32_289 : i32
    %603 = arith.addi %602, %601 : i32
    %c2216_i32_290 = arith.constant 2216 : i32
    %604 = arith.addi %603, %c2216_i32_290 : i32
    %605 = arith.index_cast %604 : i32 to index
    %606 = memref.load %arg2[%605] : memref<7424xf32, #tpu.memory_space<smem>>
    %c26 = arith.constant 26 : index
    %607 = memref.load %arg4[%c26] : memref<101xf32, #tpu.memory_space<smem>>
    memref.store %606, %arg4[%c26] : memref<101xf32, #tpu.memory_space<smem>>
    %608 = arith.index_cast %604 : i32 to index
    %609 = memref.load %arg0[%608] : memref<7424xf32, #tpu.memory_space<smem>>
    %610 = arith.addf %592, %609 : f32
    %611 = arith.index_cast %604 : i32 to index
    %612 = memref.load %arg1[%611] : memref<7424xf32, #tpu.memory_space<smem>>
    %613 = arith.addf %596, %612 : f32
    %cst_291 = arith.constant -8.000000e-02 : f32
    %614 = arith.maximumf %610, %cst_291 : f32
    %cst_292 = arith.constant 5.000000e-02 : f32
    %615 = arith.minimumf %614, %cst_292 : f32
    %cst_293 = arith.constant 2.000000e-02 : f32
    %616 = arith.cmpf ogt, %613, %cst_293 : f32
    %cst_294 = arith.constant 5.000000e-02 : f32
    %617 = arith.select %616, %cst_294, %613 : f32
    %cst_295 = arith.constant -2.000000e-02 : f32
    %618 = arith.cmpf olt, %613, %cst_295 : f32
    %cst_296 = arith.constant -2.000000e-02 : f32
    %619 = arith.select %618, %cst_296, %617 : f32
    %c26_297 = arith.constant 26 : index
    %620 = memref.load %arg3[%c26_297] : memref<101xf32, #tpu.memory_space<smem>>
    memref.store %615, %arg3[%c26_297] : memref<101xf32, #tpu.memory_space<smem>>
    %cst_298 = arith.constant 7.750000e+02 : f32
    %621 = arith.mulf %619, %cst_298 : f32
    %622 = arith.fptosi %621 : f32 to i32
    %cst_299 = arith.constant 484.615387 : f32
    %623 = arith.mulf %615, %cst_299 : f32
    %624 = arith.fptosi %623 : f32 to i32
    %c128_i32_300 = arith.constant 128 : i32
    %625 = arith.muli %622, %c128_i32_300 : i32
    %626 = arith.addi %625, %624 : i32
    %c2216_i32_301 = arith.constant 2216 : i32
    %627 = arith.addi %626, %c2216_i32_301 : i32
    %628 = arith.index_cast %627 : i32 to index
    %629 = memref.load %arg2[%628] : memref<7424xf32, #tpu.memory_space<smem>>
    %c27 = arith.constant 27 : index
    %630 = memref.load %arg4[%c27] : memref<101xf32, #tpu.memory_space<smem>>
    memref.store %629, %arg4[%c27] : memref<101xf32, #tpu.memory_space<smem>>
    %631 = arith.index_cast %627 : i32 to index
    %632 = memref.load %arg0[%631] : memref<7424xf32, #tpu.memory_space<smem>>
    %633 = arith.addf %615, %632 : f32
    %634 = arith.index_cast %627 : i32 to index
    %635 = memref.load %arg1[%634] : memref<7424xf32, #tpu.memory_space<smem>>
    %636 = arith.addf %619, %635 : f32
    %cst_302 = arith.constant -8.000000e-02 : f32
    %637 = arith.maximumf %633, %cst_302 : f32
    %cst_303 = arith.constant 5.000000e-02 : f32
    %638 = arith.minimumf %637, %cst_303 : f32
    %cst_304 = arith.constant 2.000000e-02 : f32
    %639 = arith.cmpf ogt, %636, %cst_304 : f32
    %cst_305 = arith.constant 5.000000e-02 : f32
    %640 = arith.select %639, %cst_305, %636 : f32
    %cst_306 = arith.constant -2.000000e-02 : f32
    %641 = arith.cmpf olt, %636, %cst_306 : f32
    %cst_307 = arith.constant -2.000000e-02 : f32
    %642 = arith.select %641, %cst_307, %640 : f32
    %c27_308 = arith.constant 27 : index
    %643 = memref.load %arg3[%c27_308] : memref<101xf32, #tpu.memory_space<smem>>
    memref.store %638, %arg3[%c27_308] : memref<101xf32, #tpu.memory_space<smem>>
    %cst_309 = arith.constant 7.750000e+02 : f32
    %644 = arith.mulf %642, %cst_309 : f32
    %645 = arith.fptosi %644 : f32 to i32
    %cst_310 = arith.constant 484.615387 : f32
    %646 = arith.mulf %638, %cst_310 : f32
    %647 = arith.fptosi %646 : f32 to i32
    %c128_i32_311 = arith.constant 128 : i32
    %648 = arith.muli %645, %c128_i32_311 : i32
    %649 = arith.addi %648, %647 : i32
    %c2216_i32_312 = arith.constant 2216 : i32
    %650 = arith.addi %649, %c2216_i32_312 : i32
    %651 = arith.index_cast %650 : i32 to index
    %652 = memref.load %arg2[%651] : memref<7424xf32, #tpu.memory_space<smem>>
    %c28 = arith.constant 28 : index
    %653 = memref.load %arg4[%c28] : memref<101xf32, #tpu.memory_space<smem>>
    memref.store %652, %arg4[%c28] : memref<101xf32, #tpu.memory_space<smem>>
    %654 = arith.index_cast %650 : i32 to index
    %655 = memref.load %arg0[%654] : memref<7424xf32, #tpu.memory_space<smem>>
    %656 = arith.addf %638, %655 : f32
    %657 = arith.index_cast %650 : i32 to index
    %658 = memref.load %arg1[%657] : memref<7424xf32, #tpu.memory_space<smem>>
    %659 = arith.addf %642, %658 : f32
    %cst_313 = arith.constant -8.000000e-02 : f32
    %660 = arith.maximumf %656, %cst_313 : f32
    %cst_314 = arith.constant 5.000000e-02 : f32
    %661 = arith.minimumf %660, %cst_314 : f32
    %cst_315 = arith.constant 2.000000e-02 : f32
    %662 = arith.cmpf ogt, %659, %cst_315 : f32
    %cst_316 = arith.constant 5.000000e-02 : f32
    %663 = arith.select %662, %cst_316, %659 : f32
    %cst_317 = arith.constant -2.000000e-02 : f32
    %664 = arith.cmpf olt, %659, %cst_317 : f32
    %cst_318 = arith.constant -2.000000e-02 : f32
    %665 = arith.select %664, %cst_318, %663 : f32
    %c28_319 = arith.constant 28 : index
    %666 = memref.load %arg3[%c28_319] : memref<101xf32, #tpu.memory_space<smem>>
    memref.store %661, %arg3[%c28_319] : memref<101xf32, #tpu.memory_space<smem>>
    %cst_320 = arith.constant 7.750000e+02 : f32
    %667 = arith.mulf %665, %cst_320 : f32
    %668 = arith.fptosi %667 : f32 to i32
    %cst_321 = arith.constant 484.615387 : f32
    %669 = arith.mulf %661, %cst_321 : f32
    %670 = arith.fptosi %669 : f32 to i32
    %c128_i32_322 = arith.constant 128 : i32
    %671 = arith.muli %668, %c128_i32_322 : i32
    %672 = arith.addi %671, %670 : i32
    %c2216_i32_323 = arith.constant 2216 : i32
    %673 = arith.addi %672, %c2216_i32_323 : i32
    %674 = arith.index_cast %673 : i32 to index
    %675 = memref.load %arg2[%674] : memref<7424xf32, #tpu.memory_space<smem>>
    %c29 = arith.constant 29 : index
    %676 = memref.load %arg4[%c29] : memref<101xf32, #tpu.memory_space<smem>>
    memref.store %675, %arg4[%c29] : memref<101xf32, #tpu.memory_space<smem>>
    %677 = arith.index_cast %673 : i32 to index
    %678 = memref.load %arg0[%677] : memref<7424xf32, #tpu.memory_space<smem>>
    %679 = arith.addf %661, %678 : f32
    %680 = arith.index_cast %673 : i32 to index
    %681 = memref.load %arg1[%680] : memref<7424xf32, #tpu.memory_space<smem>>
    %682 = arith.addf %665, %681 : f32
    %cst_324 = arith.constant -8.000000e-02 : f32
    %683 = arith.maximumf %679, %cst_324 : f32
    %cst_325 = arith.constant 5.000000e-02 : f32
    %684 = arith.minimumf %683, %cst_325 : f32
    %cst_326 = arith.constant 2.000000e-02 : f32
    %685 = arith.cmpf ogt, %682, %cst_326 : f32
    %cst_327 = arith.constant 5.000000e-02 : f32
    %686 = arith.select %685, %cst_327, %682 : f32
    %cst_328 = arith.constant -2.000000e-02 : f32
    %687 = arith.cmpf olt, %682, %cst_328 : f32
    %cst_329 = arith.constant -2.000000e-02 : f32
    %688 = arith.select %687, %cst_329, %686 : f32
    %c29_330 = arith.constant 29 : index
    %689 = memref.load %arg3[%c29_330] : memref<101xf32, #tpu.memory_space<smem>>
    memref.store %684, %arg3[%c29_330] : memref<101xf32, #tpu.memory_space<smem>>
    %cst_331 = arith.constant 7.750000e+02 : f32
    %690 = arith.mulf %688, %cst_331 : f32
    %691 = arith.fptosi %690 : f32 to i32
    %cst_332 = arith.constant 484.615387 : f32
    %692 = arith.mulf %684, %cst_332 : f32
    %693 = arith.fptosi %692 : f32 to i32
    %c128_i32_333 = arith.constant 128 : i32
    %694 = arith.muli %691, %c128_i32_333 : i32
    %695 = arith.addi %694, %693 : i32
    %c2216_i32_334 = arith.constant 2216 : i32
    %696 = arith.addi %695, %c2216_i32_334 : i32
    %697 = arith.index_cast %696 : i32 to index
    %698 = memref.load %arg2[%697] : memref<7424xf32, #tpu.memory_space<smem>>
    %c30 = arith.constant 30 : index
    %699 = memref.load %arg4[%c30] : memref<101xf32, #tpu.memory_space<smem>>
    memref.store %698, %arg4[%c30] : memref<101xf32, #tpu.memory_space<smem>>
    %700 = arith.index_cast %696 : i32 to index
    %701 = memref.load %arg0[%700] : memref<7424xf32, #tpu.memory_space<smem>>
    %702 = arith.addf %684, %701 : f32
    %703 = arith.index_cast %696 : i32 to index
    %704 = memref.load %arg1[%703] : memref<7424xf32, #tpu.memory_space<smem>>
    %705 = arith.addf %688, %704 : f32
    %cst_335 = arith.constant -8.000000e-02 : f32
    %706 = arith.maximumf %702, %cst_335 : f32
    %cst_336 = arith.constant 5.000000e-02 : f32
    %707 = arith.minimumf %706, %cst_336 : f32
    %cst_337 = arith.constant 2.000000e-02 : f32
    %708 = arith.cmpf ogt, %705, %cst_337 : f32
    %cst_338 = arith.constant 5.000000e-02 : f32
    %709 = arith.select %708, %cst_338, %705 : f32
    %cst_339 = arith.constant -2.000000e-02 : f32
    %710 = arith.cmpf olt, %705, %cst_339 : f32
    %cst_340 = arith.constant -2.000000e-02 : f32
    %711 = arith.select %710, %cst_340, %709 : f32
    %c30_341 = arith.constant 30 : index
    %712 = memref.load %arg3[%c30_341] : memref<101xf32, #tpu.memory_space<smem>>
    memref.store %707, %arg3[%c30_341] : memref<101xf32, #tpu.memory_space<smem>>
    %cst_342 = arith.constant 7.750000e+02 : f32
    %713 = arith.mulf %711, %cst_342 : f32
    %714 = arith.fptosi %713 : f32 to i32
    %cst_343 = arith.constant 484.615387 : f32
    %715 = arith.mulf %707, %cst_343 : f32
    %716 = arith.fptosi %715 : f32 to i32
    %c128_i32_344 = arith.constant 128 : i32
    %717 = arith.muli %714, %c128_i32_344 : i32
    %718 = arith.addi %717, %716 : i32
    %c2216_i32_345 = arith.constant 2216 : i32
    %719 = arith.addi %718, %c2216_i32_345 : i32
    %720 = arith.index_cast %719 : i32 to index
    %721 = memref.load %arg2[%720] : memref<7424xf32, #tpu.memory_space<smem>>
    %c31 = arith.constant 31 : index
    %722 = memref.load %arg4[%c31] : memref<101xf32, #tpu.memory_space<smem>>
    memref.store %721, %arg4[%c31] : memref<101xf32, #tpu.memory_space<smem>>
    %723 = arith.index_cast %719 : i32 to index
    %724 = memref.load %arg0[%723] : memref<7424xf32, #tpu.memory_space<smem>>
    %725 = arith.addf %707, %724 : f32
    %726 = arith.index_cast %719 : i32 to index
    %727 = memref.load %arg1[%726] : memref<7424xf32, #tpu.memory_space<smem>>
    %728 = arith.addf %711, %727 : f32
    %cst_346 = arith.constant -8.000000e-02 : f32
    %729 = arith.maximumf %725, %cst_346 : f32
    %cst_347 = arith.constant 5.000000e-02 : f32
    %730 = arith.minimumf %729, %cst_347 : f32
    %cst_348 = arith.constant 2.000000e-02 : f32
    %731 = arith.cmpf ogt, %728, %cst_348 : f32
    %cst_349 = arith.constant 5.000000e-02 : f32
    %732 = arith.select %731, %cst_349, %728 : f32
    %cst_350 = arith.constant -2.000000e-02 : f32
    %733 = arith.cmpf olt, %728, %cst_350 : f32
    %cst_351 = arith.constant -2.000000e-02 : f32
    %734 = arith.select %733, %cst_351, %732 : f32
    %c31_352 = arith.constant 31 : index
    %735 = memref.load %arg3[%c31_352] : memref<101xf32, #tpu.memory_space<smem>>
    memref.store %730, %arg3[%c31_352] : memref<101xf32, #tpu.memory_space<smem>>
    %cst_353 = arith.constant 7.750000e+02 : f32
    %736 = arith.mulf %734, %cst_353 : f32
    %737 = arith.fptosi %736 : f32 to i32
    %cst_354 = arith.constant 484.615387 : f32
    %738 = arith.mulf %730, %cst_354 : f32
    %739 = arith.fptosi %738 : f32 to i32
    %c128_i32_355 = arith.constant 128 : i32
    %740 = arith.muli %737, %c128_i32_355 : i32
    %741 = arith.addi %740, %739 : i32
    %c2216_i32_356 = arith.constant 2216 : i32
    %742 = arith.addi %741, %c2216_i32_356 : i32
    %743 = arith.index_cast %742 : i32 to index
    %744 = memref.load %arg2[%743] : memref<7424xf32, #tpu.memory_space<smem>>
    %c32 = arith.constant 32 : index
    %745 = memref.load %arg4[%c32] : memref<101xf32, #tpu.memory_space<smem>>
    memref.store %744, %arg4[%c32] : memref<101xf32, #tpu.memory_space<smem>>
    %746 = arith.index_cast %742 : i32 to index
    %747 = memref.load %arg0[%746] : memref<7424xf32, #tpu.memory_space<smem>>
    %748 = arith.addf %730, %747 : f32
    %749 = arith.index_cast %742 : i32 to index
    %750 = memref.load %arg1[%749] : memref<7424xf32, #tpu.memory_space<smem>>
    %751 = arith.addf %734, %750 : f32
    %cst_357 = arith.constant -8.000000e-02 : f32
    %752 = arith.maximumf %748, %cst_357 : f32
    %cst_358 = arith.constant 5.000000e-02 : f32
    %753 = arith.minimumf %752, %cst_358 : f32
    %cst_359 = arith.constant 2.000000e-02 : f32
    %754 = arith.cmpf ogt, %751, %cst_359 : f32
    %cst_360 = arith.constant 5.000000e-02 : f32
    %755 = arith.select %754, %cst_360, %751 : f32
    %cst_361 = arith.constant -2.000000e-02 : f32
    %756 = arith.cmpf olt, %751, %cst_361 : f32
    %cst_362 = arith.constant -2.000000e-02 : f32
    %757 = arith.select %756, %cst_362, %755 : f32
    %c32_363 = arith.constant 32 : index
    %758 = memref.load %arg3[%c32_363] : memref<101xf32, #tpu.memory_space<smem>>
    memref.store %753, %arg3[%c32_363] : memref<101xf32, #tpu.memory_space<smem>>
    %cst_364 = arith.constant 7.750000e+02 : f32
    %759 = arith.mulf %757, %cst_364 : f32
    %760 = arith.fptosi %759 : f32 to i32
    %cst_365 = arith.constant 484.615387 : f32
    %761 = arith.mulf %753, %cst_365 : f32
    %762 = arith.fptosi %761 : f32 to i32
    %c128_i32_366 = arith.constant 128 : i32
    %763 = arith.muli %760, %c128_i32_366 : i32
    %764 = arith.addi %763, %762 : i32
    %c2216_i32_367 = arith.constant 2216 : i32
    %765 = arith.addi %764, %c2216_i32_367 : i32
    %766 = arith.index_cast %765 : i32 to index
    %767 = memref.load %arg2[%766] : memref<7424xf32, #tpu.memory_space<smem>>
    %c33 = arith.constant 33 : index
    %768 = memref.load %arg4[%c33] : memref<101xf32, #tpu.memory_space<smem>>
    memref.store %767, %arg4[%c33] : memref<101xf32, #tpu.memory_space<smem>>
    %769 = arith.index_cast %765 : i32 to index
    %770 = memref.load %arg0[%769] : memref<7424xf32, #tpu.memory_space<smem>>
    %771 = arith.addf %753, %770 : f32
    %772 = arith.index_cast %765 : i32 to index
    %773 = memref.load %arg1[%772] : memref<7424xf32, #tpu.memory_space<smem>>
    %774 = arith.addf %757, %773 : f32
    %cst_368 = arith.constant -8.000000e-02 : f32
    %775 = arith.maximumf %771, %cst_368 : f32
    %cst_369 = arith.constant 5.000000e-02 : f32
    %776 = arith.minimumf %775, %cst_369 : f32
    %cst_370 = arith.constant 2.000000e-02 : f32
    %777 = arith.cmpf ogt, %774, %cst_370 : f32
    %cst_371 = arith.constant 5.000000e-02 : f32
    %778 = arith.select %777, %cst_371, %774 : f32
    %cst_372 = arith.constant -2.000000e-02 : f32
    %779 = arith.cmpf olt, %774, %cst_372 : f32
    %cst_373 = arith.constant -2.000000e-02 : f32
    %780 = arith.select %779, %cst_373, %778 : f32
    %c33_374 = arith.constant 33 : index
    %781 = memref.load %arg3[%c33_374] : memref<101xf32, #tpu.memory_space<smem>>
    memref.store %776, %arg3[%c33_374] : memref<101xf32, #tpu.memory_space<smem>>
    %cst_375 = arith.constant 7.750000e+02 : f32
    %782 = arith.mulf %780, %cst_375 : f32
    %783 = arith.fptosi %782 : f32 to i32
    %cst_376 = arith.constant 484.615387 : f32
    %784 = arith.mulf %776, %cst_376 : f32
    %785 = arith.fptosi %784 : f32 to i32
    %c128_i32_377 = arith.constant 128 : i32
    %786 = arith.muli %783, %c128_i32_377 : i32
    %787 = arith.addi %786, %785 : i32
    %c2216_i32_378 = arith.constant 2216 : i32
    %788 = arith.addi %787, %c2216_i32_378 : i32
    %789 = arith.index_cast %788 : i32 to index
    %790 = memref.load %arg2[%789] : memref<7424xf32, #tpu.memory_space<smem>>
    %c34 = arith.constant 34 : index
    %791 = memref.load %arg4[%c34] : memref<101xf32, #tpu.memory_space<smem>>
    memref.store %790, %arg4[%c34] : memref<101xf32, #tpu.memory_space<smem>>
    %792 = arith.index_cast %788 : i32 to index
    %793 = memref.load %arg0[%792] : memref<7424xf32, #tpu.memory_space<smem>>
    %794 = arith.addf %776, %793 : f32
    %795 = arith.index_cast %788 : i32 to index
    %796 = memref.load %arg1[%795] : memref<7424xf32, #tpu.memory_space<smem>>
    %797 = arith.addf %780, %796 : f32
    %cst_379 = arith.constant -8.000000e-02 : f32
    %798 = arith.maximumf %794, %cst_379 : f32
    %cst_380 = arith.constant 5.000000e-02 : f32
    %799 = arith.minimumf %798, %cst_380 : f32
    %cst_381 = arith.constant 2.000000e-02 : f32
    %800 = arith.cmpf ogt, %797, %cst_381 : f32
    %cst_382 = arith.constant 5.000000e-02 : f32
    %801 = arith.select %800, %cst_382, %797 : f32
    %cst_383 = arith.constant -2.000000e-02 : f32
    %802 = arith.cmpf olt, %797, %cst_383 : f32
    %cst_384 = arith.constant -2.000000e-02 : f32
    %803 = arith.select %802, %cst_384, %801 : f32
    %c34_385 = arith.constant 34 : index
    %804 = memref.load %arg3[%c34_385] : memref<101xf32, #tpu.memory_space<smem>>
    memref.store %799, %arg3[%c34_385] : memref<101xf32, #tpu.memory_space<smem>>
    %cst_386 = arith.constant 7.750000e+02 : f32
    %805 = arith.mulf %803, %cst_386 : f32
    %806 = arith.fptosi %805 : f32 to i32
    %cst_387 = arith.constant 484.615387 : f32
    %807 = arith.mulf %799, %cst_387 : f32
    %808 = arith.fptosi %807 : f32 to i32
    %c128_i32_388 = arith.constant 128 : i32
    %809 = arith.muli %806, %c128_i32_388 : i32
    %810 = arith.addi %809, %808 : i32
    %c2216_i32_389 = arith.constant 2216 : i32
    %811 = arith.addi %810, %c2216_i32_389 : i32
    %812 = arith.index_cast %811 : i32 to index
    %813 = memref.load %arg2[%812] : memref<7424xf32, #tpu.memory_space<smem>>
    %c35 = arith.constant 35 : index
    %814 = memref.load %arg4[%c35] : memref<101xf32, #tpu.memory_space<smem>>
    memref.store %813, %arg4[%c35] : memref<101xf32, #tpu.memory_space<smem>>
    %815 = arith.index_cast %811 : i32 to index
    %816 = memref.load %arg0[%815] : memref<7424xf32, #tpu.memory_space<smem>>
    %817 = arith.addf %799, %816 : f32
    %818 = arith.index_cast %811 : i32 to index
    %819 = memref.load %arg1[%818] : memref<7424xf32, #tpu.memory_space<smem>>
    %820 = arith.addf %803, %819 : f32
    %cst_390 = arith.constant -8.000000e-02 : f32
    %821 = arith.maximumf %817, %cst_390 : f32
    %cst_391 = arith.constant 5.000000e-02 : f32
    %822 = arith.minimumf %821, %cst_391 : f32
    %cst_392 = arith.constant 2.000000e-02 : f32
    %823 = arith.cmpf ogt, %820, %cst_392 : f32
    %cst_393 = arith.constant 5.000000e-02 : f32
    %824 = arith.select %823, %cst_393, %820 : f32
    %cst_394 = arith.constant -2.000000e-02 : f32
    %825 = arith.cmpf olt, %820, %cst_394 : f32
    %cst_395 = arith.constant -2.000000e-02 : f32
    %826 = arith.select %825, %cst_395, %824 : f32
    %c35_396 = arith.constant 35 : index
    %827 = memref.load %arg3[%c35_396] : memref<101xf32, #tpu.memory_space<smem>>
    memref.store %822, %arg3[%c35_396] : memref<101xf32, #tpu.memory_space<smem>>
    %cst_397 = arith.constant 7.750000e+02 : f32
    %828 = arith.mulf %826, %cst_397 : f32
    %829 = arith.fptosi %828 : f32 to i32
    %cst_398 = arith.constant 484.615387 : f32
    %830 = arith.mulf %822, %cst_398 : f32
    %831 = arith.fptosi %830 : f32 to i32
    %c128_i32_399 = arith.constant 128 : i32
    %832 = arith.muli %829, %c128_i32_399 : i32
    %833 = arith.addi %832, %831 : i32
    %c2216_i32_400 = arith.constant 2216 : i32
    %834 = arith.addi %833, %c2216_i32_400 : i32
    %835 = arith.index_cast %834 : i32 to index
    %836 = memref.load %arg2[%835] : memref<7424xf32, #tpu.memory_space<smem>>
    %c36 = arith.constant 36 : index
    %837 = memref.load %arg4[%c36] : memref<101xf32, #tpu.memory_space<smem>>
    memref.store %836, %arg4[%c36] : memref<101xf32, #tpu.memory_space<smem>>
    %838 = arith.index_cast %834 : i32 to index
    %839 = memref.load %arg0[%838] : memref<7424xf32, #tpu.memory_space<smem>>
    %840 = arith.addf %822, %839 : f32
    %841 = arith.index_cast %834 : i32 to index
    %842 = memref.load %arg1[%841] : memref<7424xf32, #tpu.memory_space<smem>>
    %843 = arith.addf %826, %842 : f32
    %cst_401 = arith.constant -8.000000e-02 : f32
    %844 = arith.maximumf %840, %cst_401 : f32
    %cst_402 = arith.constant 5.000000e-02 : f32
    %845 = arith.minimumf %844, %cst_402 : f32
    %cst_403 = arith.constant 2.000000e-02 : f32
    %846 = arith.cmpf ogt, %843, %cst_403 : f32
    %cst_404 = arith.constant 5.000000e-02 : f32
    %847 = arith.select %846, %cst_404, %843 : f32
    %cst_405 = arith.constant -2.000000e-02 : f32
    %848 = arith.cmpf olt, %843, %cst_405 : f32
    %cst_406 = arith.constant -2.000000e-02 : f32
    %849 = arith.select %848, %cst_406, %847 : f32
    %c36_407 = arith.constant 36 : index
    %850 = memref.load %arg3[%c36_407] : memref<101xf32, #tpu.memory_space<smem>>
    memref.store %845, %arg3[%c36_407] : memref<101xf32, #tpu.memory_space<smem>>
    %cst_408 = arith.constant 7.750000e+02 : f32
    %851 = arith.mulf %849, %cst_408 : f32
    %852 = arith.fptosi %851 : f32 to i32
    %cst_409 = arith.constant 484.615387 : f32
    %853 = arith.mulf %845, %cst_409 : f32
    %854 = arith.fptosi %853 : f32 to i32
    %c128_i32_410 = arith.constant 128 : i32
    %855 = arith.muli %852, %c128_i32_410 : i32
    %856 = arith.addi %855, %854 : i32
    %c2216_i32_411 = arith.constant 2216 : i32
    %857 = arith.addi %856, %c2216_i32_411 : i32
    %858 = arith.index_cast %857 : i32 to index
    %859 = memref.load %arg2[%858] : memref<7424xf32, #tpu.memory_space<smem>>
    %c37 = arith.constant 37 : index
    %860 = memref.load %arg4[%c37] : memref<101xf32, #tpu.memory_space<smem>>
    memref.store %859, %arg4[%c37] : memref<101xf32, #tpu.memory_space<smem>>
    %861 = arith.index_cast %857 : i32 to index
    %862 = memref.load %arg0[%861] : memref<7424xf32, #tpu.memory_space<smem>>
    %863 = arith.addf %845, %862 : f32
    %864 = arith.index_cast %857 : i32 to index
    %865 = memref.load %arg1[%864] : memref<7424xf32, #tpu.memory_space<smem>>
    %866 = arith.addf %849, %865 : f32
    %cst_412 = arith.constant -8.000000e-02 : f32
    %867 = arith.maximumf %863, %cst_412 : f32
    %cst_413 = arith.constant 5.000000e-02 : f32
    %868 = arith.minimumf %867, %cst_413 : f32
    %cst_414 = arith.constant 2.000000e-02 : f32
    %869 = arith.cmpf ogt, %866, %cst_414 : f32
    %cst_415 = arith.constant 5.000000e-02 : f32
    %870 = arith.select %869, %cst_415, %866 : f32
    %cst_416 = arith.constant -2.000000e-02 : f32
    %871 = arith.cmpf olt, %866, %cst_416 : f32
    %cst_417 = arith.constant -2.000000e-02 : f32
    %872 = arith.select %871, %cst_417, %870 : f32
    %c37_418 = arith.constant 37 : index
    %873 = memref.load %arg3[%c37_418] : memref<101xf32, #tpu.memory_space<smem>>
    memref.store %868, %arg3[%c37_418] : memref<101xf32, #tpu.memory_space<smem>>
    %cst_419 = arith.constant 7.750000e+02 : f32
    %874 = arith.mulf %872, %cst_419 : f32
    %875 = arith.fptosi %874 : f32 to i32
    %cst_420 = arith.constant 484.615387 : f32
    %876 = arith.mulf %868, %cst_420 : f32
    %877 = arith.fptosi %876 : f32 to i32
    %c128_i32_421 = arith.constant 128 : i32
    %878 = arith.muli %875, %c128_i32_421 : i32
    %879 = arith.addi %878, %877 : i32
    %c2216_i32_422 = arith.constant 2216 : i32
    %880 = arith.addi %879, %c2216_i32_422 : i32
    %881 = arith.index_cast %880 : i32 to index
    %882 = memref.load %arg2[%881] : memref<7424xf32, #tpu.memory_space<smem>>
    %c38 = arith.constant 38 : index
    %883 = memref.load %arg4[%c38] : memref<101xf32, #tpu.memory_space<smem>>
    memref.store %882, %arg4[%c38] : memref<101xf32, #tpu.memory_space<smem>>
    %884 = arith.index_cast %880 : i32 to index
    %885 = memref.load %arg0[%884] : memref<7424xf32, #tpu.memory_space<smem>>
    %886 = arith.addf %868, %885 : f32
    %887 = arith.index_cast %880 : i32 to index
    %888 = memref.load %arg1[%887] : memref<7424xf32, #tpu.memory_space<smem>>
    %889 = arith.addf %872, %888 : f32
    %cst_423 = arith.constant -8.000000e-02 : f32
    %890 = arith.maximumf %886, %cst_423 : f32
    %cst_424 = arith.constant 5.000000e-02 : f32
    %891 = arith.minimumf %890, %cst_424 : f32
    %cst_425 = arith.constant 2.000000e-02 : f32
    %892 = arith.cmpf ogt, %889, %cst_425 : f32
    %cst_426 = arith.constant 5.000000e-02 : f32
    %893 = arith.select %892, %cst_426, %889 : f32
    %cst_427 = arith.constant -2.000000e-02 : f32
    %894 = arith.cmpf olt, %889, %cst_427 : f32
    %cst_428 = arith.constant -2.000000e-02 : f32
    %895 = arith.select %894, %cst_428, %893 : f32
    %c38_429 = arith.constant 38 : index
    %896 = memref.load %arg3[%c38_429] : memref<101xf32, #tpu.memory_space<smem>>
    memref.store %891, %arg3[%c38_429] : memref<101xf32, #tpu.memory_space<smem>>
    %cst_430 = arith.constant 7.750000e+02 : f32
    %897 = arith.mulf %895, %cst_430 : f32
    %898 = arith.fptosi %897 : f32 to i32
    %cst_431 = arith.constant 484.615387 : f32
    %899 = arith.mulf %891, %cst_431 : f32
    %900 = arith.fptosi %899 : f32 to i32
    %c128_i32_432 = arith.constant 128 : i32
    %901 = arith.muli %898, %c128_i32_432 : i32
    %902 = arith.addi %901, %900 : i32
    %c2216_i32_433 = arith.constant 2216 : i32
    %903 = arith.addi %902, %c2216_i32_433 : i32
    %904 = arith.index_cast %903 : i32 to index
    %905 = memref.load %arg2[%904] : memref<7424xf32, #tpu.memory_space<smem>>
    %c39 = arith.constant 39 : index
    %906 = memref.load %arg4[%c39] : memref<101xf32, #tpu.memory_space<smem>>
    memref.store %905, %arg4[%c39] : memref<101xf32, #tpu.memory_space<smem>>
    %907 = arith.index_cast %903 : i32 to index
    %908 = memref.load %arg0[%907] : memref<7424xf32, #tpu.memory_space<smem>>
    %909 = arith.addf %891, %908 : f32
    %910 = arith.index_cast %903 : i32 to index
    %911 = memref.load %arg1[%910] : memref<7424xf32, #tpu.memory_space<smem>>
    %912 = arith.addf %895, %911 : f32
    %cst_434 = arith.constant -8.000000e-02 : f32
    %913 = arith.maximumf %909, %cst_434 : f32
    %cst_435 = arith.constant 5.000000e-02 : f32
    %914 = arith.minimumf %913, %cst_435 : f32
    %cst_436 = arith.constant 2.000000e-02 : f32
    %915 = arith.cmpf ogt, %912, %cst_436 : f32
    %cst_437 = arith.constant 5.000000e-02 : f32
    %916 = arith.select %915, %cst_437, %912 : f32
    %cst_438 = arith.constant -2.000000e-02 : f32
    %917 = arith.cmpf olt, %912, %cst_438 : f32
    %cst_439 = arith.constant -2.000000e-02 : f32
    %918 = arith.select %917, %cst_439, %916 : f32
    %c39_440 = arith.constant 39 : index
    %919 = memref.load %arg3[%c39_440] : memref<101xf32, #tpu.memory_space<smem>>
    memref.store %914, %arg3[%c39_440] : memref<101xf32, #tpu.memory_space<smem>>
    %cst_441 = arith.constant 7.750000e+02 : f32
    %920 = arith.mulf %918, %cst_441 : f32
    %921 = arith.fptosi %920 : f32 to i32
    %cst_442 = arith.constant 484.615387 : f32
    %922 = arith.mulf %914, %cst_442 : f32
    %923 = arith.fptosi %922 : f32 to i32
    %c128_i32_443 = arith.constant 128 : i32
    %924 = arith.muli %921, %c128_i32_443 : i32
    %925 = arith.addi %924, %923 : i32
    %c2216_i32_444 = arith.constant 2216 : i32
    %926 = arith.addi %925, %c2216_i32_444 : i32
    %927 = arith.index_cast %926 : i32 to index
    %928 = memref.load %arg2[%927] : memref<7424xf32, #tpu.memory_space<smem>>
    %c40 = arith.constant 40 : index
    %929 = memref.load %arg4[%c40] : memref<101xf32, #tpu.memory_space<smem>>
    memref.store %928, %arg4[%c40] : memref<101xf32, #tpu.memory_space<smem>>
    %930 = arith.index_cast %926 : i32 to index
    %931 = memref.load %arg0[%930] : memref<7424xf32, #tpu.memory_space<smem>>
    %932 = arith.addf %914, %931 : f32
    %933 = arith.index_cast %926 : i32 to index
    %934 = memref.load %arg1[%933] : memref<7424xf32, #tpu.memory_space<smem>>
    %935 = arith.addf %918, %934 : f32
    %cst_445 = arith.constant -8.000000e-02 : f32
    %936 = arith.maximumf %932, %cst_445 : f32
    %cst_446 = arith.constant 5.000000e-02 : f32
    %937 = arith.minimumf %936, %cst_446 : f32
    %cst_447 = arith.constant 2.000000e-02 : f32
    %938 = arith.cmpf ogt, %935, %cst_447 : f32
    %cst_448 = arith.constant 5.000000e-02 : f32
    %939 = arith.select %938, %cst_448, %935 : f32
    %cst_449 = arith.constant -2.000000e-02 : f32
    %940 = arith.cmpf olt, %935, %cst_449 : f32
    %cst_450 = arith.constant -2.000000e-02 : f32
    %941 = arith.select %940, %cst_450, %939 : f32
    %c40_451 = arith.constant 40 : index
    %942 = memref.load %arg3[%c40_451] : memref<101xf32, #tpu.memory_space<smem>>
    memref.store %937, %arg3[%c40_451] : memref<101xf32, #tpu.memory_space<smem>>
    %cst_452 = arith.constant 7.750000e+02 : f32
    %943 = arith.mulf %941, %cst_452 : f32
    %944 = arith.fptosi %943 : f32 to i32
    %cst_453 = arith.constant 484.615387 : f32
    %945 = arith.mulf %937, %cst_453 : f32
    %946 = arith.fptosi %945 : f32 to i32
    %c128_i32_454 = arith.constant 128 : i32
    %947 = arith.muli %944, %c128_i32_454 : i32
    %948 = arith.addi %947, %946 : i32
    %c2216_i32_455 = arith.constant 2216 : i32
    %949 = arith.addi %948, %c2216_i32_455 : i32
    %950 = arith.index_cast %949 : i32 to index
    %951 = memref.load %arg2[%950] : memref<7424xf32, #tpu.memory_space<smem>>
    %c41 = arith.constant 41 : index
    %952 = memref.load %arg4[%c41] : memref<101xf32, #tpu.memory_space<smem>>
    memref.store %951, %arg4[%c41] : memref<101xf32, #tpu.memory_space<smem>>
    %953 = arith.index_cast %949 : i32 to index
    %954 = memref.load %arg0[%953] : memref<7424xf32, #tpu.memory_space<smem>>
    %955 = arith.addf %937, %954 : f32
    %956 = arith.index_cast %949 : i32 to index
    %957 = memref.load %arg1[%956] : memref<7424xf32, #tpu.memory_space<smem>>
    %958 = arith.addf %941, %957 : f32
    %cst_456 = arith.constant -8.000000e-02 : f32
    %959 = arith.maximumf %955, %cst_456 : f32
    %cst_457 = arith.constant 5.000000e-02 : f32
    %960 = arith.minimumf %959, %cst_457 : f32
    %cst_458 = arith.constant 2.000000e-02 : f32
    %961 = arith.cmpf ogt, %958, %cst_458 : f32
    %cst_459 = arith.constant 5.000000e-02 : f32
    %962 = arith.select %961, %cst_459, %958 : f32
    %cst_460 = arith.constant -2.000000e-02 : f32
    %963 = arith.cmpf olt, %958, %cst_460 : f32
    %cst_461 = arith.constant -2.000000e-02 : f32
    %964 = arith.select %963, %cst_461, %962 : f32
    %c41_462 = arith.constant 41 : index
    %965 = memref.load %arg3[%c41_462] : memref<101xf32, #tpu.memory_space<smem>>
    memref.store %960, %arg3[%c41_462] : memref<101xf32, #tpu.memory_space<smem>>
    %cst_463 = arith.constant 7.750000e+02 : f32
    %966 = arith.mulf %964, %cst_463 : f32
    %967 = arith.fptosi %966 : f32 to i32
    %cst_464 = arith.constant 484.615387 : f32
    %968 = arith.mulf %960, %cst_464 : f32
    %969 = arith.fptosi %968 : f32 to i32
    %c128_i32_465 = arith.constant 128 : i32
    %970 = arith.muli %967, %c128_i32_465 : i32
    %971 = arith.addi %970, %969 : i32
    %c2216_i32_466 = arith.constant 2216 : i32
    %972 = arith.addi %971, %c2216_i32_466 : i32
    %973 = arith.index_cast %972 : i32 to index
    %974 = memref.load %arg2[%973] : memref<7424xf32, #tpu.memory_space<smem>>
    %c42 = arith.constant 42 : index
    %975 = memref.load %arg4[%c42] : memref<101xf32, #tpu.memory_space<smem>>
    memref.store %974, %arg4[%c42] : memref<101xf32, #tpu.memory_space<smem>>
    %976 = arith.index_cast %972 : i32 to index
    %977 = memref.load %arg0[%976] : memref<7424xf32, #tpu.memory_space<smem>>
    %978 = arith.addf %960, %977 : f32
    %979 = arith.index_cast %972 : i32 to index
    %980 = memref.load %arg1[%979] : memref<7424xf32, #tpu.memory_space<smem>>
    %981 = arith.addf %964, %980 : f32
    %cst_467 = arith.constant -8.000000e-02 : f32
    %982 = arith.maximumf %978, %cst_467 : f32
    %cst_468 = arith.constant 5.000000e-02 : f32
    %983 = arith.minimumf %982, %cst_468 : f32
    %cst_469 = arith.constant 2.000000e-02 : f32
    %984 = arith.cmpf ogt, %981, %cst_469 : f32
    %cst_470 = arith.constant 5.000000e-02 : f32
    %985 = arith.select %984, %cst_470, %981 : f32
    %cst_471 = arith.constant -2.000000e-02 : f32
    %986 = arith.cmpf olt, %981, %cst_471 : f32
    %cst_472 = arith.constant -2.000000e-02 : f32
    %987 = arith.select %986, %cst_472, %985 : f32
    %c42_473 = arith.constant 42 : index
    %988 = memref.load %arg3[%c42_473] : memref<101xf32, #tpu.memory_space<smem>>
    memref.store %983, %arg3[%c42_473] : memref<101xf32, #tpu.memory_space<smem>>
    %cst_474 = arith.constant 7.750000e+02 : f32
    %989 = arith.mulf %987, %cst_474 : f32
    %990 = arith.fptosi %989 : f32 to i32
    %cst_475 = arith.constant 484.615387 : f32
    %991 = arith.mulf %983, %cst_475 : f32
    %992 = arith.fptosi %991 : f32 to i32
    %c128_i32_476 = arith.constant 128 : i32
    %993 = arith.muli %990, %c128_i32_476 : i32
    %994 = arith.addi %993, %992 : i32
    %c2216_i32_477 = arith.constant 2216 : i32
    %995 = arith.addi %994, %c2216_i32_477 : i32
    %996 = arith.index_cast %995 : i32 to index
    %997 = memref.load %arg2[%996] : memref<7424xf32, #tpu.memory_space<smem>>
    %c43 = arith.constant 43 : index
    %998 = memref.load %arg4[%c43] : memref<101xf32, #tpu.memory_space<smem>>
    memref.store %997, %arg4[%c43] : memref<101xf32, #tpu.memory_space<smem>>
    %999 = arith.index_cast %995 : i32 to index
    %1000 = memref.load %arg0[%999] : memref<7424xf32, #tpu.memory_space<smem>>
    %1001 = arith.addf %983, %1000 : f32
    %1002 = arith.index_cast %995 : i32 to index
    %1003 = memref.load %arg1[%1002] : memref<7424xf32, #tpu.memory_space<smem>>
    %1004 = arith.addf %987, %1003 : f32
    %cst_478 = arith.constant -8.000000e-02 : f32
    %1005 = arith.maximumf %1001, %cst_478 : f32
    %cst_479 = arith.constant 5.000000e-02 : f32
    %1006 = arith.minimumf %1005, %cst_479 : f32
    %cst_480 = arith.constant 2.000000e-02 : f32
    %1007 = arith.cmpf ogt, %1004, %cst_480 : f32
    %cst_481 = arith.constant 5.000000e-02 : f32
    %1008 = arith.select %1007, %cst_481, %1004 : f32
    %cst_482 = arith.constant -2.000000e-02 : f32
    %1009 = arith.cmpf olt, %1004, %cst_482 : f32
    %cst_483 = arith.constant -2.000000e-02 : f32
    %1010 = arith.select %1009, %cst_483, %1008 : f32
    %c43_484 = arith.constant 43 : index
    %1011 = memref.load %arg3[%c43_484] : memref<101xf32, #tpu.memory_space<smem>>
    memref.store %1006, %arg3[%c43_484] : memref<101xf32, #tpu.memory_space<smem>>
    %cst_485 = arith.constant 7.750000e+02 : f32
    %1012 = arith.mulf %1010, %cst_485 : f32
    %1013 = arith.fptosi %1012 : f32 to i32
    %cst_486 = arith.constant 484.615387 : f32
    %1014 = arith.mulf %1006, %cst_486 : f32
    %1015 = arith.fptosi %1014 : f32 to i32
    %c128_i32_487 = arith.constant 128 : i32
    %1016 = arith.muli %1013, %c128_i32_487 : i32
    %1017 = arith.addi %1016, %1015 : i32
    %c2216_i32_488 = arith.constant 2216 : i32
    %1018 = arith.addi %1017, %c2216_i32_488 : i32
    %1019 = arith.index_cast %1018 : i32 to index
    %1020 = memref.load %arg2[%1019] : memref<7424xf32, #tpu.memory_space<smem>>
    %c44 = arith.constant 44 : index
    %1021 = memref.load %arg4[%c44] : memref<101xf32, #tpu.memory_space<smem>>
    memref.store %1020, %arg4[%c44] : memref<101xf32, #tpu.memory_space<smem>>
    %1022 = arith.index_cast %1018 : i32 to index
    %1023 = memref.load %arg0[%1022] : memref<7424xf32, #tpu.memory_space<smem>>
    %1024 = arith.addf %1006, %1023 : f32
    %1025 = arith.index_cast %1018 : i32 to index
    %1026 = memref.load %arg1[%1025] : memref<7424xf32, #tpu.memory_space<smem>>
    %1027 = arith.addf %1010, %1026 : f32
    %cst_489 = arith.constant -8.000000e-02 : f32
    %1028 = arith.maximumf %1024, %cst_489 : f32
    %cst_490 = arith.constant 5.000000e-02 : f32
    %1029 = arith.minimumf %1028, %cst_490 : f32
    %cst_491 = arith.constant 2.000000e-02 : f32
    %1030 = arith.cmpf ogt, %1027, %cst_491 : f32
    %cst_492 = arith.constant 5.000000e-02 : f32
    %1031 = arith.select %1030, %cst_492, %1027 : f32
    %cst_493 = arith.constant -2.000000e-02 : f32
    %1032 = arith.cmpf olt, %1027, %cst_493 : f32
    %cst_494 = arith.constant -2.000000e-02 : f32
    %1033 = arith.select %1032, %cst_494, %1031 : f32
    %c44_495 = arith.constant 44 : index
    %1034 = memref.load %arg3[%c44_495] : memref<101xf32, #tpu.memory_space<smem>>
    memref.store %1029, %arg3[%c44_495] : memref<101xf32, #tpu.memory_space<smem>>
    %cst_496 = arith.constant 7.750000e+02 : f32
    %1035 = arith.mulf %1033, %cst_496 : f32
    %1036 = arith.fptosi %1035 : f32 to i32
    %cst_497 = arith.constant 484.615387 : f32
    %1037 = arith.mulf %1029, %cst_497 : f32
    %1038 = arith.fptosi %1037 : f32 to i32
    %c128_i32_498 = arith.constant 128 : i32
    %1039 = arith.muli %1036, %c128_i32_498 : i32
    %1040 = arith.addi %1039, %1038 : i32
    %c2216_i32_499 = arith.constant 2216 : i32
    %1041 = arith.addi %1040, %c2216_i32_499 : i32
    %1042 = arith.index_cast %1041 : i32 to index
    %1043 = memref.load %arg2[%1042] : memref<7424xf32, #tpu.memory_space<smem>>
    %c45 = arith.constant 45 : index
    %1044 = memref.load %arg4[%c45] : memref<101xf32, #tpu.memory_space<smem>>
    memref.store %1043, %arg4[%c45] : memref<101xf32, #tpu.memory_space<smem>>
    %1045 = arith.index_cast %1041 : i32 to index
    %1046 = memref.load %arg0[%1045] : memref<7424xf32, #tpu.memory_space<smem>>
    %1047 = arith.addf %1029, %1046 : f32
    %1048 = arith.index_cast %1041 : i32 to index
    %1049 = memref.load %arg1[%1048] : memref<7424xf32, #tpu.memory_space<smem>>
    %1050 = arith.addf %1033, %1049 : f32
    %cst_500 = arith.constant -8.000000e-02 : f32
    %1051 = arith.maximumf %1047, %cst_500 : f32
    %cst_501 = arith.constant 5.000000e-02 : f32
    %1052 = arith.minimumf %1051, %cst_501 : f32
    %cst_502 = arith.constant 2.000000e-02 : f32
    %1053 = arith.cmpf ogt, %1050, %cst_502 : f32
    %cst_503 = arith.constant 5.000000e-02 : f32
    %1054 = arith.select %1053, %cst_503, %1050 : f32
    %cst_504 = arith.constant -2.000000e-02 : f32
    %1055 = arith.cmpf olt, %1050, %cst_504 : f32
    %cst_505 = arith.constant -2.000000e-02 : f32
    %1056 = arith.select %1055, %cst_505, %1054 : f32
    %c45_506 = arith.constant 45 : index
    %1057 = memref.load %arg3[%c45_506] : memref<101xf32, #tpu.memory_space<smem>>
    memref.store %1052, %arg3[%c45_506] : memref<101xf32, #tpu.memory_space<smem>>
    %cst_507 = arith.constant 7.750000e+02 : f32
    %1058 = arith.mulf %1056, %cst_507 : f32
    %1059 = arith.fptosi %1058 : f32 to i32
    %cst_508 = arith.constant 484.615387 : f32
    %1060 = arith.mulf %1052, %cst_508 : f32
    %1061 = arith.fptosi %1060 : f32 to i32
    %c128_i32_509 = arith.constant 128 : i32
    %1062 = arith.muli %1059, %c128_i32_509 : i32
    %1063 = arith.addi %1062, %1061 : i32
    %c2216_i32_510 = arith.constant 2216 : i32
    %1064 = arith.addi %1063, %c2216_i32_510 : i32
    %1065 = arith.index_cast %1064 : i32 to index
    %1066 = memref.load %arg2[%1065] : memref<7424xf32, #tpu.memory_space<smem>>
    %c46 = arith.constant 46 : index
    %1067 = memref.load %arg4[%c46] : memref<101xf32, #tpu.memory_space<smem>>
    memref.store %1066, %arg4[%c46] : memref<101xf32, #tpu.memory_space<smem>>
    %1068 = arith.index_cast %1064 : i32 to index
    %1069 = memref.load %arg0[%1068] : memref<7424xf32, #tpu.memory_space<smem>>
    %1070 = arith.addf %1052, %1069 : f32
    %1071 = arith.index_cast %1064 : i32 to index
    %1072 = memref.load %arg1[%1071] : memref<7424xf32, #tpu.memory_space<smem>>
    %1073 = arith.addf %1056, %1072 : f32
    %cst_511 = arith.constant -8.000000e-02 : f32
    %1074 = arith.maximumf %1070, %cst_511 : f32
    %cst_512 = arith.constant 5.000000e-02 : f32
    %1075 = arith.minimumf %1074, %cst_512 : f32
    %cst_513 = arith.constant 2.000000e-02 : f32
    %1076 = arith.cmpf ogt, %1073, %cst_513 : f32
    %cst_514 = arith.constant 5.000000e-02 : f32
    %1077 = arith.select %1076, %cst_514, %1073 : f32
    %cst_515 = arith.constant -2.000000e-02 : f32
    %1078 = arith.cmpf olt, %1073, %cst_515 : f32
    %cst_516 = arith.constant -2.000000e-02 : f32
    %1079 = arith.select %1078, %cst_516, %1077 : f32
    %c46_517 = arith.constant 46 : index
    %1080 = memref.load %arg3[%c46_517] : memref<101xf32, #tpu.memory_space<smem>>
    memref.store %1075, %arg3[%c46_517] : memref<101xf32, #tpu.memory_space<smem>>
    %cst_518 = arith.constant 7.750000e+02 : f32
    %1081 = arith.mulf %1079, %cst_518 : f32
    %1082 = arith.fptosi %1081 : f32 to i32
    %cst_519 = arith.constant 484.615387 : f32
    %1083 = arith.mulf %1075, %cst_519 : f32
    %1084 = arith.fptosi %1083 : f32 to i32
    %c128_i32_520 = arith.constant 128 : i32
    %1085 = arith.muli %1082, %c128_i32_520 : i32
    %1086 = arith.addi %1085, %1084 : i32
    %c2216_i32_521 = arith.constant 2216 : i32
    %1087 = arith.addi %1086, %c2216_i32_521 : i32
    %1088 = arith.index_cast %1087 : i32 to index
    %1089 = memref.load %arg2[%1088] : memref<7424xf32, #tpu.memory_space<smem>>
    %c47 = arith.constant 47 : index
    %1090 = memref.load %arg4[%c47] : memref<101xf32, #tpu.memory_space<smem>>
    memref.store %1089, %arg4[%c47] : memref<101xf32, #tpu.memory_space<smem>>
    %1091 = arith.index_cast %1087 : i32 to index
    %1092 = memref.load %arg0[%1091] : memref<7424xf32, #tpu.memory_space<smem>>
    %1093 = arith.addf %1075, %1092 : f32
    %1094 = arith.index_cast %1087 : i32 to index
    %1095 = memref.load %arg1[%1094] : memref<7424xf32, #tpu.memory_space<smem>>
    %1096 = arith.addf %1079, %1095 : f32
    %cst_522 = arith.constant -8.000000e-02 : f32
    %1097 = arith.maximumf %1093, %cst_522 : f32
    %cst_523 = arith.constant 5.000000e-02 : f32
    %1098 = arith.minimumf %1097, %cst_523 : f32
    %cst_524 = arith.constant 2.000000e-02 : f32
    %1099 = arith.cmpf ogt, %1096, %cst_524 : f32
    %cst_525 = arith.constant 5.000000e-02 : f32
    %1100 = arith.select %1099, %cst_525, %1096 : f32
    %cst_526 = arith.constant -2.000000e-02 : f32
    %1101 = arith.cmpf olt, %1096, %cst_526 : f32
    %cst_527 = arith.constant -2.000000e-02 : f32
    %1102 = arith.select %1101, %cst_527, %1100 : f32
    %c47_528 = arith.constant 47 : index
    %1103 = memref.load %arg3[%c47_528] : memref<101xf32, #tpu.memory_space<smem>>
    memref.store %1098, %arg3[%c47_528] : memref<101xf32, #tpu.memory_space<smem>>
    %cst_529 = arith.constant 7.750000e+02 : f32
    %1104 = arith.mulf %1102, %cst_529 : f32
    %1105 = arith.fptosi %1104 : f32 to i32
    %cst_530 = arith.constant 484.615387 : f32
    %1106 = arith.mulf %1098, %cst_530 : f32
    %1107 = arith.fptosi %1106 : f32 to i32
    %c128_i32_531 = arith.constant 128 : i32
    %1108 = arith.muli %1105, %c128_i32_531 : i32
    %1109 = arith.addi %1108, %1107 : i32
    %c2216_i32_532 = arith.constant 2216 : i32
    %1110 = arith.addi %1109, %c2216_i32_532 : i32
    %1111 = arith.index_cast %1110 : i32 to index
    %1112 = memref.load %arg2[%1111] : memref<7424xf32, #tpu.memory_space<smem>>
    %c48 = arith.constant 48 : index
    %1113 = memref.load %arg4[%c48] : memref<101xf32, #tpu.memory_space<smem>>
    memref.store %1112, %arg4[%c48] : memref<101xf32, #tpu.memory_space<smem>>
    %1114 = arith.index_cast %1110 : i32 to index
    %1115 = memref.load %arg0[%1114] : memref<7424xf32, #tpu.memory_space<smem>>
    %1116 = arith.addf %1098, %1115 : f32
    %1117 = arith.index_cast %1110 : i32 to index
    %1118 = memref.load %arg1[%1117] : memref<7424xf32, #tpu.memory_space<smem>>
    %1119 = arith.addf %1102, %1118 : f32
    %cst_533 = arith.constant -8.000000e-02 : f32
    %1120 = arith.maximumf %1116, %cst_533 : f32
    %cst_534 = arith.constant 5.000000e-02 : f32
    %1121 = arith.minimumf %1120, %cst_534 : f32
    %cst_535 = arith.constant 2.000000e-02 : f32
    %1122 = arith.cmpf ogt, %1119, %cst_535 : f32
    %cst_536 = arith.constant 5.000000e-02 : f32
    %1123 = arith.select %1122, %cst_536, %1119 : f32
    %cst_537 = arith.constant -2.000000e-02 : f32
    %1124 = arith.cmpf olt, %1119, %cst_537 : f32
    %cst_538 = arith.constant -2.000000e-02 : f32
    %1125 = arith.select %1124, %cst_538, %1123 : f32
    %c48_539 = arith.constant 48 : index
    %1126 = memref.load %arg3[%c48_539] : memref<101xf32, #tpu.memory_space<smem>>
    memref.store %1121, %arg3[%c48_539] : memref<101xf32, #tpu.memory_space<smem>>
    %cst_540 = arith.constant 7.750000e+02 : f32
    %1127 = arith.mulf %1125, %cst_540 : f32
    %1128 = arith.fptosi %1127 : f32 to i32
    %cst_541 = arith.constant 484.615387 : f32
    %1129 = arith.mulf %1121, %cst_541 : f32
    %1130 = arith.fptosi %1129 : f32 to i32
    %c128_i32_542 = arith.constant 128 : i32
    %1131 = arith.muli %1128, %c128_i32_542 : i32
    %1132 = arith.addi %1131, %1130 : i32
    %c2216_i32_543 = arith.constant 2216 : i32
    %1133 = arith.addi %1132, %c2216_i32_543 : i32
    %1134 = arith.index_cast %1133 : i32 to index
    %1135 = memref.load %arg2[%1134] : memref<7424xf32, #tpu.memory_space<smem>>
    %c49 = arith.constant 49 : index
    %1136 = memref.load %arg4[%c49] : memref<101xf32, #tpu.memory_space<smem>>
    memref.store %1135, %arg4[%c49] : memref<101xf32, #tpu.memory_space<smem>>
    %1137 = arith.index_cast %1133 : i32 to index
    %1138 = memref.load %arg0[%1137] : memref<7424xf32, #tpu.memory_space<smem>>
    %1139 = arith.addf %1121, %1138 : f32
    %1140 = arith.index_cast %1133 : i32 to index
    %1141 = memref.load %arg1[%1140] : memref<7424xf32, #tpu.memory_space<smem>>
    %1142 = arith.addf %1125, %1141 : f32
    %cst_544 = arith.constant -8.000000e-02 : f32
    %1143 = arith.maximumf %1139, %cst_544 : f32
    %cst_545 = arith.constant 5.000000e-02 : f32
    %1144 = arith.minimumf %1143, %cst_545 : f32
    %cst_546 = arith.constant 2.000000e-02 : f32
    %1145 = arith.cmpf ogt, %1142, %cst_546 : f32
    %cst_547 = arith.constant 5.000000e-02 : f32
    %1146 = arith.select %1145, %cst_547, %1142 : f32
    %cst_548 = arith.constant -2.000000e-02 : f32
    %1147 = arith.cmpf olt, %1142, %cst_548 : f32
    %cst_549 = arith.constant -2.000000e-02 : f32
    %1148 = arith.select %1147, %cst_549, %1146 : f32
    %c49_550 = arith.constant 49 : index
    %1149 = memref.load %arg3[%c49_550] : memref<101xf32, #tpu.memory_space<smem>>
    memref.store %1144, %arg3[%c49_550] : memref<101xf32, #tpu.memory_space<smem>>
    %cst_551 = arith.constant 7.750000e+02 : f32
    %1150 = arith.mulf %1148, %cst_551 : f32
    %1151 = arith.fptosi %1150 : f32 to i32
    %cst_552 = arith.constant 484.615387 : f32
    %1152 = arith.mulf %1144, %cst_552 : f32
    %1153 = arith.fptosi %1152 : f32 to i32
    %c128_i32_553 = arith.constant 128 : i32
    %1154 = arith.muli %1151, %c128_i32_553 : i32
    %1155 = arith.addi %1154, %1153 : i32
    %c2216_i32_554 = arith.constant 2216 : i32
    %1156 = arith.addi %1155, %c2216_i32_554 : i32
    %1157 = arith.index_cast %1156 : i32 to index
    %1158 = memref.load %arg2[%1157] : memref<7424xf32, #tpu.memory_space<smem>>
    %c50 = arith.constant 50 : index
    %1159 = memref.load %arg4[%c50] : memref<101xf32, #tpu.memory_space<smem>>
    memref.store %1158, %arg4[%c50] : memref<101xf32, #tpu.memory_space<smem>>
    %1160 = arith.index_cast %1156 : i32 to index
    %1161 = memref.load %arg0[%1160] : memref<7424xf32, #tpu.memory_space<smem>>
    %1162 = arith.addf %1144, %1161 : f32
    %1163 = arith.index_cast %1156 : i32 to index
    %1164 = memref.load %arg1[%1163] : memref<7424xf32, #tpu.memory_space<smem>>
    %1165 = arith.addf %1148, %1164 : f32
    %cst_555 = arith.constant -8.000000e-02 : f32
    %1166 = arith.maximumf %1162, %cst_555 : f32
    %cst_556 = arith.constant 5.000000e-02 : f32
    %1167 = arith.minimumf %1166, %cst_556 : f32
    %cst_557 = arith.constant 2.000000e-02 : f32
    %1168 = arith.cmpf ogt, %1165, %cst_557 : f32
    %cst_558 = arith.constant 5.000000e-02 : f32
    %1169 = arith.select %1168, %cst_558, %1165 : f32
    %cst_559 = arith.constant -2.000000e-02 : f32
    %1170 = arith.cmpf olt, %1165, %cst_559 : f32
    %cst_560 = arith.constant -2.000000e-02 : f32
    %1171 = arith.select %1170, %cst_560, %1169 : f32
    %c50_561 = arith.constant 50 : index
    %1172 = memref.load %arg3[%c50_561] : memref<101xf32, #tpu.memory_space<smem>>
    memref.store %1167, %arg3[%c50_561] : memref<101xf32, #tpu.memory_space<smem>>
    %cst_562 = arith.constant 7.750000e+02 : f32
    %1173 = arith.mulf %1171, %cst_562 : f32
    %1174 = arith.fptosi %1173 : f32 to i32
    %cst_563 = arith.constant 484.615387 : f32
    %1175 = arith.mulf %1167, %cst_563 : f32
    %1176 = arith.fptosi %1175 : f32 to i32
    %c128_i32_564 = arith.constant 128 : i32
    %1177 = arith.muli %1174, %c128_i32_564 : i32
    %1178 = arith.addi %1177, %1176 : i32
    %c2216_i32_565 = arith.constant 2216 : i32
    %1179 = arith.addi %1178, %c2216_i32_565 : i32
    %1180 = arith.index_cast %1179 : i32 to index
    %1181 = memref.load %arg2[%1180] : memref<7424xf32, #tpu.memory_space<smem>>
    %c51 = arith.constant 51 : index
    %1182 = memref.load %arg4[%c51] : memref<101xf32, #tpu.memory_space<smem>>
    memref.store %1181, %arg4[%c51] : memref<101xf32, #tpu.memory_space<smem>>
    %1183 = arith.index_cast %1179 : i32 to index
    %1184 = memref.load %arg0[%1183] : memref<7424xf32, #tpu.memory_space<smem>>
    %1185 = arith.addf %1167, %1184 : f32
    %1186 = arith.index_cast %1179 : i32 to index
    %1187 = memref.load %arg1[%1186] : memref<7424xf32, #tpu.memory_space<smem>>
    %1188 = arith.addf %1171, %1187 : f32
    %cst_566 = arith.constant -8.000000e-02 : f32
    %1189 = arith.maximumf %1185, %cst_566 : f32
    %cst_567 = arith.constant 5.000000e-02 : f32
    %1190 = arith.minimumf %1189, %cst_567 : f32
    %cst_568 = arith.constant 2.000000e-02 : f32
    %1191 = arith.cmpf ogt, %1188, %cst_568 : f32
    %cst_569 = arith.constant 5.000000e-02 : f32
    %1192 = arith.select %1191, %cst_569, %1188 : f32
    %cst_570 = arith.constant -2.000000e-02 : f32
    %1193 = arith.cmpf olt, %1188, %cst_570 : f32
    %cst_571 = arith.constant -2.000000e-02 : f32
    %1194 = arith.select %1193, %cst_571, %1192 : f32
    %c51_572 = arith.constant 51 : index
    %1195 = memref.load %arg3[%c51_572] : memref<101xf32, #tpu.memory_space<smem>>
    memref.store %1190, %arg3[%c51_572] : memref<101xf32, #tpu.memory_space<smem>>
    %cst_573 = arith.constant 7.750000e+02 : f32
    %1196 = arith.mulf %1194, %cst_573 : f32
    %1197 = arith.fptosi %1196 : f32 to i32
    %cst_574 = arith.constant 484.615387 : f32
    %1198 = arith.mulf %1190, %cst_574 : f32
    %1199 = arith.fptosi %1198 : f32 to i32
    %c128_i32_575 = arith.constant 128 : i32
    %1200 = arith.muli %1197, %c128_i32_575 : i32
    %1201 = arith.addi %1200, %1199 : i32
    %c2216_i32_576 = arith.constant 2216 : i32
    %1202 = arith.addi %1201, %c2216_i32_576 : i32
    %1203 = arith.index_cast %1202 : i32 to index
    %1204 = memref.load %arg2[%1203] : memref<7424xf32, #tpu.memory_space<smem>>
    %c52 = arith.constant 52 : index
    %1205 = memref.load %arg4[%c52] : memref<101xf32, #tpu.memory_space<smem>>
    memref.store %1204, %arg4[%c52] : memref<101xf32, #tpu.memory_space<smem>>
    %1206 = arith.index_cast %1202 : i32 to index
    %1207 = memref.load %arg0[%1206] : memref<7424xf32, #tpu.memory_space<smem>>
    %1208 = arith.addf %1190, %1207 : f32
    %1209 = arith.index_cast %1202 : i32 to index
    %1210 = memref.load %arg1[%1209] : memref<7424xf32, #tpu.memory_space<smem>>
    %1211 = arith.addf %1194, %1210 : f32
    %cst_577 = arith.constant -8.000000e-02 : f32
    %1212 = arith.maximumf %1208, %cst_577 : f32
    %cst_578 = arith.constant 5.000000e-02 : f32
    %1213 = arith.minimumf %1212, %cst_578 : f32
    %cst_579 = arith.constant 2.000000e-02 : f32
    %1214 = arith.cmpf ogt, %1211, %cst_579 : f32
    %cst_580 = arith.constant 5.000000e-02 : f32
    %1215 = arith.select %1214, %cst_580, %1211 : f32
    %cst_581 = arith.constant -2.000000e-02 : f32
    %1216 = arith.cmpf olt, %1211, %cst_581 : f32
    %cst_582 = arith.constant -2.000000e-02 : f32
    %1217 = arith.select %1216, %cst_582, %1215 : f32
    %c52_583 = arith.constant 52 : index
    %1218 = memref.load %arg3[%c52_583] : memref<101xf32, #tpu.memory_space<smem>>
    memref.store %1213, %arg3[%c52_583] : memref<101xf32, #tpu.memory_space<smem>>
    %cst_584 = arith.constant 7.750000e+02 : f32
    %1219 = arith.mulf %1217, %cst_584 : f32
    %1220 = arith.fptosi %1219 : f32 to i32
    %cst_585 = arith.constant 484.615387 : f32
    %1221 = arith.mulf %1213, %cst_585 : f32
    %1222 = arith.fptosi %1221 : f32 to i32
    %c128_i32_586 = arith.constant 128 : i32
    %1223 = arith.muli %1220, %c128_i32_586 : i32
    %1224 = arith.addi %1223, %1222 : i32
    %c2216_i32_587 = arith.constant 2216 : i32
    %1225 = arith.addi %1224, %c2216_i32_587 : i32
    %1226 = arith.index_cast %1225 : i32 to index
    %1227 = memref.load %arg2[%1226] : memref<7424xf32, #tpu.memory_space<smem>>
    %c53 = arith.constant 53 : index
    %1228 = memref.load %arg4[%c53] : memref<101xf32, #tpu.memory_space<smem>>
    memref.store %1227, %arg4[%c53] : memref<101xf32, #tpu.memory_space<smem>>
    %1229 = arith.index_cast %1225 : i32 to index
    %1230 = memref.load %arg0[%1229] : memref<7424xf32, #tpu.memory_space<smem>>
    %1231 = arith.addf %1213, %1230 : f32
    %1232 = arith.index_cast %1225 : i32 to index
    %1233 = memref.load %arg1[%1232] : memref<7424xf32, #tpu.memory_space<smem>>
    %1234 = arith.addf %1217, %1233 : f32
    %cst_588 = arith.constant -8.000000e-02 : f32
    %1235 = arith.maximumf %1231, %cst_588 : f32
    %cst_589 = arith.constant 5.000000e-02 : f32
    %1236 = arith.minimumf %1235, %cst_589 : f32
    %cst_590 = arith.constant 2.000000e-02 : f32
    %1237 = arith.cmpf ogt, %1234, %cst_590 : f32
    %cst_591 = arith.constant 5.000000e-02 : f32
    %1238 = arith.select %1237, %cst_591, %1234 : f32
    %cst_592 = arith.constant -2.000000e-02 : f32
    %1239 = arith.cmpf olt, %1234, %cst_592 : f32
    %cst_593 = arith.constant -2.000000e-02 : f32
    %1240 = arith.select %1239, %cst_593, %1238 : f32
    %c53_594 = arith.constant 53 : index
    %1241 = memref.load %arg3[%c53_594] : memref<101xf32, #tpu.memory_space<smem>>
    memref.store %1236, %arg3[%c53_594] : memref<101xf32, #tpu.memory_space<smem>>
    %cst_595 = arith.constant 7.750000e+02 : f32
    %1242 = arith.mulf %1240, %cst_595 : f32
    %1243 = arith.fptosi %1242 : f32 to i32
    %cst_596 = arith.constant 484.615387 : f32
    %1244 = arith.mulf %1236, %cst_596 : f32
    %1245 = arith.fptosi %1244 : f32 to i32
    %c128_i32_597 = arith.constant 128 : i32
    %1246 = arith.muli %1243, %c128_i32_597 : i32
    %1247 = arith.addi %1246, %1245 : i32
    %c2216_i32_598 = arith.constant 2216 : i32
    %1248 = arith.addi %1247, %c2216_i32_598 : i32
    %1249 = arith.index_cast %1248 : i32 to index
    %1250 = memref.load %arg2[%1249] : memref<7424xf32, #tpu.memory_space<smem>>
    %c54 = arith.constant 54 : index
    %1251 = memref.load %arg4[%c54] : memref<101xf32, #tpu.memory_space<smem>>
    memref.store %1250, %arg4[%c54] : memref<101xf32, #tpu.memory_space<smem>>
    %1252 = arith.index_cast %1248 : i32 to index
    %1253 = memref.load %arg0[%1252] : memref<7424xf32, #tpu.memory_space<smem>>
    %1254 = arith.addf %1236, %1253 : f32
    %1255 = arith.index_cast %1248 : i32 to index
    %1256 = memref.load %arg1[%1255] : memref<7424xf32, #tpu.memory_space<smem>>
    %1257 = arith.addf %1240, %1256 : f32
    %cst_599 = arith.constant -8.000000e-02 : f32
    %1258 = arith.maximumf %1254, %cst_599 : f32
    %cst_600 = arith.constant 5.000000e-02 : f32
    %1259 = arith.minimumf %1258, %cst_600 : f32
    %cst_601 = arith.constant 2.000000e-02 : f32
    %1260 = arith.cmpf ogt, %1257, %cst_601 : f32
    %cst_602 = arith.constant 5.000000e-02 : f32
    %1261 = arith.select %1260, %cst_602, %1257 : f32
    %cst_603 = arith.constant -2.000000e-02 : f32
    %1262 = arith.cmpf olt, %1257, %cst_603 : f32
    %cst_604 = arith.constant -2.000000e-02 : f32
    %1263 = arith.select %1262, %cst_604, %1261 : f32
    %c54_605 = arith.constant 54 : index
    %1264 = memref.load %arg3[%c54_605] : memref<101xf32, #tpu.memory_space<smem>>
    memref.store %1259, %arg3[%c54_605] : memref<101xf32, #tpu.memory_space<smem>>
    %cst_606 = arith.constant 7.750000e+02 : f32
    %1265 = arith.mulf %1263, %cst_606 : f32
    %1266 = arith.fptosi %1265 : f32 to i32
    %cst_607 = arith.constant 484.615387 : f32
    %1267 = arith.mulf %1259, %cst_607 : f32
    %1268 = arith.fptosi %1267 : f32 to i32
    %c128_i32_608 = arith.constant 128 : i32
    %1269 = arith.muli %1266, %c128_i32_608 : i32
    %1270 = arith.addi %1269, %1268 : i32
    %c2216_i32_609 = arith.constant 2216 : i32
    %1271 = arith.addi %1270, %c2216_i32_609 : i32
    %1272 = arith.index_cast %1271 : i32 to index
    %1273 = memref.load %arg2[%1272] : memref<7424xf32, #tpu.memory_space<smem>>
    %c55 = arith.constant 55 : index
    %1274 = memref.load %arg4[%c55] : memref<101xf32, #tpu.memory_space<smem>>
    memref.store %1273, %arg4[%c55] : memref<101xf32, #tpu.memory_space<smem>>
    %1275 = arith.index_cast %1271 : i32 to index
    %1276 = memref.load %arg0[%1275] : memref<7424xf32, #tpu.memory_space<smem>>
    %1277 = arith.addf %1259, %1276 : f32
    %1278 = arith.index_cast %1271 : i32 to index
    %1279 = memref.load %arg1[%1278] : memref<7424xf32, #tpu.memory_space<smem>>
    %1280 = arith.addf %1263, %1279 : f32
    %cst_610 = arith.constant -8.000000e-02 : f32
    %1281 = arith.maximumf %1277, %cst_610 : f32
    %cst_611 = arith.constant 5.000000e-02 : f32
    %1282 = arith.minimumf %1281, %cst_611 : f32
    %cst_612 = arith.constant 2.000000e-02 : f32
    %1283 = arith.cmpf ogt, %1280, %cst_612 : f32
    %cst_613 = arith.constant 5.000000e-02 : f32
    %1284 = arith.select %1283, %cst_613, %1280 : f32
    %cst_614 = arith.constant -2.000000e-02 : f32
    %1285 = arith.cmpf olt, %1280, %cst_614 : f32
    %cst_615 = arith.constant -2.000000e-02 : f32
    %1286 = arith.select %1285, %cst_615, %1284 : f32
    %c55_616 = arith.constant 55 : index
    %1287 = memref.load %arg3[%c55_616] : memref<101xf32, #tpu.memory_space<smem>>
    memref.store %1282, %arg3[%c55_616] : memref<101xf32, #tpu.memory_space<smem>>
    %cst_617 = arith.constant 7.750000e+02 : f32
    %1288 = arith.mulf %1286, %cst_617 : f32
    %1289 = arith.fptosi %1288 : f32 to i32
    %cst_618 = arith.constant 484.615387 : f32
    %1290 = arith.mulf %1282, %cst_618 : f32
    %1291 = arith.fptosi %1290 : f32 to i32
    %c128_i32_619 = arith.constant 128 : i32
    %1292 = arith.muli %1289, %c128_i32_619 : i32
    %1293 = arith.addi %1292, %1291 : i32
    %c2216_i32_620 = arith.constant 2216 : i32
    %1294 = arith.addi %1293, %c2216_i32_620 : i32
    %1295 = arith.index_cast %1294 : i32 to index
    %1296 = memref.load %arg2[%1295] : memref<7424xf32, #tpu.memory_space<smem>>
    %c56 = arith.constant 56 : index
    %1297 = memref.load %arg4[%c56] : memref<101xf32, #tpu.memory_space<smem>>
    memref.store %1296, %arg4[%c56] : memref<101xf32, #tpu.memory_space<smem>>
    %1298 = arith.index_cast %1294 : i32 to index
    %1299 = memref.load %arg0[%1298] : memref<7424xf32, #tpu.memory_space<smem>>
    %1300 = arith.addf %1282, %1299 : f32
    %1301 = arith.index_cast %1294 : i32 to index
    %1302 = memref.load %arg1[%1301] : memref<7424xf32, #tpu.memory_space<smem>>
    %1303 = arith.addf %1286, %1302 : f32
    %cst_621 = arith.constant -8.000000e-02 : f32
    %1304 = arith.maximumf %1300, %cst_621 : f32
    %cst_622 = arith.constant 5.000000e-02 : f32
    %1305 = arith.minimumf %1304, %cst_622 : f32
    %cst_623 = arith.constant 2.000000e-02 : f32
    %1306 = arith.cmpf ogt, %1303, %cst_623 : f32
    %cst_624 = arith.constant 5.000000e-02 : f32
    %1307 = arith.select %1306, %cst_624, %1303 : f32
    %cst_625 = arith.constant -2.000000e-02 : f32
    %1308 = arith.cmpf olt, %1303, %cst_625 : f32
    %cst_626 = arith.constant -2.000000e-02 : f32
    %1309 = arith.select %1308, %cst_626, %1307 : f32
    %c56_627 = arith.constant 56 : index
    %1310 = memref.load %arg3[%c56_627] : memref<101xf32, #tpu.memory_space<smem>>
    memref.store %1305, %arg3[%c56_627] : memref<101xf32, #tpu.memory_space<smem>>
    %cst_628 = arith.constant 7.750000e+02 : f32
    %1311 = arith.mulf %1309, %cst_628 : f32
    %1312 = arith.fptosi %1311 : f32 to i32
    %cst_629 = arith.constant 484.615387 : f32
    %1313 = arith.mulf %1305, %cst_629 : f32
    %1314 = arith.fptosi %1313 : f32 to i32
    %c128_i32_630 = arith.constant 128 : i32
    %1315 = arith.muli %1312, %c128_i32_630 : i32
    %1316 = arith.addi %1315, %1314 : i32
    %c2216_i32_631 = arith.constant 2216 : i32
    %1317 = arith.addi %1316, %c2216_i32_631 : i32
    %1318 = arith.index_cast %1317 : i32 to index
    %1319 = memref.load %arg2[%1318] : memref<7424xf32, #tpu.memory_space<smem>>
    %c57 = arith.constant 57 : index
    %1320 = memref.load %arg4[%c57] : memref<101xf32, #tpu.memory_space<smem>>
    memref.store %1319, %arg4[%c57] : memref<101xf32, #tpu.memory_space<smem>>
    %1321 = arith.index_cast %1317 : i32 to index
    %1322 = memref.load %arg0[%1321] : memref<7424xf32, #tpu.memory_space<smem>>
    %1323 = arith.addf %1305, %1322 : f32
    %1324 = arith.index_cast %1317 : i32 to index
    %1325 = memref.load %arg1[%1324] : memref<7424xf32, #tpu.memory_space<smem>>
    %1326 = arith.addf %1309, %1325 : f32
    %cst_632 = arith.constant -8.000000e-02 : f32
    %1327 = arith.maximumf %1323, %cst_632 : f32
    %cst_633 = arith.constant 5.000000e-02 : f32
    %1328 = arith.minimumf %1327, %cst_633 : f32
    %cst_634 = arith.constant 2.000000e-02 : f32
    %1329 = arith.cmpf ogt, %1326, %cst_634 : f32
    %cst_635 = arith.constant 5.000000e-02 : f32
    %1330 = arith.select %1329, %cst_635, %1326 : f32
    %cst_636 = arith.constant -2.000000e-02 : f32
    %1331 = arith.cmpf olt, %1326, %cst_636 : f32
    %cst_637 = arith.constant -2.000000e-02 : f32
    %1332 = arith.select %1331, %cst_637, %1330 : f32
    %c57_638 = arith.constant 57 : index
    %1333 = memref.load %arg3[%c57_638] : memref<101xf32, #tpu.memory_space<smem>>
    memref.store %1328, %arg3[%c57_638] : memref<101xf32, #tpu.memory_space<smem>>
    %cst_639 = arith.constant 7.750000e+02 : f32
    %1334 = arith.mulf %1332, %cst_639 : f32
    %1335 = arith.fptosi %1334 : f32 to i32
    %cst_640 = arith.constant 484.615387 : f32
    %1336 = arith.mulf %1328, %cst_640 : f32
    %1337 = arith.fptosi %1336 : f32 to i32
    %c128_i32_641 = arith.constant 128 : i32
    %1338 = arith.muli %1335, %c128_i32_641 : i32
    %1339 = arith.addi %1338, %1337 : i32
    %c2216_i32_642 = arith.constant 2216 : i32
    %1340 = arith.addi %1339, %c2216_i32_642 : i32
    %1341 = arith.index_cast %1340 : i32 to index
    %1342 = memref.load %arg2[%1341] : memref<7424xf32, #tpu.memory_space<smem>>
    %c58 = arith.constant 58 : index
    %1343 = memref.load %arg4[%c58] : memref<101xf32, #tpu.memory_space<smem>>
    memref.store %1342, %arg4[%c58] : memref<101xf32, #tpu.memory_space<smem>>
    %1344 = arith.index_cast %1340 : i32 to index
    %1345 = memref.load %arg0[%1344] : memref<7424xf32, #tpu.memory_space<smem>>
    %1346 = arith.addf %1328, %1345 : f32
    %1347 = arith.index_cast %1340 : i32 to index
    %1348 = memref.load %arg1[%1347] : memref<7424xf32, #tpu.memory_space<smem>>
    %1349 = arith.addf %1332, %1348 : f32
    %cst_643 = arith.constant -8.000000e-02 : f32
    %1350 = arith.maximumf %1346, %cst_643 : f32
    %cst_644 = arith.constant 5.000000e-02 : f32
    %1351 = arith.minimumf %1350, %cst_644 : f32
    %cst_645 = arith.constant 2.000000e-02 : f32
    %1352 = arith.cmpf ogt, %1349, %cst_645 : f32
    %cst_646 = arith.constant 5.000000e-02 : f32
    %1353 = arith.select %1352, %cst_646, %1349 : f32
    %cst_647 = arith.constant -2.000000e-02 : f32
    %1354 = arith.cmpf olt, %1349, %cst_647 : f32
    %cst_648 = arith.constant -2.000000e-02 : f32
    %1355 = arith.select %1354, %cst_648, %1353 : f32
    %c58_649 = arith.constant 58 : index
    %1356 = memref.load %arg3[%c58_649] : memref<101xf32, #tpu.memory_space<smem>>
    memref.store %1351, %arg3[%c58_649] : memref<101xf32, #tpu.memory_space<smem>>
    %cst_650 = arith.constant 7.750000e+02 : f32
    %1357 = arith.mulf %1355, %cst_650 : f32
    %1358 = arith.fptosi %1357 : f32 to i32
    %cst_651 = arith.constant 484.615387 : f32
    %1359 = arith.mulf %1351, %cst_651 : f32
    %1360 = arith.fptosi %1359 : f32 to i32
    %c128_i32_652 = arith.constant 128 : i32
    %1361 = arith.muli %1358, %c128_i32_652 : i32
    %1362 = arith.addi %1361, %1360 : i32
    %c2216_i32_653 = arith.constant 2216 : i32
    %1363 = arith.addi %1362, %c2216_i32_653 : i32
    %1364 = arith.index_cast %1363 : i32 to index
    %1365 = memref.load %arg2[%1364] : memref<7424xf32, #tpu.memory_space<smem>>
    %c59 = arith.constant 59 : index
    %1366 = memref.load %arg4[%c59] : memref<101xf32, #tpu.memory_space<smem>>
    memref.store %1365, %arg4[%c59] : memref<101xf32, #tpu.memory_space<smem>>
    %1367 = arith.index_cast %1363 : i32 to index
    %1368 = memref.load %arg0[%1367] : memref<7424xf32, #tpu.memory_space<smem>>
    %1369 = arith.addf %1351, %1368 : f32
    %1370 = arith.index_cast %1363 : i32 to index
    %1371 = memref.load %arg1[%1370] : memref<7424xf32, #tpu.memory_space<smem>>
    %1372 = arith.addf %1355, %1371 : f32
    %cst_654 = arith.constant -8.000000e-02 : f32
    %1373 = arith.maximumf %1369, %cst_654 : f32
    %cst_655 = arith.constant 5.000000e-02 : f32
    %1374 = arith.minimumf %1373, %cst_655 : f32
    %cst_656 = arith.constant 2.000000e-02 : f32
    %1375 = arith.cmpf ogt, %1372, %cst_656 : f32
    %cst_657 = arith.constant 5.000000e-02 : f32
    %1376 = arith.select %1375, %cst_657, %1372 : f32
    %cst_658 = arith.constant -2.000000e-02 : f32
    %1377 = arith.cmpf olt, %1372, %cst_658 : f32
    %cst_659 = arith.constant -2.000000e-02 : f32
    %1378 = arith.select %1377, %cst_659, %1376 : f32
    %c59_660 = arith.constant 59 : index
    %1379 = memref.load %arg3[%c59_660] : memref<101xf32, #tpu.memory_space<smem>>
    memref.store %1374, %arg3[%c59_660] : memref<101xf32, #tpu.memory_space<smem>>
    %cst_661 = arith.constant 7.750000e+02 : f32
    %1380 = arith.mulf %1378, %cst_661 : f32
    %1381 = arith.fptosi %1380 : f32 to i32
    %cst_662 = arith.constant 484.615387 : f32
    %1382 = arith.mulf %1374, %cst_662 : f32
    %1383 = arith.fptosi %1382 : f32 to i32
    %c128_i32_663 = arith.constant 128 : i32
    %1384 = arith.muli %1381, %c128_i32_663 : i32
    %1385 = arith.addi %1384, %1383 : i32
    %c2216_i32_664 = arith.constant 2216 : i32
    %1386 = arith.addi %1385, %c2216_i32_664 : i32
    %1387 = arith.index_cast %1386 : i32 to index
    %1388 = memref.load %arg2[%1387] : memref<7424xf32, #tpu.memory_space<smem>>
    %c60 = arith.constant 60 : index
    %1389 = memref.load %arg4[%c60] : memref<101xf32, #tpu.memory_space<smem>>
    memref.store %1388, %arg4[%c60] : memref<101xf32, #tpu.memory_space<smem>>
    %1390 = arith.index_cast %1386 : i32 to index
    %1391 = memref.load %arg0[%1390] : memref<7424xf32, #tpu.memory_space<smem>>
    %1392 = arith.addf %1374, %1391 : f32
    %1393 = arith.index_cast %1386 : i32 to index
    %1394 = memref.load %arg1[%1393] : memref<7424xf32, #tpu.memory_space<smem>>
    %1395 = arith.addf %1378, %1394 : f32
    %cst_665 = arith.constant -8.000000e-02 : f32
    %1396 = arith.maximumf %1392, %cst_665 : f32
    %cst_666 = arith.constant 5.000000e-02 : f32
    %1397 = arith.minimumf %1396, %cst_666 : f32
    %cst_667 = arith.constant 2.000000e-02 : f32
    %1398 = arith.cmpf ogt, %1395, %cst_667 : f32
    %cst_668 = arith.constant 5.000000e-02 : f32
    %1399 = arith.select %1398, %cst_668, %1395 : f32
    %cst_669 = arith.constant -2.000000e-02 : f32
    %1400 = arith.cmpf olt, %1395, %cst_669 : f32
    %cst_670 = arith.constant -2.000000e-02 : f32
    %1401 = arith.select %1400, %cst_670, %1399 : f32
    %c60_671 = arith.constant 60 : index
    %1402 = memref.load %arg3[%c60_671] : memref<101xf32, #tpu.memory_space<smem>>
    memref.store %1397, %arg3[%c60_671] : memref<101xf32, #tpu.memory_space<smem>>
    %cst_672 = arith.constant 7.750000e+02 : f32
    %1403 = arith.mulf %1401, %cst_672 : f32
    %1404 = arith.fptosi %1403 : f32 to i32
    %cst_673 = arith.constant 484.615387 : f32
    %1405 = arith.mulf %1397, %cst_673 : f32
    %1406 = arith.fptosi %1405 : f32 to i32
    %c128_i32_674 = arith.constant 128 : i32
    %1407 = arith.muli %1404, %c128_i32_674 : i32
    %1408 = arith.addi %1407, %1406 : i32
    %c2216_i32_675 = arith.constant 2216 : i32
    %1409 = arith.addi %1408, %c2216_i32_675 : i32
    %1410 = arith.index_cast %1409 : i32 to index
    %1411 = memref.load %arg2[%1410] : memref<7424xf32, #tpu.memory_space<smem>>
    %c61 = arith.constant 61 : index
    %1412 = memref.load %arg4[%c61] : memref<101xf32, #tpu.memory_space<smem>>
    memref.store %1411, %arg4[%c61] : memref<101xf32, #tpu.memory_space<smem>>
    %1413 = arith.index_cast %1409 : i32 to index
    %1414 = memref.load %arg0[%1413] : memref<7424xf32, #tpu.memory_space<smem>>
    %1415 = arith.addf %1397, %1414 : f32
    %1416 = arith.index_cast %1409 : i32 to index
    %1417 = memref.load %arg1[%1416] : memref<7424xf32, #tpu.memory_space<smem>>
    %1418 = arith.addf %1401, %1417 : f32
    %cst_676 = arith.constant -8.000000e-02 : f32
    %1419 = arith.maximumf %1415, %cst_676 : f32
    %cst_677 = arith.constant 5.000000e-02 : f32
    %1420 = arith.minimumf %1419, %cst_677 : f32
    %cst_678 = arith.constant 2.000000e-02 : f32
    %1421 = arith.cmpf ogt, %1418, %cst_678 : f32
    %cst_679 = arith.constant 5.000000e-02 : f32
    %1422 = arith.select %1421, %cst_679, %1418 : f32
    %cst_680 = arith.constant -2.000000e-02 : f32
    %1423 = arith.cmpf olt, %1418, %cst_680 : f32
    %cst_681 = arith.constant -2.000000e-02 : f32
    %1424 = arith.select %1423, %cst_681, %1422 : f32
    %c61_682 = arith.constant 61 : index
    %1425 = memref.load %arg3[%c61_682] : memref<101xf32, #tpu.memory_space<smem>>
    memref.store %1420, %arg3[%c61_682] : memref<101xf32, #tpu.memory_space<smem>>
    %cst_683 = arith.constant 7.750000e+02 : f32
    %1426 = arith.mulf %1424, %cst_683 : f32
    %1427 = arith.fptosi %1426 : f32 to i32
    %cst_684 = arith.constant 484.615387 : f32
    %1428 = arith.mulf %1420, %cst_684 : f32
    %1429 = arith.fptosi %1428 : f32 to i32
    %c128_i32_685 = arith.constant 128 : i32
    %1430 = arith.muli %1427, %c128_i32_685 : i32
    %1431 = arith.addi %1430, %1429 : i32
    %c2216_i32_686 = arith.constant 2216 : i32
    %1432 = arith.addi %1431, %c2216_i32_686 : i32
    %1433 = arith.index_cast %1432 : i32 to index
    %1434 = memref.load %arg2[%1433] : memref<7424xf32, #tpu.memory_space<smem>>
    %c62 = arith.constant 62 : index
    %1435 = memref.load %arg4[%c62] : memref<101xf32, #tpu.memory_space<smem>>
    memref.store %1434, %arg4[%c62] : memref<101xf32, #tpu.memory_space<smem>>
    %1436 = arith.index_cast %1432 : i32 to index
    %1437 = memref.load %arg0[%1436] : memref<7424xf32, #tpu.memory_space<smem>>
    %1438 = arith.addf %1420, %1437 : f32
    %1439 = arith.index_cast %1432 : i32 to index
    %1440 = memref.load %arg1[%1439] : memref<7424xf32, #tpu.memory_space<smem>>
    %1441 = arith.addf %1424, %1440 : f32
    %cst_687 = arith.constant -8.000000e-02 : f32
    %1442 = arith.maximumf %1438, %cst_687 : f32
    %cst_688 = arith.constant 5.000000e-02 : f32
    %1443 = arith.minimumf %1442, %cst_688 : f32
    %cst_689 = arith.constant 2.000000e-02 : f32
    %1444 = arith.cmpf ogt, %1441, %cst_689 : f32
    %cst_690 = arith.constant 5.000000e-02 : f32
    %1445 = arith.select %1444, %cst_690, %1441 : f32
    %cst_691 = arith.constant -2.000000e-02 : f32
    %1446 = arith.cmpf olt, %1441, %cst_691 : f32
    %cst_692 = arith.constant -2.000000e-02 : f32
    %1447 = arith.select %1446, %cst_692, %1445 : f32
    %c62_693 = arith.constant 62 : index
    %1448 = memref.load %arg3[%c62_693] : memref<101xf32, #tpu.memory_space<smem>>
    memref.store %1443, %arg3[%c62_693] : memref<101xf32, #tpu.memory_space<smem>>
    %cst_694 = arith.constant 7.750000e+02 : f32
    %1449 = arith.mulf %1447, %cst_694 : f32
    %1450 = arith.fptosi %1449 : f32 to i32
    %cst_695 = arith.constant 484.615387 : f32
    %1451 = arith.mulf %1443, %cst_695 : f32
    %1452 = arith.fptosi %1451 : f32 to i32
    %c128_i32_696 = arith.constant 128 : i32
    %1453 = arith.muli %1450, %c128_i32_696 : i32
    %1454 = arith.addi %1453, %1452 : i32
    %c2216_i32_697 = arith.constant 2216 : i32
    %1455 = arith.addi %1454, %c2216_i32_697 : i32
    %1456 = arith.index_cast %1455 : i32 to index
    %1457 = memref.load %arg2[%1456] : memref<7424xf32, #tpu.memory_space<smem>>
    %c63 = arith.constant 63 : index
    %1458 = memref.load %arg4[%c63] : memref<101xf32, #tpu.memory_space<smem>>
    memref.store %1457, %arg4[%c63] : memref<101xf32, #tpu.memory_space<smem>>
    %1459 = arith.index_cast %1455 : i32 to index
    %1460 = memref.load %arg0[%1459] : memref<7424xf32, #tpu.memory_space<smem>>
    %1461 = arith.addf %1443, %1460 : f32
    %1462 = arith.index_cast %1455 : i32 to index
    %1463 = memref.load %arg1[%1462] : memref<7424xf32, #tpu.memory_space<smem>>
    %1464 = arith.addf %1447, %1463 : f32
    %cst_698 = arith.constant -8.000000e-02 : f32
    %1465 = arith.maximumf %1461, %cst_698 : f32
    %cst_699 = arith.constant 5.000000e-02 : f32
    %1466 = arith.minimumf %1465, %cst_699 : f32
    %cst_700 = arith.constant 2.000000e-02 : f32
    %1467 = arith.cmpf ogt, %1464, %cst_700 : f32
    %cst_701 = arith.constant 5.000000e-02 : f32
    %1468 = arith.select %1467, %cst_701, %1464 : f32
    %cst_702 = arith.constant -2.000000e-02 : f32
    %1469 = arith.cmpf olt, %1464, %cst_702 : f32
    %cst_703 = arith.constant -2.000000e-02 : f32
    %1470 = arith.select %1469, %cst_703, %1468 : f32
    %c63_704 = arith.constant 63 : index
    %1471 = memref.load %arg3[%c63_704] : memref<101xf32, #tpu.memory_space<smem>>
    memref.store %1466, %arg3[%c63_704] : memref<101xf32, #tpu.memory_space<smem>>
    %cst_705 = arith.constant 7.750000e+02 : f32
    %1472 = arith.mulf %1470, %cst_705 : f32
    %1473 = arith.fptosi %1472 : f32 to i32
    %cst_706 = arith.constant 484.615387 : f32
    %1474 = arith.mulf %1466, %cst_706 : f32
    %1475 = arith.fptosi %1474 : f32 to i32
    %c128_i32_707 = arith.constant 128 : i32
    %1476 = arith.muli %1473, %c128_i32_707 : i32
    %1477 = arith.addi %1476, %1475 : i32
    %c2216_i32_708 = arith.constant 2216 : i32
    %1478 = arith.addi %1477, %c2216_i32_708 : i32
    %1479 = arith.index_cast %1478 : i32 to index
    %1480 = memref.load %arg2[%1479] : memref<7424xf32, #tpu.memory_space<smem>>
    %c64 = arith.constant 64 : index
    %1481 = memref.load %arg4[%c64] : memref<101xf32, #tpu.memory_space<smem>>
    memref.store %1480, %arg4[%c64] : memref<101xf32, #tpu.memory_space<smem>>
    %1482 = arith.index_cast %1478 : i32 to index
    %1483 = memref.load %arg0[%1482] : memref<7424xf32, #tpu.memory_space<smem>>
    %1484 = arith.addf %1466, %1483 : f32
    %1485 = arith.index_cast %1478 : i32 to index
    %1486 = memref.load %arg1[%1485] : memref<7424xf32, #tpu.memory_space<smem>>
    %1487 = arith.addf %1470, %1486 : f32
    %cst_709 = arith.constant -8.000000e-02 : f32
    %1488 = arith.maximumf %1484, %cst_709 : f32
    %cst_710 = arith.constant 5.000000e-02 : f32
    %1489 = arith.minimumf %1488, %cst_710 : f32
    %cst_711 = arith.constant 2.000000e-02 : f32
    %1490 = arith.cmpf ogt, %1487, %cst_711 : f32
    %cst_712 = arith.constant 5.000000e-02 : f32
    %1491 = arith.select %1490, %cst_712, %1487 : f32
    %cst_713 = arith.constant -2.000000e-02 : f32
    %1492 = arith.cmpf olt, %1487, %cst_713 : f32
    %cst_714 = arith.constant -2.000000e-02 : f32
    %1493 = arith.select %1492, %cst_714, %1491 : f32
    %c64_715 = arith.constant 64 : index
    %1494 = memref.load %arg3[%c64_715] : memref<101xf32, #tpu.memory_space<smem>>
    memref.store %1489, %arg3[%c64_715] : memref<101xf32, #tpu.memory_space<smem>>
    %cst_716 = arith.constant 7.750000e+02 : f32
    %1495 = arith.mulf %1493, %cst_716 : f32
    %1496 = arith.fptosi %1495 : f32 to i32
    %cst_717 = arith.constant 484.615387 : f32
    %1497 = arith.mulf %1489, %cst_717 : f32
    %1498 = arith.fptosi %1497 : f32 to i32
    %c128_i32_718 = arith.constant 128 : i32
    %1499 = arith.muli %1496, %c128_i32_718 : i32
    %1500 = arith.addi %1499, %1498 : i32
    %c2216_i32_719 = arith.constant 2216 : i32
    %1501 = arith.addi %1500, %c2216_i32_719 : i32
    %1502 = arith.index_cast %1501 : i32 to index
    %1503 = memref.load %arg2[%1502] : memref<7424xf32, #tpu.memory_space<smem>>
    %c65 = arith.constant 65 : index
    %1504 = memref.load %arg4[%c65] : memref<101xf32, #tpu.memory_space<smem>>
    memref.store %1503, %arg4[%c65] : memref<101xf32, #tpu.memory_space<smem>>
    %1505 = arith.index_cast %1501 : i32 to index
    %1506 = memref.load %arg0[%1505] : memref<7424xf32, #tpu.memory_space<smem>>
    %1507 = arith.addf %1489, %1506 : f32
    %1508 = arith.index_cast %1501 : i32 to index
    %1509 = memref.load %arg1[%1508] : memref<7424xf32, #tpu.memory_space<smem>>
    %1510 = arith.addf %1493, %1509 : f32
    %cst_720 = arith.constant -8.000000e-02 : f32
    %1511 = arith.maximumf %1507, %cst_720 : f32
    %cst_721 = arith.constant 5.000000e-02 : f32
    %1512 = arith.minimumf %1511, %cst_721 : f32
    %cst_722 = arith.constant 2.000000e-02 : f32
    %1513 = arith.cmpf ogt, %1510, %cst_722 : f32
    %cst_723 = arith.constant 5.000000e-02 : f32
    %1514 = arith.select %1513, %cst_723, %1510 : f32
    %cst_724 = arith.constant -2.000000e-02 : f32
    %1515 = arith.cmpf olt, %1510, %cst_724 : f32
    %cst_725 = arith.constant -2.000000e-02 : f32
    %1516 = arith.select %1515, %cst_725, %1514 : f32
    %c65_726 = arith.constant 65 : index
    %1517 = memref.load %arg3[%c65_726] : memref<101xf32, #tpu.memory_space<smem>>
    memref.store %1512, %arg3[%c65_726] : memref<101xf32, #tpu.memory_space<smem>>
    %cst_727 = arith.constant 7.750000e+02 : f32
    %1518 = arith.mulf %1516, %cst_727 : f32
    %1519 = arith.fptosi %1518 : f32 to i32
    %cst_728 = arith.constant 484.615387 : f32
    %1520 = arith.mulf %1512, %cst_728 : f32
    %1521 = arith.fptosi %1520 : f32 to i32
    %c128_i32_729 = arith.constant 128 : i32
    %1522 = arith.muli %1519, %c128_i32_729 : i32
    %1523 = arith.addi %1522, %1521 : i32
    %c2216_i32_730 = arith.constant 2216 : i32
    %1524 = arith.addi %1523, %c2216_i32_730 : i32
    %1525 = arith.index_cast %1524 : i32 to index
    %1526 = memref.load %arg2[%1525] : memref<7424xf32, #tpu.memory_space<smem>>
    %c66 = arith.constant 66 : index
    %1527 = memref.load %arg4[%c66] : memref<101xf32, #tpu.memory_space<smem>>
    memref.store %1526, %arg4[%c66] : memref<101xf32, #tpu.memory_space<smem>>
    %1528 = arith.index_cast %1524 : i32 to index
    %1529 = memref.load %arg0[%1528] : memref<7424xf32, #tpu.memory_space<smem>>
    %1530 = arith.addf %1512, %1529 : f32
    %1531 = arith.index_cast %1524 : i32 to index
    %1532 = memref.load %arg1[%1531] : memref<7424xf32, #tpu.memory_space<smem>>
    %1533 = arith.addf %1516, %1532 : f32
    %cst_731 = arith.constant -8.000000e-02 : f32
    %1534 = arith.maximumf %1530, %cst_731 : f32
    %cst_732 = arith.constant 5.000000e-02 : f32
    %1535 = arith.minimumf %1534, %cst_732 : f32
    %cst_733 = arith.constant 2.000000e-02 : f32
    %1536 = arith.cmpf ogt, %1533, %cst_733 : f32
    %cst_734 = arith.constant 5.000000e-02 : f32
    %1537 = arith.select %1536, %cst_734, %1533 : f32
    %cst_735 = arith.constant -2.000000e-02 : f32
    %1538 = arith.cmpf olt, %1533, %cst_735 : f32
    %cst_736 = arith.constant -2.000000e-02 : f32
    %1539 = arith.select %1538, %cst_736, %1537 : f32
    %c66_737 = arith.constant 66 : index
    %1540 = memref.load %arg3[%c66_737] : memref<101xf32, #tpu.memory_space<smem>>
    memref.store %1535, %arg3[%c66_737] : memref<101xf32, #tpu.memory_space<smem>>
    %cst_738 = arith.constant 7.750000e+02 : f32
    %1541 = arith.mulf %1539, %cst_738 : f32
    %1542 = arith.fptosi %1541 : f32 to i32
    %cst_739 = arith.constant 484.615387 : f32
    %1543 = arith.mulf %1535, %cst_739 : f32
    %1544 = arith.fptosi %1543 : f32 to i32
    %c128_i32_740 = arith.constant 128 : i32
    %1545 = arith.muli %1542, %c128_i32_740 : i32
    %1546 = arith.addi %1545, %1544 : i32
    %c2216_i32_741 = arith.constant 2216 : i32
    %1547 = arith.addi %1546, %c2216_i32_741 : i32
    %1548 = arith.index_cast %1547 : i32 to index
    %1549 = memref.load %arg2[%1548] : memref<7424xf32, #tpu.memory_space<smem>>
    %c67 = arith.constant 67 : index
    %1550 = memref.load %arg4[%c67] : memref<101xf32, #tpu.memory_space<smem>>
    memref.store %1549, %arg4[%c67] : memref<101xf32, #tpu.memory_space<smem>>
    %1551 = arith.index_cast %1547 : i32 to index
    %1552 = memref.load %arg0[%1551] : memref<7424xf32, #tpu.memory_space<smem>>
    %1553 = arith.addf %1535, %1552 : f32
    %1554 = arith.index_cast %1547 : i32 to index
    %1555 = memref.load %arg1[%1554] : memref<7424xf32, #tpu.memory_space<smem>>
    %1556 = arith.addf %1539, %1555 : f32
    %cst_742 = arith.constant -8.000000e-02 : f32
    %1557 = arith.maximumf %1553, %cst_742 : f32
    %cst_743 = arith.constant 5.000000e-02 : f32
    %1558 = arith.minimumf %1557, %cst_743 : f32
    %cst_744 = arith.constant 2.000000e-02 : f32
    %1559 = arith.cmpf ogt, %1556, %cst_744 : f32
    %cst_745 = arith.constant 5.000000e-02 : f32
    %1560 = arith.select %1559, %cst_745, %1556 : f32
    %cst_746 = arith.constant -2.000000e-02 : f32
    %1561 = arith.cmpf olt, %1556, %cst_746 : f32
    %cst_747 = arith.constant -2.000000e-02 : f32
    %1562 = arith.select %1561, %cst_747, %1560 : f32
    %c67_748 = arith.constant 67 : index
    %1563 = memref.load %arg3[%c67_748] : memref<101xf32, #tpu.memory_space<smem>>
    memref.store %1558, %arg3[%c67_748] : memref<101xf32, #tpu.memory_space<smem>>
    %cst_749 = arith.constant 7.750000e+02 : f32
    %1564 = arith.mulf %1562, %cst_749 : f32
    %1565 = arith.fptosi %1564 : f32 to i32
    %cst_750 = arith.constant 484.615387 : f32
    %1566 = arith.mulf %1558, %cst_750 : f32
    %1567 = arith.fptosi %1566 : f32 to i32
    %c128_i32_751 = arith.constant 128 : i32
    %1568 = arith.muli %1565, %c128_i32_751 : i32
    %1569 = arith.addi %1568, %1567 : i32
    %c2216_i32_752 = arith.constant 2216 : i32
    %1570 = arith.addi %1569, %c2216_i32_752 : i32
    %1571 = arith.index_cast %1570 : i32 to index
    %1572 = memref.load %arg2[%1571] : memref<7424xf32, #tpu.memory_space<smem>>
    %c68 = arith.constant 68 : index
    %1573 = memref.load %arg4[%c68] : memref<101xf32, #tpu.memory_space<smem>>
    memref.store %1572, %arg4[%c68] : memref<101xf32, #tpu.memory_space<smem>>
    %1574 = arith.index_cast %1570 : i32 to index
    %1575 = memref.load %arg0[%1574] : memref<7424xf32, #tpu.memory_space<smem>>
    %1576 = arith.addf %1558, %1575 : f32
    %1577 = arith.index_cast %1570 : i32 to index
    %1578 = memref.load %arg1[%1577] : memref<7424xf32, #tpu.memory_space<smem>>
    %1579 = arith.addf %1562, %1578 : f32
    %cst_753 = arith.constant -8.000000e-02 : f32
    %1580 = arith.maximumf %1576, %cst_753 : f32
    %cst_754 = arith.constant 5.000000e-02 : f32
    %1581 = arith.minimumf %1580, %cst_754 : f32
    %cst_755 = arith.constant 2.000000e-02 : f32
    %1582 = arith.cmpf ogt, %1579, %cst_755 : f32
    %cst_756 = arith.constant 5.000000e-02 : f32
    %1583 = arith.select %1582, %cst_756, %1579 : f32
    %cst_757 = arith.constant -2.000000e-02 : f32
    %1584 = arith.cmpf olt, %1579, %cst_757 : f32
    %cst_758 = arith.constant -2.000000e-02 : f32
    %1585 = arith.select %1584, %cst_758, %1583 : f32
    %c68_759 = arith.constant 68 : index
    %1586 = memref.load %arg3[%c68_759] : memref<101xf32, #tpu.memory_space<smem>>
    memref.store %1581, %arg3[%c68_759] : memref<101xf32, #tpu.memory_space<smem>>
    %cst_760 = arith.constant 7.750000e+02 : f32
    %1587 = arith.mulf %1585, %cst_760 : f32
    %1588 = arith.fptosi %1587 : f32 to i32
    %cst_761 = arith.constant 484.615387 : f32
    %1589 = arith.mulf %1581, %cst_761 : f32
    %1590 = arith.fptosi %1589 : f32 to i32
    %c128_i32_762 = arith.constant 128 : i32
    %1591 = arith.muli %1588, %c128_i32_762 : i32
    %1592 = arith.addi %1591, %1590 : i32
    %c2216_i32_763 = arith.constant 2216 : i32
    %1593 = arith.addi %1592, %c2216_i32_763 : i32
    %1594 = arith.index_cast %1593 : i32 to index
    %1595 = memref.load %arg2[%1594] : memref<7424xf32, #tpu.memory_space<smem>>
    %c69 = arith.constant 69 : index
    %1596 = memref.load %arg4[%c69] : memref<101xf32, #tpu.memory_space<smem>>
    memref.store %1595, %arg4[%c69] : memref<101xf32, #tpu.memory_space<smem>>
    %1597 = arith.index_cast %1593 : i32 to index
    %1598 = memref.load %arg0[%1597] : memref<7424xf32, #tpu.memory_space<smem>>
    %1599 = arith.addf %1581, %1598 : f32
    %1600 = arith.index_cast %1593 : i32 to index
    %1601 = memref.load %arg1[%1600] : memref<7424xf32, #tpu.memory_space<smem>>
    %1602 = arith.addf %1585, %1601 : f32
    %cst_764 = arith.constant -8.000000e-02 : f32
    %1603 = arith.maximumf %1599, %cst_764 : f32
    %cst_765 = arith.constant 5.000000e-02 : f32
    %1604 = arith.minimumf %1603, %cst_765 : f32
    %cst_766 = arith.constant 2.000000e-02 : f32
    %1605 = arith.cmpf ogt, %1602, %cst_766 : f32
    %cst_767 = arith.constant 5.000000e-02 : f32
    %1606 = arith.select %1605, %cst_767, %1602 : f32
    %cst_768 = arith.constant -2.000000e-02 : f32
    %1607 = arith.cmpf olt, %1602, %cst_768 : f32
    %cst_769 = arith.constant -2.000000e-02 : f32
    %1608 = arith.select %1607, %cst_769, %1606 : f32
    %c69_770 = arith.constant 69 : index
    %1609 = memref.load %arg3[%c69_770] : memref<101xf32, #tpu.memory_space<smem>>
    memref.store %1604, %arg3[%c69_770] : memref<101xf32, #tpu.memory_space<smem>>
    %cst_771 = arith.constant 7.750000e+02 : f32
    %1610 = arith.mulf %1608, %cst_771 : f32
    %1611 = arith.fptosi %1610 : f32 to i32
    %cst_772 = arith.constant 484.615387 : f32
    %1612 = arith.mulf %1604, %cst_772 : f32
    %1613 = arith.fptosi %1612 : f32 to i32
    %c128_i32_773 = arith.constant 128 : i32
    %1614 = arith.muli %1611, %c128_i32_773 : i32
    %1615 = arith.addi %1614, %1613 : i32
    %c2216_i32_774 = arith.constant 2216 : i32
    %1616 = arith.addi %1615, %c2216_i32_774 : i32
    %1617 = arith.index_cast %1616 : i32 to index
    %1618 = memref.load %arg2[%1617] : memref<7424xf32, #tpu.memory_space<smem>>
    %c70 = arith.constant 70 : index
    %1619 = memref.load %arg4[%c70] : memref<101xf32, #tpu.memory_space<smem>>
    memref.store %1618, %arg4[%c70] : memref<101xf32, #tpu.memory_space<smem>>
    %1620 = arith.index_cast %1616 : i32 to index
    %1621 = memref.load %arg0[%1620] : memref<7424xf32, #tpu.memory_space<smem>>
    %1622 = arith.addf %1604, %1621 : f32
    %1623 = arith.index_cast %1616 : i32 to index
    %1624 = memref.load %arg1[%1623] : memref<7424xf32, #tpu.memory_space<smem>>
    %1625 = arith.addf %1608, %1624 : f32
    %cst_775 = arith.constant -8.000000e-02 : f32
    %1626 = arith.maximumf %1622, %cst_775 : f32
    %cst_776 = arith.constant 5.000000e-02 : f32
    %1627 = arith.minimumf %1626, %cst_776 : f32
    %cst_777 = arith.constant 2.000000e-02 : f32
    %1628 = arith.cmpf ogt, %1625, %cst_777 : f32
    %cst_778 = arith.constant 5.000000e-02 : f32
    %1629 = arith.select %1628, %cst_778, %1625 : f32
    %cst_779 = arith.constant -2.000000e-02 : f32
    %1630 = arith.cmpf olt, %1625, %cst_779 : f32
    %cst_780 = arith.constant -2.000000e-02 : f32
    %1631 = arith.select %1630, %cst_780, %1629 : f32
    %c70_781 = arith.constant 70 : index
    %1632 = memref.load %arg3[%c70_781] : memref<101xf32, #tpu.memory_space<smem>>
    memref.store %1627, %arg3[%c70_781] : memref<101xf32, #tpu.memory_space<smem>>
    %cst_782 = arith.constant 7.750000e+02 : f32
    %1633 = arith.mulf %1631, %cst_782 : f32
    %1634 = arith.fptosi %1633 : f32 to i32
    %cst_783 = arith.constant 484.615387 : f32
    %1635 = arith.mulf %1627, %cst_783 : f32
    %1636 = arith.fptosi %1635 : f32 to i32
    %c128_i32_784 = arith.constant 128 : i32
    %1637 = arith.muli %1634, %c128_i32_784 : i32
    %1638 = arith.addi %1637, %1636 : i32
    %c2216_i32_785 = arith.constant 2216 : i32
    %1639 = arith.addi %1638, %c2216_i32_785 : i32
    %1640 = arith.index_cast %1639 : i32 to index
    %1641 = memref.load %arg2[%1640] : memref<7424xf32, #tpu.memory_space<smem>>
    %c71 = arith.constant 71 : index
    %1642 = memref.load %arg4[%c71] : memref<101xf32, #tpu.memory_space<smem>>
    memref.store %1641, %arg4[%c71] : memref<101xf32, #tpu.memory_space<smem>>
    %1643 = arith.index_cast %1639 : i32 to index
    %1644 = memref.load %arg0[%1643] : memref<7424xf32, #tpu.memory_space<smem>>
    %1645 = arith.addf %1627, %1644 : f32
    %1646 = arith.index_cast %1639 : i32 to index
    %1647 = memref.load %arg1[%1646] : memref<7424xf32, #tpu.memory_space<smem>>
    %1648 = arith.addf %1631, %1647 : f32
    %cst_786 = arith.constant -8.000000e-02 : f32
    %1649 = arith.maximumf %1645, %cst_786 : f32
    %cst_787 = arith.constant 5.000000e-02 : f32
    %1650 = arith.minimumf %1649, %cst_787 : f32
    %cst_788 = arith.constant 2.000000e-02 : f32
    %1651 = arith.cmpf ogt, %1648, %cst_788 : f32
    %cst_789 = arith.constant 5.000000e-02 : f32
    %1652 = arith.select %1651, %cst_789, %1648 : f32
    %cst_790 = arith.constant -2.000000e-02 : f32
    %1653 = arith.cmpf olt, %1648, %cst_790 : f32
    %cst_791 = arith.constant -2.000000e-02 : f32
    %1654 = arith.select %1653, %cst_791, %1652 : f32
    %c71_792 = arith.constant 71 : index
    %1655 = memref.load %arg3[%c71_792] : memref<101xf32, #tpu.memory_space<smem>>
    memref.store %1650, %arg3[%c71_792] : memref<101xf32, #tpu.memory_space<smem>>
    %cst_793 = arith.constant 7.750000e+02 : f32
    %1656 = arith.mulf %1654, %cst_793 : f32
    %1657 = arith.fptosi %1656 : f32 to i32
    %cst_794 = arith.constant 484.615387 : f32
    %1658 = arith.mulf %1650, %cst_794 : f32
    %1659 = arith.fptosi %1658 : f32 to i32
    %c128_i32_795 = arith.constant 128 : i32
    %1660 = arith.muli %1657, %c128_i32_795 : i32
    %1661 = arith.addi %1660, %1659 : i32
    %c2216_i32_796 = arith.constant 2216 : i32
    %1662 = arith.addi %1661, %c2216_i32_796 : i32
    %1663 = arith.index_cast %1662 : i32 to index
    %1664 = memref.load %arg2[%1663] : memref<7424xf32, #tpu.memory_space<smem>>
    %c72 = arith.constant 72 : index
    %1665 = memref.load %arg4[%c72] : memref<101xf32, #tpu.memory_space<smem>>
    memref.store %1664, %arg4[%c72] : memref<101xf32, #tpu.memory_space<smem>>
    %1666 = arith.index_cast %1662 : i32 to index
    %1667 = memref.load %arg0[%1666] : memref<7424xf32, #tpu.memory_space<smem>>
    %1668 = arith.addf %1650, %1667 : f32
    %1669 = arith.index_cast %1662 : i32 to index
    %1670 = memref.load %arg1[%1669] : memref<7424xf32, #tpu.memory_space<smem>>
    %1671 = arith.addf %1654, %1670 : f32
    %cst_797 = arith.constant -8.000000e-02 : f32
    %1672 = arith.maximumf %1668, %cst_797 : f32
    %cst_798 = arith.constant 5.000000e-02 : f32
    %1673 = arith.minimumf %1672, %cst_798 : f32
    %cst_799 = arith.constant 2.000000e-02 : f32
    %1674 = arith.cmpf ogt, %1671, %cst_799 : f32
    %cst_800 = arith.constant 5.000000e-02 : f32
    %1675 = arith.select %1674, %cst_800, %1671 : f32
    %cst_801 = arith.constant -2.000000e-02 : f32
    %1676 = arith.cmpf olt, %1671, %cst_801 : f32
    %cst_802 = arith.constant -2.000000e-02 : f32
    %1677 = arith.select %1676, %cst_802, %1675 : f32
    %c72_803 = arith.constant 72 : index
    %1678 = memref.load %arg3[%c72_803] : memref<101xf32, #tpu.memory_space<smem>>
    memref.store %1673, %arg3[%c72_803] : memref<101xf32, #tpu.memory_space<smem>>
    %cst_804 = arith.constant 7.750000e+02 : f32
    %1679 = arith.mulf %1677, %cst_804 : f32
    %1680 = arith.fptosi %1679 : f32 to i32
    %cst_805 = arith.constant 484.615387 : f32
    %1681 = arith.mulf %1673, %cst_805 : f32
    %1682 = arith.fptosi %1681 : f32 to i32
    %c128_i32_806 = arith.constant 128 : i32
    %1683 = arith.muli %1680, %c128_i32_806 : i32
    %1684 = arith.addi %1683, %1682 : i32
    %c2216_i32_807 = arith.constant 2216 : i32
    %1685 = arith.addi %1684, %c2216_i32_807 : i32
    %1686 = arith.index_cast %1685 : i32 to index
    %1687 = memref.load %arg2[%1686] : memref<7424xf32, #tpu.memory_space<smem>>
    %c73 = arith.constant 73 : index
    %1688 = memref.load %arg4[%c73] : memref<101xf32, #tpu.memory_space<smem>>
    memref.store %1687, %arg4[%c73] : memref<101xf32, #tpu.memory_space<smem>>
    %1689 = arith.index_cast %1685 : i32 to index
    %1690 = memref.load %arg0[%1689] : memref<7424xf32, #tpu.memory_space<smem>>
    %1691 = arith.addf %1673, %1690 : f32
    %1692 = arith.index_cast %1685 : i32 to index
    %1693 = memref.load %arg1[%1692] : memref<7424xf32, #tpu.memory_space<smem>>
    %1694 = arith.addf %1677, %1693 : f32
    %cst_808 = arith.constant -8.000000e-02 : f32
    %1695 = arith.maximumf %1691, %cst_808 : f32
    %cst_809 = arith.constant 5.000000e-02 : f32
    %1696 = arith.minimumf %1695, %cst_809 : f32
    %cst_810 = arith.constant 2.000000e-02 : f32
    %1697 = arith.cmpf ogt, %1694, %cst_810 : f32
    %cst_811 = arith.constant 5.000000e-02 : f32
    %1698 = arith.select %1697, %cst_811, %1694 : f32
    %cst_812 = arith.constant -2.000000e-02 : f32
    %1699 = arith.cmpf olt, %1694, %cst_812 : f32
    %cst_813 = arith.constant -2.000000e-02 : f32
    %1700 = arith.select %1699, %cst_813, %1698 : f32
    %c73_814 = arith.constant 73 : index
    %1701 = memref.load %arg3[%c73_814] : memref<101xf32, #tpu.memory_space<smem>>
    memref.store %1696, %arg3[%c73_814] : memref<101xf32, #tpu.memory_space<smem>>
    %cst_815 = arith.constant 7.750000e+02 : f32
    %1702 = arith.mulf %1700, %cst_815 : f32
    %1703 = arith.fptosi %1702 : f32 to i32
    %cst_816 = arith.constant 484.615387 : f32
    %1704 = arith.mulf %1696, %cst_816 : f32
    %1705 = arith.fptosi %1704 : f32 to i32
    %c128_i32_817 = arith.constant 128 : i32
    %1706 = arith.muli %1703, %c128_i32_817 : i32
    %1707 = arith.addi %1706, %1705 : i32
    %c2216_i32_818 = arith.constant 2216 : i32
    %1708 = arith.addi %1707, %c2216_i32_818 : i32
    %1709 = arith.index_cast %1708 : i32 to index
    %1710 = memref.load %arg2[%1709] : memref<7424xf32, #tpu.memory_space<smem>>
    %c74 = arith.constant 74 : index
    %1711 = memref.load %arg4[%c74] : memref<101xf32, #tpu.memory_space<smem>>
    memref.store %1710, %arg4[%c74] : memref<101xf32, #tpu.memory_space<smem>>
    %1712 = arith.index_cast %1708 : i32 to index
    %1713 = memref.load %arg0[%1712] : memref<7424xf32, #tpu.memory_space<smem>>
    %1714 = arith.addf %1696, %1713 : f32
    %1715 = arith.index_cast %1708 : i32 to index
    %1716 = memref.load %arg1[%1715] : memref<7424xf32, #tpu.memory_space<smem>>
    %1717 = arith.addf %1700, %1716 : f32
    %cst_819 = arith.constant -8.000000e-02 : f32
    %1718 = arith.maximumf %1714, %cst_819 : f32
    %cst_820 = arith.constant 5.000000e-02 : f32
    %1719 = arith.minimumf %1718, %cst_820 : f32
    %cst_821 = arith.constant 2.000000e-02 : f32
    %1720 = arith.cmpf ogt, %1717, %cst_821 : f32
    %cst_822 = arith.constant 5.000000e-02 : f32
    %1721 = arith.select %1720, %cst_822, %1717 : f32
    %cst_823 = arith.constant -2.000000e-02 : f32
    %1722 = arith.cmpf olt, %1717, %cst_823 : f32
    %cst_824 = arith.constant -2.000000e-02 : f32
    %1723 = arith.select %1722, %cst_824, %1721 : f32
    %c74_825 = arith.constant 74 : index
    %1724 = memref.load %arg3[%c74_825] : memref<101xf32, #tpu.memory_space<smem>>
    memref.store %1719, %arg3[%c74_825] : memref<101xf32, #tpu.memory_space<smem>>
    %cst_826 = arith.constant 7.750000e+02 : f32
    %1725 = arith.mulf %1723, %cst_826 : f32
    %1726 = arith.fptosi %1725 : f32 to i32
    %cst_827 = arith.constant 484.615387 : f32
    %1727 = arith.mulf %1719, %cst_827 : f32
    %1728 = arith.fptosi %1727 : f32 to i32
    %c128_i32_828 = arith.constant 128 : i32
    %1729 = arith.muli %1726, %c128_i32_828 : i32
    %1730 = arith.addi %1729, %1728 : i32
    %c2216_i32_829 = arith.constant 2216 : i32
    %1731 = arith.addi %1730, %c2216_i32_829 : i32
    %1732 = arith.index_cast %1731 : i32 to index
    %1733 = memref.load %arg2[%1732] : memref<7424xf32, #tpu.memory_space<smem>>
    %c75 = arith.constant 75 : index
    %1734 = memref.load %arg4[%c75] : memref<101xf32, #tpu.memory_space<smem>>
    memref.store %1733, %arg4[%c75] : memref<101xf32, #tpu.memory_space<smem>>
    %1735 = arith.index_cast %1731 : i32 to index
    %1736 = memref.load %arg0[%1735] : memref<7424xf32, #tpu.memory_space<smem>>
    %1737 = arith.addf %1719, %1736 : f32
    %1738 = arith.index_cast %1731 : i32 to index
    %1739 = memref.load %arg1[%1738] : memref<7424xf32, #tpu.memory_space<smem>>
    %1740 = arith.addf %1723, %1739 : f32
    %cst_830 = arith.constant -8.000000e-02 : f32
    %1741 = arith.maximumf %1737, %cst_830 : f32
    %cst_831 = arith.constant 5.000000e-02 : f32
    %1742 = arith.minimumf %1741, %cst_831 : f32
    %cst_832 = arith.constant 2.000000e-02 : f32
    %1743 = arith.cmpf ogt, %1740, %cst_832 : f32
    %cst_833 = arith.constant 5.000000e-02 : f32
    %1744 = arith.select %1743, %cst_833, %1740 : f32
    %cst_834 = arith.constant -2.000000e-02 : f32
    %1745 = arith.cmpf olt, %1740, %cst_834 : f32
    %cst_835 = arith.constant -2.000000e-02 : f32
    %1746 = arith.select %1745, %cst_835, %1744 : f32
    %c75_836 = arith.constant 75 : index
    %1747 = memref.load %arg3[%c75_836] : memref<101xf32, #tpu.memory_space<smem>>
    memref.store %1742, %arg3[%c75_836] : memref<101xf32, #tpu.memory_space<smem>>
    %cst_837 = arith.constant 7.750000e+02 : f32
    %1748 = arith.mulf %1746, %cst_837 : f32
    %1749 = arith.fptosi %1748 : f32 to i32
    %cst_838 = arith.constant 484.615387 : f32
    %1750 = arith.mulf %1742, %cst_838 : f32
    %1751 = arith.fptosi %1750 : f32 to i32
    %c128_i32_839 = arith.constant 128 : i32
    %1752 = arith.muli %1749, %c128_i32_839 : i32
    %1753 = arith.addi %1752, %1751 : i32
    %c2216_i32_840 = arith.constant 2216 : i32
    %1754 = arith.addi %1753, %c2216_i32_840 : i32
    %1755 = arith.index_cast %1754 : i32 to index
    %1756 = memref.load %arg2[%1755] : memref<7424xf32, #tpu.memory_space<smem>>
    %c76 = arith.constant 76 : index
    %1757 = memref.load %arg4[%c76] : memref<101xf32, #tpu.memory_space<smem>>
    memref.store %1756, %arg4[%c76] : memref<101xf32, #tpu.memory_space<smem>>
    %1758 = arith.index_cast %1754 : i32 to index
    %1759 = memref.load %arg0[%1758] : memref<7424xf32, #tpu.memory_space<smem>>
    %1760 = arith.addf %1742, %1759 : f32
    %1761 = arith.index_cast %1754 : i32 to index
    %1762 = memref.load %arg1[%1761] : memref<7424xf32, #tpu.memory_space<smem>>
    %1763 = arith.addf %1746, %1762 : f32
    %cst_841 = arith.constant -8.000000e-02 : f32
    %1764 = arith.maximumf %1760, %cst_841 : f32
    %cst_842 = arith.constant 5.000000e-02 : f32
    %1765 = arith.minimumf %1764, %cst_842 : f32
    %cst_843 = arith.constant 2.000000e-02 : f32
    %1766 = arith.cmpf ogt, %1763, %cst_843 : f32
    %cst_844 = arith.constant 5.000000e-02 : f32
    %1767 = arith.select %1766, %cst_844, %1763 : f32
    %cst_845 = arith.constant -2.000000e-02 : f32
    %1768 = arith.cmpf olt, %1763, %cst_845 : f32
    %cst_846 = arith.constant -2.000000e-02 : f32
    %1769 = arith.select %1768, %cst_846, %1767 : f32
    %c76_847 = arith.constant 76 : index
    %1770 = memref.load %arg3[%c76_847] : memref<101xf32, #tpu.memory_space<smem>>
    memref.store %1765, %arg3[%c76_847] : memref<101xf32, #tpu.memory_space<smem>>
    %cst_848 = arith.constant 7.750000e+02 : f32
    %1771 = arith.mulf %1769, %cst_848 : f32
    %1772 = arith.fptosi %1771 : f32 to i32
    %cst_849 = arith.constant 484.615387 : f32
    %1773 = arith.mulf %1765, %cst_849 : f32
    %1774 = arith.fptosi %1773 : f32 to i32
    %c128_i32_850 = arith.constant 128 : i32
    %1775 = arith.muli %1772, %c128_i32_850 : i32
    %1776 = arith.addi %1775, %1774 : i32
    %c2216_i32_851 = arith.constant 2216 : i32
    %1777 = arith.addi %1776, %c2216_i32_851 : i32
    %1778 = arith.index_cast %1777 : i32 to index
    %1779 = memref.load %arg2[%1778] : memref<7424xf32, #tpu.memory_space<smem>>
    %c77 = arith.constant 77 : index
    %1780 = memref.load %arg4[%c77] : memref<101xf32, #tpu.memory_space<smem>>
    memref.store %1779, %arg4[%c77] : memref<101xf32, #tpu.memory_space<smem>>
    %1781 = arith.index_cast %1777 : i32 to index
    %1782 = memref.load %arg0[%1781] : memref<7424xf32, #tpu.memory_space<smem>>
    %1783 = arith.addf %1765, %1782 : f32
    %1784 = arith.index_cast %1777 : i32 to index
    %1785 = memref.load %arg1[%1784] : memref<7424xf32, #tpu.memory_space<smem>>
    %1786 = arith.addf %1769, %1785 : f32
    %cst_852 = arith.constant -8.000000e-02 : f32
    %1787 = arith.maximumf %1783, %cst_852 : f32
    %cst_853 = arith.constant 5.000000e-02 : f32
    %1788 = arith.minimumf %1787, %cst_853 : f32
    %cst_854 = arith.constant 2.000000e-02 : f32
    %1789 = arith.cmpf ogt, %1786, %cst_854 : f32
    %cst_855 = arith.constant 5.000000e-02 : f32
    %1790 = arith.select %1789, %cst_855, %1786 : f32
    %cst_856 = arith.constant -2.000000e-02 : f32
    %1791 = arith.cmpf olt, %1786, %cst_856 : f32
    %cst_857 = arith.constant -2.000000e-02 : f32
    %1792 = arith.select %1791, %cst_857, %1790 : f32
    %c77_858 = arith.constant 77 : index
    %1793 = memref.load %arg3[%c77_858] : memref<101xf32, #tpu.memory_space<smem>>
    memref.store %1788, %arg3[%c77_858] : memref<101xf32, #tpu.memory_space<smem>>
    %cst_859 = arith.constant 7.750000e+02 : f32
    %1794 = arith.mulf %1792, %cst_859 : f32
    %1795 = arith.fptosi %1794 : f32 to i32
    %cst_860 = arith.constant 484.615387 : f32
    %1796 = arith.mulf %1788, %cst_860 : f32
    %1797 = arith.fptosi %1796 : f32 to i32
    %c128_i32_861 = arith.constant 128 : i32
    %1798 = arith.muli %1795, %c128_i32_861 : i32
    %1799 = arith.addi %1798, %1797 : i32
    %c2216_i32_862 = arith.constant 2216 : i32
    %1800 = arith.addi %1799, %c2216_i32_862 : i32
    %1801 = arith.index_cast %1800 : i32 to index
    %1802 = memref.load %arg2[%1801] : memref<7424xf32, #tpu.memory_space<smem>>
    %c78 = arith.constant 78 : index
    %1803 = memref.load %arg4[%c78] : memref<101xf32, #tpu.memory_space<smem>>
    memref.store %1802, %arg4[%c78] : memref<101xf32, #tpu.memory_space<smem>>
    %1804 = arith.index_cast %1800 : i32 to index
    %1805 = memref.load %arg0[%1804] : memref<7424xf32, #tpu.memory_space<smem>>
    %1806 = arith.addf %1788, %1805 : f32
    %1807 = arith.index_cast %1800 : i32 to index
    %1808 = memref.load %arg1[%1807] : memref<7424xf32, #tpu.memory_space<smem>>
    %1809 = arith.addf %1792, %1808 : f32
    %cst_863 = arith.constant -8.000000e-02 : f32
    %1810 = arith.maximumf %1806, %cst_863 : f32
    %cst_864 = arith.constant 5.000000e-02 : f32
    %1811 = arith.minimumf %1810, %cst_864 : f32
    %cst_865 = arith.constant 2.000000e-02 : f32
    %1812 = arith.cmpf ogt, %1809, %cst_865 : f32
    %cst_866 = arith.constant 5.000000e-02 : f32
    %1813 = arith.select %1812, %cst_866, %1809 : f32
    %cst_867 = arith.constant -2.000000e-02 : f32
    %1814 = arith.cmpf olt, %1809, %cst_867 : f32
    %cst_868 = arith.constant -2.000000e-02 : f32
    %1815 = arith.select %1814, %cst_868, %1813 : f32
    %c78_869 = arith.constant 78 : index
    %1816 = memref.load %arg3[%c78_869] : memref<101xf32, #tpu.memory_space<smem>>
    memref.store %1811, %arg3[%c78_869] : memref<101xf32, #tpu.memory_space<smem>>
    %cst_870 = arith.constant 7.750000e+02 : f32
    %1817 = arith.mulf %1815, %cst_870 : f32
    %1818 = arith.fptosi %1817 : f32 to i32
    %cst_871 = arith.constant 484.615387 : f32
    %1819 = arith.mulf %1811, %cst_871 : f32
    %1820 = arith.fptosi %1819 : f32 to i32
    %c128_i32_872 = arith.constant 128 : i32
    %1821 = arith.muli %1818, %c128_i32_872 : i32
    %1822 = arith.addi %1821, %1820 : i32
    %c2216_i32_873 = arith.constant 2216 : i32
    %1823 = arith.addi %1822, %c2216_i32_873 : i32
    %1824 = arith.index_cast %1823 : i32 to index
    %1825 = memref.load %arg2[%1824] : memref<7424xf32, #tpu.memory_space<smem>>
    %c79 = arith.constant 79 : index
    %1826 = memref.load %arg4[%c79] : memref<101xf32, #tpu.memory_space<smem>>
    memref.store %1825, %arg4[%c79] : memref<101xf32, #tpu.memory_space<smem>>
    %1827 = arith.index_cast %1823 : i32 to index
    %1828 = memref.load %arg0[%1827] : memref<7424xf32, #tpu.memory_space<smem>>
    %1829 = arith.addf %1811, %1828 : f32
    %1830 = arith.index_cast %1823 : i32 to index
    %1831 = memref.load %arg1[%1830] : memref<7424xf32, #tpu.memory_space<smem>>
    %1832 = arith.addf %1815, %1831 : f32
    %cst_874 = arith.constant -8.000000e-02 : f32
    %1833 = arith.maximumf %1829, %cst_874 : f32
    %cst_875 = arith.constant 5.000000e-02 : f32
    %1834 = arith.minimumf %1833, %cst_875 : f32
    %cst_876 = arith.constant 2.000000e-02 : f32
    %1835 = arith.cmpf ogt, %1832, %cst_876 : f32
    %cst_877 = arith.constant 5.000000e-02 : f32
    %1836 = arith.select %1835, %cst_877, %1832 : f32
    %cst_878 = arith.constant -2.000000e-02 : f32
    %1837 = arith.cmpf olt, %1832, %cst_878 : f32
    %cst_879 = arith.constant -2.000000e-02 : f32
    %1838 = arith.select %1837, %cst_879, %1836 : f32
    %c79_880 = arith.constant 79 : index
    %1839 = memref.load %arg3[%c79_880] : memref<101xf32, #tpu.memory_space<smem>>
    memref.store %1834, %arg3[%c79_880] : memref<101xf32, #tpu.memory_space<smem>>
    %cst_881 = arith.constant 7.750000e+02 : f32
    %1840 = arith.mulf %1838, %cst_881 : f32
    %1841 = arith.fptosi %1840 : f32 to i32
    %cst_882 = arith.constant 484.615387 : f32
    %1842 = arith.mulf %1834, %cst_882 : f32
    %1843 = arith.fptosi %1842 : f32 to i32
    %c128_i32_883 = arith.constant 128 : i32
    %1844 = arith.muli %1841, %c128_i32_883 : i32
    %1845 = arith.addi %1844, %1843 : i32
    %c2216_i32_884 = arith.constant 2216 : i32
    %1846 = arith.addi %1845, %c2216_i32_884 : i32
    %1847 = arith.index_cast %1846 : i32 to index
    %1848 = memref.load %arg2[%1847] : memref<7424xf32, #tpu.memory_space<smem>>
    %c80 = arith.constant 80 : index
    %1849 = memref.load %arg4[%c80] : memref<101xf32, #tpu.memory_space<smem>>
    memref.store %1848, %arg4[%c80] : memref<101xf32, #tpu.memory_space<smem>>
    %1850 = arith.index_cast %1846 : i32 to index
    %1851 = memref.load %arg0[%1850] : memref<7424xf32, #tpu.memory_space<smem>>
    %1852 = arith.addf %1834, %1851 : f32
    %1853 = arith.index_cast %1846 : i32 to index
    %1854 = memref.load %arg1[%1853] : memref<7424xf32, #tpu.memory_space<smem>>
    %1855 = arith.addf %1838, %1854 : f32
    %cst_885 = arith.constant -8.000000e-02 : f32
    %1856 = arith.maximumf %1852, %cst_885 : f32
    %cst_886 = arith.constant 5.000000e-02 : f32
    %1857 = arith.minimumf %1856, %cst_886 : f32
    %cst_887 = arith.constant 2.000000e-02 : f32
    %1858 = arith.cmpf ogt, %1855, %cst_887 : f32
    %cst_888 = arith.constant 5.000000e-02 : f32
    %1859 = arith.select %1858, %cst_888, %1855 : f32
    %cst_889 = arith.constant -2.000000e-02 : f32
    %1860 = arith.cmpf olt, %1855, %cst_889 : f32
    %cst_890 = arith.constant -2.000000e-02 : f32
    %1861 = arith.select %1860, %cst_890, %1859 : f32
    %c80_891 = arith.constant 80 : index
    %1862 = memref.load %arg3[%c80_891] : memref<101xf32, #tpu.memory_space<smem>>
    memref.store %1857, %arg3[%c80_891] : memref<101xf32, #tpu.memory_space<smem>>
    %cst_892 = arith.constant 7.750000e+02 : f32
    %1863 = arith.mulf %1861, %cst_892 : f32
    %1864 = arith.fptosi %1863 : f32 to i32
    %cst_893 = arith.constant 484.615387 : f32
    %1865 = arith.mulf %1857, %cst_893 : f32
    %1866 = arith.fptosi %1865 : f32 to i32
    %c128_i32_894 = arith.constant 128 : i32
    %1867 = arith.muli %1864, %c128_i32_894 : i32
    %1868 = arith.addi %1867, %1866 : i32
    %c2216_i32_895 = arith.constant 2216 : i32
    %1869 = arith.addi %1868, %c2216_i32_895 : i32
    %1870 = arith.index_cast %1869 : i32 to index
    %1871 = memref.load %arg2[%1870] : memref<7424xf32, #tpu.memory_space<smem>>
    %c81 = arith.constant 81 : index
    %1872 = memref.load %arg4[%c81] : memref<101xf32, #tpu.memory_space<smem>>
    memref.store %1871, %arg4[%c81] : memref<101xf32, #tpu.memory_space<smem>>
    %1873 = arith.index_cast %1869 : i32 to index
    %1874 = memref.load %arg0[%1873] : memref<7424xf32, #tpu.memory_space<smem>>
    %1875 = arith.addf %1857, %1874 : f32
    %1876 = arith.index_cast %1869 : i32 to index
    %1877 = memref.load %arg1[%1876] : memref<7424xf32, #tpu.memory_space<smem>>
    %1878 = arith.addf %1861, %1877 : f32
    %cst_896 = arith.constant -8.000000e-02 : f32
    %1879 = arith.maximumf %1875, %cst_896 : f32
    %cst_897 = arith.constant 5.000000e-02 : f32
    %1880 = arith.minimumf %1879, %cst_897 : f32
    %cst_898 = arith.constant 2.000000e-02 : f32
    %1881 = arith.cmpf ogt, %1878, %cst_898 : f32
    %cst_899 = arith.constant 5.000000e-02 : f32
    %1882 = arith.select %1881, %cst_899, %1878 : f32
    %cst_900 = arith.constant -2.000000e-02 : f32
    %1883 = arith.cmpf olt, %1878, %cst_900 : f32
    %cst_901 = arith.constant -2.000000e-02 : f32
    %1884 = arith.select %1883, %cst_901, %1882 : f32
    %c81_902 = arith.constant 81 : index
    %1885 = memref.load %arg3[%c81_902] : memref<101xf32, #tpu.memory_space<smem>>
    memref.store %1880, %arg3[%c81_902] : memref<101xf32, #tpu.memory_space<smem>>
    %cst_903 = arith.constant 7.750000e+02 : f32
    %1886 = arith.mulf %1884, %cst_903 : f32
    %1887 = arith.fptosi %1886 : f32 to i32
    %cst_904 = arith.constant 484.615387 : f32
    %1888 = arith.mulf %1880, %cst_904 : f32
    %1889 = arith.fptosi %1888 : f32 to i32
    %c128_i32_905 = arith.constant 128 : i32
    %1890 = arith.muli %1887, %c128_i32_905 : i32
    %1891 = arith.addi %1890, %1889 : i32
    %c2216_i32_906 = arith.constant 2216 : i32
    %1892 = arith.addi %1891, %c2216_i32_906 : i32
    %1893 = arith.index_cast %1892 : i32 to index
    %1894 = memref.load %arg2[%1893] : memref<7424xf32, #tpu.memory_space<smem>>
    %c82 = arith.constant 82 : index
    %1895 = memref.load %arg4[%c82] : memref<101xf32, #tpu.memory_space<smem>>
    memref.store %1894, %arg4[%c82] : memref<101xf32, #tpu.memory_space<smem>>
    %1896 = arith.index_cast %1892 : i32 to index
    %1897 = memref.load %arg0[%1896] : memref<7424xf32, #tpu.memory_space<smem>>
    %1898 = arith.addf %1880, %1897 : f32
    %1899 = arith.index_cast %1892 : i32 to index
    %1900 = memref.load %arg1[%1899] : memref<7424xf32, #tpu.memory_space<smem>>
    %1901 = arith.addf %1884, %1900 : f32
    %cst_907 = arith.constant -8.000000e-02 : f32
    %1902 = arith.maximumf %1898, %cst_907 : f32
    %cst_908 = arith.constant 5.000000e-02 : f32
    %1903 = arith.minimumf %1902, %cst_908 : f32
    %cst_909 = arith.constant 2.000000e-02 : f32
    %1904 = arith.cmpf ogt, %1901, %cst_909 : f32
    %cst_910 = arith.constant 5.000000e-02 : f32
    %1905 = arith.select %1904, %cst_910, %1901 : f32
    %cst_911 = arith.constant -2.000000e-02 : f32
    %1906 = arith.cmpf olt, %1901, %cst_911 : f32
    %cst_912 = arith.constant -2.000000e-02 : f32
    %1907 = arith.select %1906, %cst_912, %1905 : f32
    %c82_913 = arith.constant 82 : index
    %1908 = memref.load %arg3[%c82_913] : memref<101xf32, #tpu.memory_space<smem>>
    memref.store %1903, %arg3[%c82_913] : memref<101xf32, #tpu.memory_space<smem>>
    %cst_914 = arith.constant 7.750000e+02 : f32
    %1909 = arith.mulf %1907, %cst_914 : f32
    %1910 = arith.fptosi %1909 : f32 to i32
    %cst_915 = arith.constant 484.615387 : f32
    %1911 = arith.mulf %1903, %cst_915 : f32
    %1912 = arith.fptosi %1911 : f32 to i32
    %c128_i32_916 = arith.constant 128 : i32
    %1913 = arith.muli %1910, %c128_i32_916 : i32
    %1914 = arith.addi %1913, %1912 : i32
    %c2216_i32_917 = arith.constant 2216 : i32
    %1915 = arith.addi %1914, %c2216_i32_917 : i32
    %1916 = arith.index_cast %1915 : i32 to index
    %1917 = memref.load %arg2[%1916] : memref<7424xf32, #tpu.memory_space<smem>>
    %c83 = arith.constant 83 : index
    %1918 = memref.load %arg4[%c83] : memref<101xf32, #tpu.memory_space<smem>>
    memref.store %1917, %arg4[%c83] : memref<101xf32, #tpu.memory_space<smem>>
    %1919 = arith.index_cast %1915 : i32 to index
    %1920 = memref.load %arg0[%1919] : memref<7424xf32, #tpu.memory_space<smem>>
    %1921 = arith.addf %1903, %1920 : f32
    %1922 = arith.index_cast %1915 : i32 to index
    %1923 = memref.load %arg1[%1922] : memref<7424xf32, #tpu.memory_space<smem>>
    %1924 = arith.addf %1907, %1923 : f32
    %cst_918 = arith.constant -8.000000e-02 : f32
    %1925 = arith.maximumf %1921, %cst_918 : f32
    %cst_919 = arith.constant 5.000000e-02 : f32
    %1926 = arith.minimumf %1925, %cst_919 : f32
    %cst_920 = arith.constant 2.000000e-02 : f32
    %1927 = arith.cmpf ogt, %1924, %cst_920 : f32
    %cst_921 = arith.constant 5.000000e-02 : f32
    %1928 = arith.select %1927, %cst_921, %1924 : f32
    %cst_922 = arith.constant -2.000000e-02 : f32
    %1929 = arith.cmpf olt, %1924, %cst_922 : f32
    %cst_923 = arith.constant -2.000000e-02 : f32
    %1930 = arith.select %1929, %cst_923, %1928 : f32
    %c83_924 = arith.constant 83 : index
    %1931 = memref.load %arg3[%c83_924] : memref<101xf32, #tpu.memory_space<smem>>
    memref.store %1926, %arg3[%c83_924] : memref<101xf32, #tpu.memory_space<smem>>
    %cst_925 = arith.constant 7.750000e+02 : f32
    %1932 = arith.mulf %1930, %cst_925 : f32
    %1933 = arith.fptosi %1932 : f32 to i32
    %cst_926 = arith.constant 484.615387 : f32
    %1934 = arith.mulf %1926, %cst_926 : f32
    %1935 = arith.fptosi %1934 : f32 to i32
    %c128_i32_927 = arith.constant 128 : i32
    %1936 = arith.muli %1933, %c128_i32_927 : i32
    %1937 = arith.addi %1936, %1935 : i32
    %c2216_i32_928 = arith.constant 2216 : i32
    %1938 = arith.addi %1937, %c2216_i32_928 : i32
    %1939 = arith.index_cast %1938 : i32 to index
    %1940 = memref.load %arg2[%1939] : memref<7424xf32, #tpu.memory_space<smem>>
    %c84 = arith.constant 84 : index
    %1941 = memref.load %arg4[%c84] : memref<101xf32, #tpu.memory_space<smem>>
    memref.store %1940, %arg4[%c84] : memref<101xf32, #tpu.memory_space<smem>>
    %1942 = arith.index_cast %1938 : i32 to index
    %1943 = memref.load %arg0[%1942] : memref<7424xf32, #tpu.memory_space<smem>>
    %1944 = arith.addf %1926, %1943 : f32
    %1945 = arith.index_cast %1938 : i32 to index
    %1946 = memref.load %arg1[%1945] : memref<7424xf32, #tpu.memory_space<smem>>
    %1947 = arith.addf %1930, %1946 : f32
    %cst_929 = arith.constant -8.000000e-02 : f32
    %1948 = arith.maximumf %1944, %cst_929 : f32
    %cst_930 = arith.constant 5.000000e-02 : f32
    %1949 = arith.minimumf %1948, %cst_930 : f32
    %cst_931 = arith.constant 2.000000e-02 : f32
    %1950 = arith.cmpf ogt, %1947, %cst_931 : f32
    %cst_932 = arith.constant 5.000000e-02 : f32
    %1951 = arith.select %1950, %cst_932, %1947 : f32
    %cst_933 = arith.constant -2.000000e-02 : f32
    %1952 = arith.cmpf olt, %1947, %cst_933 : f32
    %cst_934 = arith.constant -2.000000e-02 : f32
    %1953 = arith.select %1952, %cst_934, %1951 : f32
    %c84_935 = arith.constant 84 : index
    %1954 = memref.load %arg3[%c84_935] : memref<101xf32, #tpu.memory_space<smem>>
    memref.store %1949, %arg3[%c84_935] : memref<101xf32, #tpu.memory_space<smem>>
    %cst_936 = arith.constant 7.750000e+02 : f32
    %1955 = arith.mulf %1953, %cst_936 : f32
    %1956 = arith.fptosi %1955 : f32 to i32
    %cst_937 = arith.constant 484.615387 : f32
    %1957 = arith.mulf %1949, %cst_937 : f32
    %1958 = arith.fptosi %1957 : f32 to i32
    %c128_i32_938 = arith.constant 128 : i32
    %1959 = arith.muli %1956, %c128_i32_938 : i32
    %1960 = arith.addi %1959, %1958 : i32
    %c2216_i32_939 = arith.constant 2216 : i32
    %1961 = arith.addi %1960, %c2216_i32_939 : i32
    %1962 = arith.index_cast %1961 : i32 to index
    %1963 = memref.load %arg2[%1962] : memref<7424xf32, #tpu.memory_space<smem>>
    %c85 = arith.constant 85 : index
    %1964 = memref.load %arg4[%c85] : memref<101xf32, #tpu.memory_space<smem>>
    memref.store %1963, %arg4[%c85] : memref<101xf32, #tpu.memory_space<smem>>
    %1965 = arith.index_cast %1961 : i32 to index
    %1966 = memref.load %arg0[%1965] : memref<7424xf32, #tpu.memory_space<smem>>
    %1967 = arith.addf %1949, %1966 : f32
    %1968 = arith.index_cast %1961 : i32 to index
    %1969 = memref.load %arg1[%1968] : memref<7424xf32, #tpu.memory_space<smem>>
    %1970 = arith.addf %1953, %1969 : f32
    %cst_940 = arith.constant -8.000000e-02 : f32
    %1971 = arith.maximumf %1967, %cst_940 : f32
    %cst_941 = arith.constant 5.000000e-02 : f32
    %1972 = arith.minimumf %1971, %cst_941 : f32
    %cst_942 = arith.constant 2.000000e-02 : f32
    %1973 = arith.cmpf ogt, %1970, %cst_942 : f32
    %cst_943 = arith.constant 5.000000e-02 : f32
    %1974 = arith.select %1973, %cst_943, %1970 : f32
    %cst_944 = arith.constant -2.000000e-02 : f32
    %1975 = arith.cmpf olt, %1970, %cst_944 : f32
    %cst_945 = arith.constant -2.000000e-02 : f32
    %1976 = arith.select %1975, %cst_945, %1974 : f32
    %c85_946 = arith.constant 85 : index
    %1977 = memref.load %arg3[%c85_946] : memref<101xf32, #tpu.memory_space<smem>>
    memref.store %1972, %arg3[%c85_946] : memref<101xf32, #tpu.memory_space<smem>>
    %cst_947 = arith.constant 7.750000e+02 : f32
    %1978 = arith.mulf %1976, %cst_947 : f32
    %1979 = arith.fptosi %1978 : f32 to i32
    %cst_948 = arith.constant 484.615387 : f32
    %1980 = arith.mulf %1972, %cst_948 : f32
    %1981 = arith.fptosi %1980 : f32 to i32
    %c128_i32_949 = arith.constant 128 : i32
    %1982 = arith.muli %1979, %c128_i32_949 : i32
    %1983 = arith.addi %1982, %1981 : i32
    %c2216_i32_950 = arith.constant 2216 : i32
    %1984 = arith.addi %1983, %c2216_i32_950 : i32
    %1985 = arith.index_cast %1984 : i32 to index
    %1986 = memref.load %arg2[%1985] : memref<7424xf32, #tpu.memory_space<smem>>
    %c86 = arith.constant 86 : index
    %1987 = memref.load %arg4[%c86] : memref<101xf32, #tpu.memory_space<smem>>
    memref.store %1986, %arg4[%c86] : memref<101xf32, #tpu.memory_space<smem>>
    %1988 = arith.index_cast %1984 : i32 to index
    %1989 = memref.load %arg0[%1988] : memref<7424xf32, #tpu.memory_space<smem>>
    %1990 = arith.addf %1972, %1989 : f32
    %1991 = arith.index_cast %1984 : i32 to index
    %1992 = memref.load %arg1[%1991] : memref<7424xf32, #tpu.memory_space<smem>>
    %1993 = arith.addf %1976, %1992 : f32
    %cst_951 = arith.constant -8.000000e-02 : f32
    %1994 = arith.maximumf %1990, %cst_951 : f32
    %cst_952 = arith.constant 5.000000e-02 : f32
    %1995 = arith.minimumf %1994, %cst_952 : f32
    %cst_953 = arith.constant 2.000000e-02 : f32
    %1996 = arith.cmpf ogt, %1993, %cst_953 : f32
    %cst_954 = arith.constant 5.000000e-02 : f32
    %1997 = arith.select %1996, %cst_954, %1993 : f32
    %cst_955 = arith.constant -2.000000e-02 : f32
    %1998 = arith.cmpf olt, %1993, %cst_955 : f32
    %cst_956 = arith.constant -2.000000e-02 : f32
    %1999 = arith.select %1998, %cst_956, %1997 : f32
    %c86_957 = arith.constant 86 : index
    %2000 = memref.load %arg3[%c86_957] : memref<101xf32, #tpu.memory_space<smem>>
    memref.store %1995, %arg3[%c86_957] : memref<101xf32, #tpu.memory_space<smem>>
    %cst_958 = arith.constant 7.750000e+02 : f32
    %2001 = arith.mulf %1999, %cst_958 : f32
    %2002 = arith.fptosi %2001 : f32 to i32
    %cst_959 = arith.constant 484.615387 : f32
    %2003 = arith.mulf %1995, %cst_959 : f32
    %2004 = arith.fptosi %2003 : f32 to i32
    %c128_i32_960 = arith.constant 128 : i32
    %2005 = arith.muli %2002, %c128_i32_960 : i32
    %2006 = arith.addi %2005, %2004 : i32
    %c2216_i32_961 = arith.constant 2216 : i32
    %2007 = arith.addi %2006, %c2216_i32_961 : i32
    %2008 = arith.index_cast %2007 : i32 to index
    %2009 = memref.load %arg2[%2008] : memref<7424xf32, #tpu.memory_space<smem>>
    %c87 = arith.constant 87 : index
    %2010 = memref.load %arg4[%c87] : memref<101xf32, #tpu.memory_space<smem>>
    memref.store %2009, %arg4[%c87] : memref<101xf32, #tpu.memory_space<smem>>
    %2011 = arith.index_cast %2007 : i32 to index
    %2012 = memref.load %arg0[%2011] : memref<7424xf32, #tpu.memory_space<smem>>
    %2013 = arith.addf %1995, %2012 : f32
    %2014 = arith.index_cast %2007 : i32 to index
    %2015 = memref.load %arg1[%2014] : memref<7424xf32, #tpu.memory_space<smem>>
    %2016 = arith.addf %1999, %2015 : f32
    %cst_962 = arith.constant -8.000000e-02 : f32
    %2017 = arith.maximumf %2013, %cst_962 : f32
    %cst_963 = arith.constant 5.000000e-02 : f32
    %2018 = arith.minimumf %2017, %cst_963 : f32
    %cst_964 = arith.constant 2.000000e-02 : f32
    %2019 = arith.cmpf ogt, %2016, %cst_964 : f32
    %cst_965 = arith.constant 5.000000e-02 : f32
    %2020 = arith.select %2019, %cst_965, %2016 : f32
    %cst_966 = arith.constant -2.000000e-02 : f32
    %2021 = arith.cmpf olt, %2016, %cst_966 : f32
    %cst_967 = arith.constant -2.000000e-02 : f32
    %2022 = arith.select %2021, %cst_967, %2020 : f32
    %c87_968 = arith.constant 87 : index
    %2023 = memref.load %arg3[%c87_968] : memref<101xf32, #tpu.memory_space<smem>>
    memref.store %2018, %arg3[%c87_968] : memref<101xf32, #tpu.memory_space<smem>>
    %cst_969 = arith.constant 7.750000e+02 : f32
    %2024 = arith.mulf %2022, %cst_969 : f32
    %2025 = arith.fptosi %2024 : f32 to i32
    %cst_970 = arith.constant 484.615387 : f32
    %2026 = arith.mulf %2018, %cst_970 : f32
    %2027 = arith.fptosi %2026 : f32 to i32
    %c128_i32_971 = arith.constant 128 : i32
    %2028 = arith.muli %2025, %c128_i32_971 : i32
    %2029 = arith.addi %2028, %2027 : i32
    %c2216_i32_972 = arith.constant 2216 : i32
    %2030 = arith.addi %2029, %c2216_i32_972 : i32
    %2031 = arith.index_cast %2030 : i32 to index
    %2032 = memref.load %arg2[%2031] : memref<7424xf32, #tpu.memory_space<smem>>
    %c88 = arith.constant 88 : index
    %2033 = memref.load %arg4[%c88] : memref<101xf32, #tpu.memory_space<smem>>
    memref.store %2032, %arg4[%c88] : memref<101xf32, #tpu.memory_space<smem>>
    %2034 = arith.index_cast %2030 : i32 to index
    %2035 = memref.load %arg0[%2034] : memref<7424xf32, #tpu.memory_space<smem>>
    %2036 = arith.addf %2018, %2035 : f32
    %2037 = arith.index_cast %2030 : i32 to index
    %2038 = memref.load %arg1[%2037] : memref<7424xf32, #tpu.memory_space<smem>>
    %2039 = arith.addf %2022, %2038 : f32
    %cst_973 = arith.constant -8.000000e-02 : f32
    %2040 = arith.maximumf %2036, %cst_973 : f32
    %cst_974 = arith.constant 5.000000e-02 : f32
    %2041 = arith.minimumf %2040, %cst_974 : f32
    %cst_975 = arith.constant 2.000000e-02 : f32
    %2042 = arith.cmpf ogt, %2039, %cst_975 : f32
    %cst_976 = arith.constant 5.000000e-02 : f32
    %2043 = arith.select %2042, %cst_976, %2039 : f32
    %cst_977 = arith.constant -2.000000e-02 : f32
    %2044 = arith.cmpf olt, %2039, %cst_977 : f32
    %cst_978 = arith.constant -2.000000e-02 : f32
    %2045 = arith.select %2044, %cst_978, %2043 : f32
    %c88_979 = arith.constant 88 : index
    %2046 = memref.load %arg3[%c88_979] : memref<101xf32, #tpu.memory_space<smem>>
    memref.store %2041, %arg3[%c88_979] : memref<101xf32, #tpu.memory_space<smem>>
    %cst_980 = arith.constant 7.750000e+02 : f32
    %2047 = arith.mulf %2045, %cst_980 : f32
    %2048 = arith.fptosi %2047 : f32 to i32
    %cst_981 = arith.constant 484.615387 : f32
    %2049 = arith.mulf %2041, %cst_981 : f32
    %2050 = arith.fptosi %2049 : f32 to i32
    %c128_i32_982 = arith.constant 128 : i32
    %2051 = arith.muli %2048, %c128_i32_982 : i32
    %2052 = arith.addi %2051, %2050 : i32
    %c2216_i32_983 = arith.constant 2216 : i32
    %2053 = arith.addi %2052, %c2216_i32_983 : i32
    %2054 = arith.index_cast %2053 : i32 to index
    %2055 = memref.load %arg2[%2054] : memref<7424xf32, #tpu.memory_space<smem>>
    %c89 = arith.constant 89 : index
    %2056 = memref.load %arg4[%c89] : memref<101xf32, #tpu.memory_space<smem>>
    memref.store %2055, %arg4[%c89] : memref<101xf32, #tpu.memory_space<smem>>
    %2057 = arith.index_cast %2053 : i32 to index
    %2058 = memref.load %arg0[%2057] : memref<7424xf32, #tpu.memory_space<smem>>
    %2059 = arith.addf %2041, %2058 : f32
    %2060 = arith.index_cast %2053 : i32 to index
    %2061 = memref.load %arg1[%2060] : memref<7424xf32, #tpu.memory_space<smem>>
    %2062 = arith.addf %2045, %2061 : f32
    %cst_984 = arith.constant -8.000000e-02 : f32
    %2063 = arith.maximumf %2059, %cst_984 : f32
    %cst_985 = arith.constant 5.000000e-02 : f32
    %2064 = arith.minimumf %2063, %cst_985 : f32
    %cst_986 = arith.constant 2.000000e-02 : f32
    %2065 = arith.cmpf ogt, %2062, %cst_986 : f32
    %cst_987 = arith.constant 5.000000e-02 : f32
    %2066 = arith.select %2065, %cst_987, %2062 : f32
    %cst_988 = arith.constant -2.000000e-02 : f32
    %2067 = arith.cmpf olt, %2062, %cst_988 : f32
    %cst_989 = arith.constant -2.000000e-02 : f32
    %2068 = arith.select %2067, %cst_989, %2066 : f32
    %c89_990 = arith.constant 89 : index
    %2069 = memref.load %arg3[%c89_990] : memref<101xf32, #tpu.memory_space<smem>>
    memref.store %2064, %arg3[%c89_990] : memref<101xf32, #tpu.memory_space<smem>>
    %cst_991 = arith.constant 7.750000e+02 : f32
    %2070 = arith.mulf %2068, %cst_991 : f32
    %2071 = arith.fptosi %2070 : f32 to i32
    %cst_992 = arith.constant 484.615387 : f32
    %2072 = arith.mulf %2064, %cst_992 : f32
    %2073 = arith.fptosi %2072 : f32 to i32
    %c128_i32_993 = arith.constant 128 : i32
    %2074 = arith.muli %2071, %c128_i32_993 : i32
    %2075 = arith.addi %2074, %2073 : i32
    %c2216_i32_994 = arith.constant 2216 : i32
    %2076 = arith.addi %2075, %c2216_i32_994 : i32
    %2077 = arith.index_cast %2076 : i32 to index
    %2078 = memref.load %arg2[%2077] : memref<7424xf32, #tpu.memory_space<smem>>
    %c90 = arith.constant 90 : index
    %2079 = memref.load %arg4[%c90] : memref<101xf32, #tpu.memory_space<smem>>
    memref.store %2078, %arg4[%c90] : memref<101xf32, #tpu.memory_space<smem>>
    %2080 = arith.index_cast %2076 : i32 to index
    %2081 = memref.load %arg0[%2080] : memref<7424xf32, #tpu.memory_space<smem>>
    %2082 = arith.addf %2064, %2081 : f32
    %2083 = arith.index_cast %2076 : i32 to index
    %2084 = memref.load %arg1[%2083] : memref<7424xf32, #tpu.memory_space<smem>>
    %2085 = arith.addf %2068, %2084 : f32
    %cst_995 = arith.constant -8.000000e-02 : f32
    %2086 = arith.maximumf %2082, %cst_995 : f32
    %cst_996 = arith.constant 5.000000e-02 : f32
    %2087 = arith.minimumf %2086, %cst_996 : f32
    %cst_997 = arith.constant 2.000000e-02 : f32
    %2088 = arith.cmpf ogt, %2085, %cst_997 : f32
    %cst_998 = arith.constant 5.000000e-02 : f32
    %2089 = arith.select %2088, %cst_998, %2085 : f32
    %cst_999 = arith.constant -2.000000e-02 : f32
    %2090 = arith.cmpf olt, %2085, %cst_999 : f32
    %cst_1000 = arith.constant -2.000000e-02 : f32
    %2091 = arith.select %2090, %cst_1000, %2089 : f32
    %c90_1001 = arith.constant 90 : index
    %2092 = memref.load %arg3[%c90_1001] : memref<101xf32, #tpu.memory_space<smem>>
    memref.store %2087, %arg3[%c90_1001] : memref<101xf32, #tpu.memory_space<smem>>
    %cst_1002 = arith.constant 7.750000e+02 : f32
    %2093 = arith.mulf %2091, %cst_1002 : f32
    %2094 = arith.fptosi %2093 : f32 to i32
    %cst_1003 = arith.constant 484.615387 : f32
    %2095 = arith.mulf %2087, %cst_1003 : f32
    %2096 = arith.fptosi %2095 : f32 to i32
    %c128_i32_1004 = arith.constant 128 : i32
    %2097 = arith.muli %2094, %c128_i32_1004 : i32
    %2098 = arith.addi %2097, %2096 : i32
    %c2216_i32_1005 = arith.constant 2216 : i32
    %2099 = arith.addi %2098, %c2216_i32_1005 : i32
    %2100 = arith.index_cast %2099 : i32 to index
    %2101 = memref.load %arg2[%2100] : memref<7424xf32, #tpu.memory_space<smem>>
    %c91 = arith.constant 91 : index
    %2102 = memref.load %arg4[%c91] : memref<101xf32, #tpu.memory_space<smem>>
    memref.store %2101, %arg4[%c91] : memref<101xf32, #tpu.memory_space<smem>>
    %2103 = arith.index_cast %2099 : i32 to index
    %2104 = memref.load %arg0[%2103] : memref<7424xf32, #tpu.memory_space<smem>>
    %2105 = arith.addf %2087, %2104 : f32
    %2106 = arith.index_cast %2099 : i32 to index
    %2107 = memref.load %arg1[%2106] : memref<7424xf32, #tpu.memory_space<smem>>
    %2108 = arith.addf %2091, %2107 : f32
    %cst_1006 = arith.constant -8.000000e-02 : f32
    %2109 = arith.maximumf %2105, %cst_1006 : f32
    %cst_1007 = arith.constant 5.000000e-02 : f32
    %2110 = arith.minimumf %2109, %cst_1007 : f32
    %cst_1008 = arith.constant 2.000000e-02 : f32
    %2111 = arith.cmpf ogt, %2108, %cst_1008 : f32
    %cst_1009 = arith.constant 5.000000e-02 : f32
    %2112 = arith.select %2111, %cst_1009, %2108 : f32
    %cst_1010 = arith.constant -2.000000e-02 : f32
    %2113 = arith.cmpf olt, %2108, %cst_1010 : f32
    %cst_1011 = arith.constant -2.000000e-02 : f32
    %2114 = arith.select %2113, %cst_1011, %2112 : f32
    %c91_1012 = arith.constant 91 : index
    %2115 = memref.load %arg3[%c91_1012] : memref<101xf32, #tpu.memory_space<smem>>
    memref.store %2110, %arg3[%c91_1012] : memref<101xf32, #tpu.memory_space<smem>>
    %cst_1013 = arith.constant 7.750000e+02 : f32
    %2116 = arith.mulf %2114, %cst_1013 : f32
    %2117 = arith.fptosi %2116 : f32 to i32
    %cst_1014 = arith.constant 484.615387 : f32
    %2118 = arith.mulf %2110, %cst_1014 : f32
    %2119 = arith.fptosi %2118 : f32 to i32
    %c128_i32_1015 = arith.constant 128 : i32
    %2120 = arith.muli %2117, %c128_i32_1015 : i32
    %2121 = arith.addi %2120, %2119 : i32
    %c2216_i32_1016 = arith.constant 2216 : i32
    %2122 = arith.addi %2121, %c2216_i32_1016 : i32
    %2123 = arith.index_cast %2122 : i32 to index
    %2124 = memref.load %arg2[%2123] : memref<7424xf32, #tpu.memory_space<smem>>
    %c92 = arith.constant 92 : index
    %2125 = memref.load %arg4[%c92] : memref<101xf32, #tpu.memory_space<smem>>
    memref.store %2124, %arg4[%c92] : memref<101xf32, #tpu.memory_space<smem>>
    %2126 = arith.index_cast %2122 : i32 to index
    %2127 = memref.load %arg0[%2126] : memref<7424xf32, #tpu.memory_space<smem>>
    %2128 = arith.addf %2110, %2127 : f32
    %2129 = arith.index_cast %2122 : i32 to index
    %2130 = memref.load %arg1[%2129] : memref<7424xf32, #tpu.memory_space<smem>>
    %2131 = arith.addf %2114, %2130 : f32
    %cst_1017 = arith.constant -8.000000e-02 : f32
    %2132 = arith.maximumf %2128, %cst_1017 : f32
    %cst_1018 = arith.constant 5.000000e-02 : f32
    %2133 = arith.minimumf %2132, %cst_1018 : f32
    %cst_1019 = arith.constant 2.000000e-02 : f32
    %2134 = arith.cmpf ogt, %2131, %cst_1019 : f32
    %cst_1020 = arith.constant 5.000000e-02 : f32
    %2135 = arith.select %2134, %cst_1020, %2131 : f32
    %cst_1021 = arith.constant -2.000000e-02 : f32
    %2136 = arith.cmpf olt, %2131, %cst_1021 : f32
    %cst_1022 = arith.constant -2.000000e-02 : f32
    %2137 = arith.select %2136, %cst_1022, %2135 : f32
    %c92_1023 = arith.constant 92 : index
    %2138 = memref.load %arg3[%c92_1023] : memref<101xf32, #tpu.memory_space<smem>>
    memref.store %2133, %arg3[%c92_1023] : memref<101xf32, #tpu.memory_space<smem>>
    %cst_1024 = arith.constant 7.750000e+02 : f32
    %2139 = arith.mulf %2137, %cst_1024 : f32
    %2140 = arith.fptosi %2139 : f32 to i32
    %cst_1025 = arith.constant 484.615387 : f32
    %2141 = arith.mulf %2133, %cst_1025 : f32
    %2142 = arith.fptosi %2141 : f32 to i32
    %c128_i32_1026 = arith.constant 128 : i32
    %2143 = arith.muli %2140, %c128_i32_1026 : i32
    %2144 = arith.addi %2143, %2142 : i32
    %c2216_i32_1027 = arith.constant 2216 : i32
    %2145 = arith.addi %2144, %c2216_i32_1027 : i32
    %2146 = arith.index_cast %2145 : i32 to index
    %2147 = memref.load %arg2[%2146] : memref<7424xf32, #tpu.memory_space<smem>>
    %c93 = arith.constant 93 : index
    %2148 = memref.load %arg4[%c93] : memref<101xf32, #tpu.memory_space<smem>>
    memref.store %2147, %arg4[%c93] : memref<101xf32, #tpu.memory_space<smem>>
    %2149 = arith.index_cast %2145 : i32 to index
    %2150 = memref.load %arg0[%2149] : memref<7424xf32, #tpu.memory_space<smem>>
    %2151 = arith.addf %2133, %2150 : f32
    %2152 = arith.index_cast %2145 : i32 to index
    %2153 = memref.load %arg1[%2152] : memref<7424xf32, #tpu.memory_space<smem>>
    %2154 = arith.addf %2137, %2153 : f32
    %cst_1028 = arith.constant -8.000000e-02 : f32
    %2155 = arith.maximumf %2151, %cst_1028 : f32
    %cst_1029 = arith.constant 5.000000e-02 : f32
    %2156 = arith.minimumf %2155, %cst_1029 : f32
    %cst_1030 = arith.constant 2.000000e-02 : f32
    %2157 = arith.cmpf ogt, %2154, %cst_1030 : f32
    %cst_1031 = arith.constant 5.000000e-02 : f32
    %2158 = arith.select %2157, %cst_1031, %2154 : f32
    %cst_1032 = arith.constant -2.000000e-02 : f32
    %2159 = arith.cmpf olt, %2154, %cst_1032 : f32
    %cst_1033 = arith.constant -2.000000e-02 : f32
    %2160 = arith.select %2159, %cst_1033, %2158 : f32
    %c93_1034 = arith.constant 93 : index
    %2161 = memref.load %arg3[%c93_1034] : memref<101xf32, #tpu.memory_space<smem>>
    memref.store %2156, %arg3[%c93_1034] : memref<101xf32, #tpu.memory_space<smem>>
    %cst_1035 = arith.constant 7.750000e+02 : f32
    %2162 = arith.mulf %2160, %cst_1035 : f32
    %2163 = arith.fptosi %2162 : f32 to i32
    %cst_1036 = arith.constant 484.615387 : f32
    %2164 = arith.mulf %2156, %cst_1036 : f32
    %2165 = arith.fptosi %2164 : f32 to i32
    %c128_i32_1037 = arith.constant 128 : i32
    %2166 = arith.muli %2163, %c128_i32_1037 : i32
    %2167 = arith.addi %2166, %2165 : i32
    %c2216_i32_1038 = arith.constant 2216 : i32
    %2168 = arith.addi %2167, %c2216_i32_1038 : i32
    %2169 = arith.index_cast %2168 : i32 to index
    %2170 = memref.load %arg2[%2169] : memref<7424xf32, #tpu.memory_space<smem>>
    %c94 = arith.constant 94 : index
    %2171 = memref.load %arg4[%c94] : memref<101xf32, #tpu.memory_space<smem>>
    memref.store %2170, %arg4[%c94] : memref<101xf32, #tpu.memory_space<smem>>
    %2172 = arith.index_cast %2168 : i32 to index
    %2173 = memref.load %arg0[%2172] : memref<7424xf32, #tpu.memory_space<smem>>
    %2174 = arith.addf %2156, %2173 : f32
    %2175 = arith.index_cast %2168 : i32 to index
    %2176 = memref.load %arg1[%2175] : memref<7424xf32, #tpu.memory_space<smem>>
    %2177 = arith.addf %2160, %2176 : f32
    %cst_1039 = arith.constant -8.000000e-02 : f32
    %2178 = arith.maximumf %2174, %cst_1039 : f32
    %cst_1040 = arith.constant 5.000000e-02 : f32
    %2179 = arith.minimumf %2178, %cst_1040 : f32
    %cst_1041 = arith.constant 2.000000e-02 : f32
    %2180 = arith.cmpf ogt, %2177, %cst_1041 : f32
    %cst_1042 = arith.constant 5.000000e-02 : f32
    %2181 = arith.select %2180, %cst_1042, %2177 : f32
    %cst_1043 = arith.constant -2.000000e-02 : f32
    %2182 = arith.cmpf olt, %2177, %cst_1043 : f32
    %cst_1044 = arith.constant -2.000000e-02 : f32
    %2183 = arith.select %2182, %cst_1044, %2181 : f32
    %c94_1045 = arith.constant 94 : index
    %2184 = memref.load %arg3[%c94_1045] : memref<101xf32, #tpu.memory_space<smem>>
    memref.store %2179, %arg3[%c94_1045] : memref<101xf32, #tpu.memory_space<smem>>
    %cst_1046 = arith.constant 7.750000e+02 : f32
    %2185 = arith.mulf %2183, %cst_1046 : f32
    %2186 = arith.fptosi %2185 : f32 to i32
    %cst_1047 = arith.constant 484.615387 : f32
    %2187 = arith.mulf %2179, %cst_1047 : f32
    %2188 = arith.fptosi %2187 : f32 to i32
    %c128_i32_1048 = arith.constant 128 : i32
    %2189 = arith.muli %2186, %c128_i32_1048 : i32
    %2190 = arith.addi %2189, %2188 : i32
    %c2216_i32_1049 = arith.constant 2216 : i32
    %2191 = arith.addi %2190, %c2216_i32_1049 : i32
    %2192 = arith.index_cast %2191 : i32 to index
    %2193 = memref.load %arg2[%2192] : memref<7424xf32, #tpu.memory_space<smem>>
    %c95 = arith.constant 95 : index
    %2194 = memref.load %arg4[%c95] : memref<101xf32, #tpu.memory_space<smem>>
    memref.store %2193, %arg4[%c95] : memref<101xf32, #tpu.memory_space<smem>>
    %2195 = arith.index_cast %2191 : i32 to index
    %2196 = memref.load %arg0[%2195] : memref<7424xf32, #tpu.memory_space<smem>>
    %2197 = arith.addf %2179, %2196 : f32
    %2198 = arith.index_cast %2191 : i32 to index
    %2199 = memref.load %arg1[%2198] : memref<7424xf32, #tpu.memory_space<smem>>
    %2200 = arith.addf %2183, %2199 : f32
    %cst_1050 = arith.constant -8.000000e-02 : f32
    %2201 = arith.maximumf %2197, %cst_1050 : f32
    %cst_1051 = arith.constant 5.000000e-02 : f32
    %2202 = arith.minimumf %2201, %cst_1051 : f32
    %cst_1052 = arith.constant 2.000000e-02 : f32
    %2203 = arith.cmpf ogt, %2200, %cst_1052 : f32
    %cst_1053 = arith.constant 5.000000e-02 : f32
    %2204 = arith.select %2203, %cst_1053, %2200 : f32
    %cst_1054 = arith.constant -2.000000e-02 : f32
    %2205 = arith.cmpf olt, %2200, %cst_1054 : f32
    %cst_1055 = arith.constant -2.000000e-02 : f32
    %2206 = arith.select %2205, %cst_1055, %2204 : f32
    %c95_1056 = arith.constant 95 : index
    %2207 = memref.load %arg3[%c95_1056] : memref<101xf32, #tpu.memory_space<smem>>
    memref.store %2202, %arg3[%c95_1056] : memref<101xf32, #tpu.memory_space<smem>>
    %cst_1057 = arith.constant 7.750000e+02 : f32
    %2208 = arith.mulf %2206, %cst_1057 : f32
    %2209 = arith.fptosi %2208 : f32 to i32
    %cst_1058 = arith.constant 484.615387 : f32
    %2210 = arith.mulf %2202, %cst_1058 : f32
    %2211 = arith.fptosi %2210 : f32 to i32
    %c128_i32_1059 = arith.constant 128 : i32
    %2212 = arith.muli %2209, %c128_i32_1059 : i32
    %2213 = arith.addi %2212, %2211 : i32
    %c2216_i32_1060 = arith.constant 2216 : i32
    %2214 = arith.addi %2213, %c2216_i32_1060 : i32
    %2215 = arith.index_cast %2214 : i32 to index
    %2216 = memref.load %arg2[%2215] : memref<7424xf32, #tpu.memory_space<smem>>
    %c96 = arith.constant 96 : index
    %2217 = memref.load %arg4[%c96] : memref<101xf32, #tpu.memory_space<smem>>
    memref.store %2216, %arg4[%c96] : memref<101xf32, #tpu.memory_space<smem>>
    %2218 = arith.index_cast %2214 : i32 to index
    %2219 = memref.load %arg0[%2218] : memref<7424xf32, #tpu.memory_space<smem>>
    %2220 = arith.addf %2202, %2219 : f32
    %2221 = arith.index_cast %2214 : i32 to index
    %2222 = memref.load %arg1[%2221] : memref<7424xf32, #tpu.memory_space<smem>>
    %2223 = arith.addf %2206, %2222 : f32
    %cst_1061 = arith.constant -8.000000e-02 : f32
    %2224 = arith.maximumf %2220, %cst_1061 : f32
    %cst_1062 = arith.constant 5.000000e-02 : f32
    %2225 = arith.minimumf %2224, %cst_1062 : f32
    %cst_1063 = arith.constant 2.000000e-02 : f32
    %2226 = arith.cmpf ogt, %2223, %cst_1063 : f32
    %cst_1064 = arith.constant 5.000000e-02 : f32
    %2227 = arith.select %2226, %cst_1064, %2223 : f32
    %cst_1065 = arith.constant -2.000000e-02 : f32
    %2228 = arith.cmpf olt, %2223, %cst_1065 : f32
    %cst_1066 = arith.constant -2.000000e-02 : f32
    %2229 = arith.select %2228, %cst_1066, %2227 : f32
    %c96_1067 = arith.constant 96 : index
    %2230 = memref.load %arg3[%c96_1067] : memref<101xf32, #tpu.memory_space<smem>>
    memref.store %2225, %arg3[%c96_1067] : memref<101xf32, #tpu.memory_space<smem>>
    %cst_1068 = arith.constant 7.750000e+02 : f32
    %2231 = arith.mulf %2229, %cst_1068 : f32
    %2232 = arith.fptosi %2231 : f32 to i32
    %cst_1069 = arith.constant 484.615387 : f32
    %2233 = arith.mulf %2225, %cst_1069 : f32
    %2234 = arith.fptosi %2233 : f32 to i32
    %c128_i32_1070 = arith.constant 128 : i32
    %2235 = arith.muli %2232, %c128_i32_1070 : i32
    %2236 = arith.addi %2235, %2234 : i32
    %c2216_i32_1071 = arith.constant 2216 : i32
    %2237 = arith.addi %2236, %c2216_i32_1071 : i32
    %2238 = arith.index_cast %2237 : i32 to index
    %2239 = memref.load %arg2[%2238] : memref<7424xf32, #tpu.memory_space<smem>>
    %c97 = arith.constant 97 : index
    %2240 = memref.load %arg4[%c97] : memref<101xf32, #tpu.memory_space<smem>>
    memref.store %2239, %arg4[%c97] : memref<101xf32, #tpu.memory_space<smem>>
    %2241 = arith.index_cast %2237 : i32 to index
    %2242 = memref.load %arg0[%2241] : memref<7424xf32, #tpu.memory_space<smem>>
    %2243 = arith.addf %2225, %2242 : f32
    %2244 = arith.index_cast %2237 : i32 to index
    %2245 = memref.load %arg1[%2244] : memref<7424xf32, #tpu.memory_space<smem>>
    %2246 = arith.addf %2229, %2245 : f32
    %cst_1072 = arith.constant -8.000000e-02 : f32
    %2247 = arith.maximumf %2243, %cst_1072 : f32
    %cst_1073 = arith.constant 5.000000e-02 : f32
    %2248 = arith.minimumf %2247, %cst_1073 : f32
    %cst_1074 = arith.constant 2.000000e-02 : f32
    %2249 = arith.cmpf ogt, %2246, %cst_1074 : f32
    %cst_1075 = arith.constant 5.000000e-02 : f32
    %2250 = arith.select %2249, %cst_1075, %2246 : f32
    %cst_1076 = arith.constant -2.000000e-02 : f32
    %2251 = arith.cmpf olt, %2246, %cst_1076 : f32
    %cst_1077 = arith.constant -2.000000e-02 : f32
    %2252 = arith.select %2251, %cst_1077, %2250 : f32
    %c97_1078 = arith.constant 97 : index
    %2253 = memref.load %arg3[%c97_1078] : memref<101xf32, #tpu.memory_space<smem>>
    memref.store %2248, %arg3[%c97_1078] : memref<101xf32, #tpu.memory_space<smem>>
    %cst_1079 = arith.constant 7.750000e+02 : f32
    %2254 = arith.mulf %2252, %cst_1079 : f32
    %2255 = arith.fptosi %2254 : f32 to i32
    %cst_1080 = arith.constant 484.615387 : f32
    %2256 = arith.mulf %2248, %cst_1080 : f32
    %2257 = arith.fptosi %2256 : f32 to i32
    %c128_i32_1081 = arith.constant 128 : i32
    %2258 = arith.muli %2255, %c128_i32_1081 : i32
    %2259 = arith.addi %2258, %2257 : i32
    %c2216_i32_1082 = arith.constant 2216 : i32
    %2260 = arith.addi %2259, %c2216_i32_1082 : i32
    %2261 = arith.index_cast %2260 : i32 to index
    %2262 = memref.load %arg2[%2261] : memref<7424xf32, #tpu.memory_space<smem>>
    %c98 = arith.constant 98 : index
    %2263 = memref.load %arg4[%c98] : memref<101xf32, #tpu.memory_space<smem>>
    memref.store %2262, %arg4[%c98] : memref<101xf32, #tpu.memory_space<smem>>
    %2264 = arith.index_cast %2260 : i32 to index
    %2265 = memref.load %arg0[%2264] : memref<7424xf32, #tpu.memory_space<smem>>
    %2266 = arith.addf %2248, %2265 : f32
    %2267 = arith.index_cast %2260 : i32 to index
    %2268 = memref.load %arg1[%2267] : memref<7424xf32, #tpu.memory_space<smem>>
    %2269 = arith.addf %2252, %2268 : f32
    %cst_1083 = arith.constant -8.000000e-02 : f32
    %2270 = arith.maximumf %2266, %cst_1083 : f32
    %cst_1084 = arith.constant 5.000000e-02 : f32
    %2271 = arith.minimumf %2270, %cst_1084 : f32
    %cst_1085 = arith.constant 2.000000e-02 : f32
    %2272 = arith.cmpf ogt, %2269, %cst_1085 : f32
    %cst_1086 = arith.constant 5.000000e-02 : f32
    %2273 = arith.select %2272, %cst_1086, %2269 : f32
    %cst_1087 = arith.constant -2.000000e-02 : f32
    %2274 = arith.cmpf olt, %2269, %cst_1087 : f32
    %cst_1088 = arith.constant -2.000000e-02 : f32
    %2275 = arith.select %2274, %cst_1088, %2273 : f32
    %c98_1089 = arith.constant 98 : index
    %2276 = memref.load %arg3[%c98_1089] : memref<101xf32, #tpu.memory_space<smem>>
    memref.store %2271, %arg3[%c98_1089] : memref<101xf32, #tpu.memory_space<smem>>
    %cst_1090 = arith.constant 7.750000e+02 : f32
    %2277 = arith.mulf %2275, %cst_1090 : f32
    %2278 = arith.fptosi %2277 : f32 to i32
    %cst_1091 = arith.constant 484.615387 : f32
    %2279 = arith.mulf %2271, %cst_1091 : f32
    %2280 = arith.fptosi %2279 : f32 to i32
    %c128_i32_1092 = arith.constant 128 : i32
    %2281 = arith.muli %2278, %c128_i32_1092 : i32
    %2282 = arith.addi %2281, %2280 : i32
    %c2216_i32_1093 = arith.constant 2216 : i32
    %2283 = arith.addi %2282, %c2216_i32_1093 : i32
    %2284 = arith.index_cast %2283 : i32 to index
    %2285 = memref.load %arg2[%2284] : memref<7424xf32, #tpu.memory_space<smem>>
    %c99 = arith.constant 99 : index
    %2286 = memref.load %arg4[%c99] : memref<101xf32, #tpu.memory_space<smem>>
    memref.store %2285, %arg4[%c99] : memref<101xf32, #tpu.memory_space<smem>>
    %2287 = arith.index_cast %2283 : i32 to index
    %2288 = memref.load %arg0[%2287] : memref<7424xf32, #tpu.memory_space<smem>>
    %2289 = arith.addf %2271, %2288 : f32
    %2290 = arith.index_cast %2283 : i32 to index
    %2291 = memref.load %arg1[%2290] : memref<7424xf32, #tpu.memory_space<smem>>
    %2292 = arith.addf %2275, %2291 : f32
    %cst_1094 = arith.constant -8.000000e-02 : f32
    %2293 = arith.maximumf %2289, %cst_1094 : f32
    %cst_1095 = arith.constant 5.000000e-02 : f32
    %2294 = arith.minimumf %2293, %cst_1095 : f32
    %cst_1096 = arith.constant 2.000000e-02 : f32
    %2295 = arith.cmpf ogt, %2292, %cst_1096 : f32
    %cst_1097 = arith.constant 5.000000e-02 : f32
    %2296 = arith.select %2295, %cst_1097, %2292 : f32
    %cst_1098 = arith.constant -2.000000e-02 : f32
    %2297 = arith.cmpf olt, %2292, %cst_1098 : f32
    %cst_1099 = arith.constant -2.000000e-02 : f32
    %2298 = arith.select %2297, %cst_1099, %2296 : f32
    %c99_1100 = arith.constant 99 : index
    %2299 = memref.load %arg3[%c99_1100] : memref<101xf32, #tpu.memory_space<smem>>
    memref.store %2294, %arg3[%c99_1100] : memref<101xf32, #tpu.memory_space<smem>>
    %cst_1101 = arith.constant 7.750000e+02 : f32
    %2300 = arith.mulf %2298, %cst_1101 : f32
    %2301 = arith.fptosi %2300 : f32 to i32
    %cst_1102 = arith.constant 484.615387 : f32
    %2302 = arith.mulf %2294, %cst_1102 : f32
    %2303 = arith.fptosi %2302 : f32 to i32
    %c128_i32_1103 = arith.constant 128 : i32
    %2304 = arith.muli %2301, %c128_i32_1103 : i32
    %2305 = arith.addi %2304, %2303 : i32
    %c2216_i32_1104 = arith.constant 2216 : i32
    %2306 = arith.addi %2305, %c2216_i32_1104 : i32
    %2307 = arith.index_cast %2306 : i32 to index
    %2308 = memref.load %arg2[%2307] : memref<7424xf32, #tpu.memory_space<smem>>
    %c100 = arith.constant 100 : index
    %2309 = memref.load %arg4[%c100] : memref<101xf32, #tpu.memory_space<smem>>
    memref.store %2308, %arg4[%c100] : memref<101xf32, #tpu.memory_space<smem>>
    %2310 = arith.index_cast %2306 : i32 to index
    %2311 = memref.load %arg0[%2310] : memref<7424xf32, #tpu.memory_space<smem>>
    %2312 = arith.addf %2294, %2311 : f32
    %cst_1105 = arith.constant -8.000000e-02 : f32
    %2313 = arith.maximumf %2312, %cst_1105 : f32
    %cst_1106 = arith.constant 5.000000e-02 : f32
    %2314 = arith.minimumf %2313, %cst_1106 : f32
    %c100_1107 = arith.constant 100 : index
    %2315 = memref.load %arg3[%c100_1107] : memref<101xf32, #tpu.memory_space<smem>>
    memref.store %2314, %arg3[%c100_1107] : memref<101xf32, #tpu.memory_space<smem>>
    return
  }
}

</mosaic_0001>

<llo_original>
// kernel: spiking_net.1
$region0: #{spiking_net.1}
  #allocation0 [shape = 'u32[]', space=smem, size = 0x4, offset = 0x4, fixed_abs, tag = 'smem constant byte address 0x4 - core index']
  #allocation1 [shape = 'u32[72,128]{1,0:T(1,128)}', space=vmem, size = 0x9000, scoped, tag = 'internal scratch']
  %s0 = inlined_call_operand.vmem [shape: f32[7424], index: 0, kind: input, shape index: {}]
  %s1 = inlined_call_operand.vmem [shape: f32[7424], index: 1, kind: input, shape index: {}]
  %s2 = inlined_call_operand.vmem [shape: f32[7424], index: 2, kind: input, shape index: {}]
  %s3 = inlined_call_operand.hbm [shape: f32[101], index: 3, kind: output, shape index: {0}]
  %s4 = inlined_call_operand.hbm [shape: f32[101], index: 4, kind: output, shape index: {1}]
  %5 = xla_tuple %s3, %s4
  %s6 = sld [smem:[#allocation0]]
  $region42: #{spiking_net.1} parent=0
    _
  %s8 = ssub.s32 1, %s6
  %s9 = scalar_select 0, %s8, %s6
  $region1: #{spiking_net.1} parent=0
    #allocation2 [shape = 'u8[29696]{0}', space=smem, size = 0x7400, scoped, tag = 'input window, operand 0, single buffered']
    #allocation3 [shape = 's32[1]{0}', space=sflag, size = 0x4, scoped, tag = 'scoped memory for spiking_net.1']
    #allocation4 [shape = 's32[1]{0}', space=sflag, size = 0x4, scoped, tag = 'scoped memory for spiking_net.1']
    #allocation5 [shape = 'u8[29696]{0}', space=smem, size = 0x7400, scoped, tag = 'input window, operand 1, single buffered']
    #allocation6 [shape = 's32[1]{0}', space=sflag, size = 0x4, scoped, tag = 'scoped memory for spiking_net.1']
    #allocation7 [shape = 'u8[29696]{0}', space=smem, size = 0x7400, scoped, tag = 'input window, operand 2, single buffered']
    #allocation8 [shape = 'u8[512]{0}', space=smem, size = 0x200, scoped, tag = 'output window, operand 0, single buffered']
    #allocation9 [shape = 'u8[512]{0}', space=smem, size = 0x200, scoped, tag = 'output window, operand 1, single buffered']
    #allocation10 [shape = 's32[1]{0}', space=sflag, size = 0x4, scoped, tag = 'scoped memory for spiking_net.1']
    %10 = vsyncpa [#allocation4], 0
    %11 = vsyncpa [#allocation6], 0
    %12 = vsyncpa [#allocation3], 0
    %13 = vsyncpa [#allocation10], 0
    // Predicated region
    $region2: #{spiking_net.1} parent=1 // pred_check
      _
    $region3: #{spiking_net.1} parent=1 // pred_check_branch
      %15 = sbr.rel (0) target = $region5
    $region4: #{spiking_net.1} parent=1 // pred_region
      %17 = vsyncadd [#allocation4], 0
      %s19 = sshll.u32 %s0, 4
      %s20 = int_to_ptr.vmem [resolvable:$true] %s19
      %22 = dma.vmem_to_smem %s20, 928, [#allocation2], [#allocation4]
    $region5: #{spiking_net.1} parent=1 // pred_fallthru
      _
    // Predicated region
    $region6: #{spiking_net.1} parent=1 // pred_check
      _
    $region7: #{spiking_net.1} parent=1 // pred_check_branch
      %24 = sbr.rel (0) target = $region9
    $region8: #{spiking_net.1} parent=1 // pred_region
      %26 = vsyncadd [#allocation6], 0
      %s28 = sshll.u32 %s1, 4
      %s29 = int_to_ptr.vmem [resolvable:$true] %s28
      %31 = dma.vmem_to_smem %s29, 928, [#allocation5], [#allocation6]
    $region9: #{spiking_net.1} parent=1 // pred_fallthru
      _
    // Predicated region
    $region10: #{spiking_net.1} parent=1 // pred_check
      _
    $region11: #{spiking_net.1} parent=1 // pred_check_branch
      %33 = sbr.rel (0) target = $region13
    $region12: #{spiking_net.1} parent=1 // pred_region
      %35 = vsyncadd [#allocation6], 0
      %s37 = sshll.u32 %s2, 4
      %s38 = int_to_ptr.vmem [resolvable:$true] %s37
      %40 = dma.vmem_to_smem %s38, 928, [#allocation7], [#allocation6]
    $region13: #{spiking_net.1} parent=1 // pred_fallthru
      _
    // Predicated region
    $region14: #{spiking_net.1} parent=1 // pred_check
      _
    $region15: #{spiking_net.1} parent=1 // pred_check_branch
      %42 = sbr.rel (0) target = $region17
    $region16: #{spiking_net.1} parent=1 // pred_region
      %44 = dma.done [#allocation4], 928
    $region17: #{spiking_net.1} parent=1 // pred_fallthru
      _
    // Predicated region
    $region18: #{spiking_net.1} parent=1 // pred_check
      _
    $region19: #{spiking_net.1} parent=1 // pred_check_branch
      %46 = sbr.rel (0) target = $region21
    $region20: #{spiking_net.1} parent=1 // pred_region
      %48 = dma.done [#allocation6], 928
    $region21: #{spiking_net.1} parent=1 // pred_fallthru
      _
    // Predicated region
    $region22: #{spiking_net.1} parent=1 // pred_check
      _
    $region23: #{spiking_net.1} parent=1 // pred_check_branch
      %50 = sbr.rel (0) target = $region25
    $region24: #{spiking_net.1} parent=1 // pred_region
      %52 = dma.done [#allocation6], 928
    $region25: #{spiking_net.1} parent=1 // pred_fallthru
      _
    %53 = sfence
    %s54 = sld [smem:[#allocation7 + $0x8a8]]
    %s55 = scalar_lea.smem [#allocation9], 0
    %56 = sst [smem:[%s55]] %s54
    %s57 = sld [smem:[#allocation2 + $0x8a8]]
    %s58 = sadd.f32 %s57, 0.0
    %s59 = sld [smem:[#allocation5 + $0x8a8]]
    %s60 = sadd.f32 %s59, 0.0
    %s61 = smax.f32 %s58, -0.08
    %s62 = smin.f32 %s61, 0.05
    %p63 = scmp.gt.f32.partialorder %s60, 0.02
    %s64 = scalar_select %p63, 0.05, %s60
    %p65 = scmp.lt.f32.partialorder %s60, -0.02
    %s66 = scalar_select %p65, -0.02, %s64
    %s67 = scalar_lea.smem [#allocation8], 0
    %68 = sst [smem:[%s67]] %s62
    %s69 = smul.f32 %s66, 775.0
    %s70 = scvt.f32.s32.to.zero.pseudo %s69
    %s71 = smul.f32 %s62, 484.6154
    %s72 = scvt.f32.s32.to.zero.pseudo %s71
    %s73 = smul.u32 %s70, 128
    %s74 = sadd.s32 %s73, %s72
    %s75 = sadd.s32 %s74, 2216
    %s76 = sld [smem:[#allocation7 + %s75]]
    %s77 = scalar_lea.smem [#allocation9], 1
    %78 = sst [smem:[%s77]] %s76
    %s79 = sld [smem:[#allocation2 + %s75]]
    %s80 = sadd.f32 %s62, %s79
    %s81 = sld [smem:[#allocation5 + %s75]]
    %s82 = sadd.f32 %s66, %s81
    %s83 = smax.f32 %s80, -0.08
    %s84 = smin.f32 %s83, 0.05
    %p85 = scmp.gt.f32.partialorder %s82, 0.02
    %s86 = scalar_select %p85, 0.05, %s82
    %p87 = scmp.lt.f32.partialorder %s82, -0.02
    %s88 = scalar_select %p87, -0.02, %s86
    %s89 = scalar_lea.smem [#allocation8], 1
    %90 = sst [smem:[%s89]] %s84
    %s91 = smul.f32 %s88, 775.0
    %s92 = scvt.f32.s32.to.zero.pseudo %s91
    %s93 = smul.f32 %s84, 484.6154
    %s94 = scvt.f32.s32.to.zero.pseudo %s93
    %s95 = smul.u32 %s92, 128
    %s96 = sadd.s32 %s95, %s94
    %s97 = sadd.s32 %s96, 2216
    %s98 = sld [smem:[#allocation7 + %s97]]
    %s99 = scalar_lea.smem [#allocation9], 2
    %100 = sst [smem:[%s99]] %s98
    %s101 = sld [smem:[#allocation2 + %s97]]
    %s102 = sadd.f32 %s84, %s101
    %s103 = sld [smem:[#allocation5 + %s97]]
    %s104 = sadd.f32 %s88, %s103
    %s105 = smax.f32 %s102, -0.08
    %s106 = smin.f32 %s105, 0.05
    %p107 = scmp.gt.f32.partialorder %s104, 0.02
    %s108 = scalar_select %p107, 0.05, %s104
    %p109 = scmp.lt.f32.partialorder %s104, -0.02
    %s110 = scalar_select %p109, -0.02, %s108
    %s111 = scalar_lea.smem [#allocation8], 2
    %112 = sst [smem:[%s111]] %s106
    %s113 = smul.f32 %s110, 775.0
    %s114 = scvt.f32.s32.to.zero.pseudo %s113
    %s115 = smul.f32 %s106, 484.6154
    %s116 = scvt.f32.s32.to.zero.pseudo %s115
    %s117 = smul.u32 %s114, 128
    %s118 = sadd.s32 %s117, %s116
    %s119 = sadd.s32 %s118, 2216
    %s120 = sld [smem:[#allocation7 + %s119]]
    %s121 = scalar_lea.smem [#allocation9], 3
    %122 = sst [smem:[%s121]] %s120
    %s123 = sld [smem:[#allocation2 + %s119]]
    %s124 = sadd.f32 %s106, %s123
    %s125 = sld [smem:[#allocation5 + %s119]]
    %s126 = sadd.f32 %s110, %s125
    %s127 = smax.f32 %s124, -0.08
    %s128 = smin.f32 %s127, 0.05
    %p129 = scmp.gt.f32.partialorder %s126, 0.02
    %s130 = scalar_select %p129, 0.05, %s126
    %p131 = scmp.lt.f32.partialorder %s126, -0.02
    %s132 = scalar_select %p131, -0.02, %s130
    %s133 = scalar_lea.smem [#allocation8], 3
    %134 = sst [smem:[%s133]] %s128
    %s135 = smul.f32 %s132, 775.0
    %s136 = scvt.f32.s32.to.zero.pseudo %s135
    %s137 = smul.f32 %s128, 484.6154
    %s138 = scvt.f32.s32.to.zero.pseudo %s137
    %s139 = smul.u32 %s136, 128
    %s140 = sadd.s32 %s139, %s138
    %s141 = sadd.s32 %s140, 2216
    %s142 = sld [smem:[#allocation7 + %s141]]
    %s143 = scalar_lea.smem [#allocation9], 4
    %144 = sst [smem:[%s143]] %s142
    %s145 = sld [smem:[#allocation2 + %s141]]
    %s146 = sadd.f32 %s128, %s145
    %s147 = sld [smem:[#allocation5 + %s141]]
    %s148 = sadd.f32 %s132, %s147
    %s149 = smax.f32 %s146, -0.08
    %s150 = smin.f32 %s149, 0.05
    %p151 = scmp.gt.f32.partialorder %s148, 0.02
    %s152 = scalar_select %p151, 0.05, %s148
    %p153 = scmp.lt.f32.partialorder %s148, -0.02
    %s154 = scalar_select %p153, -0.02, %s152
    %s155 = scalar_lea.smem [#allocation8], 4
    %156 = sst [smem:[%s155]] %s150
    %s157 = smul.f32 %s154, 775.0
    %s158 = scvt.f32.s32.to.zero.pseudo %s157
    %s159 = smul.f32 %s150, 484.6154
    %s160 = scvt.f32.s32.to.zero.pseudo %s159
    %s161 = smul.u32 %s158, 128
    %s162 = sadd.s32 %s161, %s160
    %s163 = sadd.s32 %s162, 2216
    %s164 = sld [smem:[#allocation7 + %s163]]
    %s165 = scalar_lea.smem [#allocation9], 5
    %166 = sst [smem:[%s165]] %s164
    %s167 = sld [smem:[#allocation2 + %s163]]
    %s168 = sadd.f32 %s150, %s167
    %s169 = sld [smem:[#allocation5 + %s163]]
    %s170 = sadd.f32 %s154, %s169
    %s171 = smax.f32 %s168, -0.08
    %s172 = smin.f32 %s171, 0.05
    %p173 = scmp.gt.f32.partialorder %s170, 0.02
    %s174 = scalar_select %p173, 0.05, %s170
    %p175 = scmp.lt.f32.partialorder %s170, -0.02
    %s176 = scalar_select %p175, -0.02, %s174
    %s177 = scalar_lea.smem [#allocation8], 5
    %178 = sst [smem:[%s177]] %s172
    %s179 = smul.f32 %s176, 775.0
    %s180 = scvt.f32.s32.to.zero.pseudo %s179
    %s181 = smul.f32 %s172, 484.6154
    %s182 = scvt.f32.s32.to.zero.pseudo %s181
    %s183 = smul.u32 %s180, 128
    %s184 = sadd.s32 %s183, %s182
    %s185 = sadd.s32 %s184, 2216
    %s186 = sld [smem:[#allocation7 + %s185]]
    %s187 = scalar_lea.smem [#allocation9], 6
    %188 = sst [smem:[%s187]] %s186
    %s189 = sld [smem:[#allocation2 + %s185]]
    %s190 = sadd.f32 %s172, %s189
    %s191 = sld [smem:[#allocation5 + %s185]]
    %s192 = sadd.f32 %s176, %s191
    %s193 = smax.f32 %s190, -0.08
    %s194 = smin.f32 %s193, 0.05
    %p195 = scmp.gt.f32.partialorder %s192, 0.02
    %s196 = scalar_select %p195, 0.05, %s192
    %p197 = scmp.lt.f32.partialorder %s192, -0.02
    %s198 = scalar_select %p197, -0.02, %s196
    %s199 = scalar_lea.smem [#allocation8], 6
    %200 = sst [smem:[%s199]] %s194
    %s201 = smul.f32 %s198, 775.0
    %s202 = scvt.f32.s32.to.zero.pseudo %s201
    %s203 = smul.f32 %s194, 484.6154
    %s204 = scvt.f32.s32.to.zero.pseudo %s203
    %s205 = smul.u32 %s202, 128
    %s206 = sadd.s32 %s205, %s204
    %s207 = sadd.s32 %s206, 2216
    %s208 = sld [smem:[#allocation7 + %s207]]
    %s209 = scalar_lea.smem [#allocation9], 7
    %210 = sst [smem:[%s209]] %s208
    %s211 = sld [smem:[#allocation2 + %s207]]
    %s212 = sadd.f32 %s194, %s211
    %s213 = sld [smem:[#allocation5 + %s207]]
    %s214 = sadd.f32 %s198, %s213
    %s215 = smax.f32 %s212, -0.08
    %s216 = smin.f32 %s215, 0.05
    %p217 = scmp.gt.f32.partialorder %s214, 0.02
    %s218 = scalar_select %p217, 0.05, %s214
    %p219 = scmp.lt.f32.partialorder %s214, -0.02
    %s220 = scalar_select %p219, -0.02, %s218
    %s221 = scalar_lea.smem [#allocation8], 7
    %222 = sst [smem:[%s221]] %s216
    %s223 = smul.f32 %s220, 775.0
    %s224 = scvt.f32.s32.to.zero.pseudo %s223
    %s225 = smul.f32 %s216, 484.6154
    %s226 = scvt.f32.s32.to.zero.pseudo %s225
    %s227 = smul.u32 %s224, 128
    %s228 = sadd.s32 %s227, %s226
    %s229 = sadd.s32 %s228, 2216
    %s230 = sld [smem:[#allocation7 + %s229]]
    %s231 = scalar_lea.smem [#allocation9], 8
    %232 = sst [smem:[%s231]] %s230
    %s233 = sld [smem:[#allocation2 + %s229]]
    %s234 = sadd.f32 %s216, %s233
    %s235 = sld [smem:[#allocation5 + %s229]]
    %s236 = sadd.f32 %s220, %s235
    %s237 = smax.f32 %s234, -0.08
    %s238 = smin.f32 %s237, 0.05
    %p239 = scmp.gt.f32.partialorder %s236, 0.02
    %s240 = scalar_select %p239, 0.05, %s236
    %p241 = scmp.lt.f32.partialorder %s236, -0.02
    %s242 = scalar_select %p241, -0.02, %s240
    %s243 = scalar_lea.smem [#allocation8], 8
    %244 = sst [smem:[%s243]] %s238
    %s245 = smul.f32 %s242, 775.0
    %s246 = scvt.f32.s32.to.zero.pseudo %s245
    %s247 = smul.f32 %s238, 484.6154
    %s248 = scvt.f32.s32.to.zero.pseudo %s247
    %s249 = smul.u32 %s246, 128
    %s250 = sadd.s32 %s249, %s248
    %s251 = sadd.s32 %s250, 2216
    %s252 = sld [smem:[#allocation7 + %s251]]
    %s253 = scalar_lea.smem [#allocation9], 9
    %254 = sst [smem:[%s253]] %s252
    %s255 = sld [smem:[#allocation2 + %s251]]
    %s256 = sadd.f32 %s238, %s255
    %s257 = sld [smem:[#allocation5 + %s251]]
    %s258 = sadd.f32 %s242, %s257
    %s259 = smax.f32 %s256, -0.08
    %s260 = smin.f32 %s259, 0.05
    %p261 = scmp.gt.f32.partialorder %s258, 0.02
    %s262 = scalar_select %p261, 0.05, %s258
    %p263 = scmp.lt.f32.partialorder %s258, -0.02
    %s264 = scalar_select %p263, -0.02, %s262
    %s265 = scalar_lea.smem [#allocation8], 9
    %266 = sst [smem:[%s265]] %s260
    %s267 = smul.f32 %s264, 775.0
    %s268 = scvt.f32.s32.to.zero.pseudo %s267
    %s269 = smul.f32 %s260, 484.6154
    %s270 = scvt.f32.s32.to.zero.pseudo %s269
    %s271 = smul.u32 %s268, 128
    %s272 = sadd.s32 %s271, %s270
    %s273 = sadd.s32 %s272, 2216
    %s274 = sld [smem:[#allocation7 + %s273]]
    %s275 = scalar_lea.smem [#allocation9], 10
    %276 = sst [smem:[%s275]] %s274
    %s277 = sld [smem:[#allocation2 + %s273]]
    %s278 = sadd.f32 %s260, %s277
    %s279 = sld [smem:[#allocation5 + %s273]]
    %s280 = sadd.f32 %s264, %s279
    %s281 = smax.f32 %s278, -0.08
    %s282 = smin.f32 %s281, 0.05
    %p283 = scmp.gt.f32.partialorder %s280, 0.02
    %s284 = scalar_select %p283, 0.05, %s280
    %p285 = scmp.lt.f32.partialorder %s280, -0.02
    %s286 = scalar_select %p285, -0.02, %s284
    %s287 = scalar_lea.smem [#allocation8], 10
    %288 = sst [smem:[%s287]] %s282
    %s289 = smul.f32 %s286, 775.0
    %s290 = scvt.f32.s32.to.zero.pseudo %s289
    %s291 = smul.f32 %s282, 484.6154
    %s292 = scvt.f32.s32.to.zero.pseudo %s291
    %s293 = smul.u32 %s290, 128
    %s294 = sadd.s32 %s293, %s292
    %s295 = sadd.s32 %s294, 2216
    %s296 = sld [smem:[#allocation7 + %s295]]
    %s297 = scalar_lea.smem [#allocation9], 11
    %298 = sst [smem:[%s297]] %s296
    %s299 = sld [smem:[#allocation2 + %s295]]
    %s300 = sadd.f32 %s282, %s299
    %s301 = sld [smem:[#allocation5 + %s295]]
    %s302 = sadd.f32 %s286, %s301
    %s303 = smax.f32 %s300, -0.08
    %s304 = smin.f32 %s303, 0.05
    %p305 = scmp.gt.f32.partialorder %s302, 0.02
    %s306 = scalar_select %p305, 0.05, %s302
    %p307 = scmp.lt.f32.partialorder %s302, -0.02
    %s308 = scalar_select %p307, -0.02, %s306
    %s309 = scalar_lea.smem [#allocation8], 11
    %310 = sst [smem:[%s309]] %s304
    %s311 = smul.f32 %s308, 775.0
    %s312 = scvt.f32.s32.to.zero.pseudo %s311
    %s313 = smul.f32 %s304, 484.6154
    %s314 = scvt.f32.s32.to.zero.pseudo %s313
    %s315 = smul.u32 %s312, 128
    %s316 = sadd.s32 %s315, %s314
    %s317 = sadd.s32 %s316, 2216
    %s318 = sld [smem:[#allocation7 + %s317]]
    %s319 = scalar_lea.smem [#allocation9], 12
    %320 = sst [smem:[%s319]] %s318
    %s321 = sld [smem:[#allocation2 + %s317]]
    %s322 = sadd.f32 %s304, %s321
    %s323 = sld [smem:[#allocation5 + %s317]]
    %s324 = sadd.f32 %s308, %s323
    %s325 = smax.f32 %s322, -0.08
    %s326 = smin.f32 %s325, 0.05
    %p327 = scmp.gt.f32.partialorder %s324, 0.02
    %s328 = scalar_select %p327, 0.05, %s324
    %p329 = scmp.lt.f32.partialorder %s324, -0.02
    %s330 = scalar_select %p329, -0.02, %s328
    %s331 = scalar_lea.smem [#allocation8], 12
    %332 = sst [smem:[%s331]] %s326
    %s333 = smul.f32 %s330, 775.0
    %s334 = scvt.f32.s32.to.zero.pseudo %s333
    %s335 = smul.f32 %s326, 484.6154
    %s336 = scvt.f32.s32.to.zero.pseudo %s335
    %s337 = smul.u32 %s334, 128
    %s338 = sadd.s32 %s337, %s336
    %s339 = sadd.s32 %s338, 2216
    %s340 = sld [smem:[#allocation7 + %s339]]
    %s341 = scalar_lea.smem [#allocation9], 13
    %342 = sst [smem:[%s341]] %s340
    %s343 = sld [smem:[#allocation2 + %s339]]
    %s344 = sadd.f32 %s326, %s343
    %s345 = sld [smem:[#allocation5 + %s339]]
    %s346 = sadd.f32 %s330, %s345
    %s347 = smax.f32 %s344, -0.08
    %s348 = smin.f32 %s347, 0.05
    %p349 = scmp.gt.f32.partialorder %s346, 0.02
    %s350 = scalar_select %p349, 0.05, %s346
    %p351 = scmp.lt.f32.partialorder %s346, -0.02
    %s352 = scalar_select %p351, -0.02, %s350
    %s353 = scalar_lea.smem [#allocation8], 13
    %354 = sst [smem:[%s353]] %s348
    %s355 = smul.f32 %s352, 775.0
    %s356 = scvt.f32.s32.to.zero.pseudo %s355
    %s357 = smul.f32 %s348, 484.6154
    %s358 = scvt.f32.s32.to.zero.pseudo %s357
    %s359 = smul.u32 %s356, 128
    %s360 = sadd.s32 %s359, %s358
    %s361 = sadd.s32 %s360, 2216
    %s362 = sld [smem:[#allocation7 + %s361]]
    %s363 = scalar_lea.smem [#allocation9], 14
    %364 = sst [smem:[%s363]] %s362
    %s365 = sld [smem:[#allocation2 + %s361]]
    %s366 = sadd.f32 %s348, %s365
    %s367 = sld [smem:[#allocation5 + %s361]]
    %s368 = sadd.f32 %s352, %s367
    %s369 = smax.f32 %s366, -0.08
    %s370 = smin.f32 %s369, 0.05
    %p371 = scmp.gt.f32.partialorder %s368, 0.02
    %s372 = scalar_select %p371, 0.05, %s368
    %p373 = scmp.lt.f32.partialorder %s368, -0.02
    %s374 = scalar_select %p373, -0.02, %s372
    %s375 = scalar_lea.smem [#allocation8], 14
    %376 = sst [smem:[%s375]] %s370
    %s377 = smul.f32 %s374, 775.0
    %s378 = scvt.f32.s32.to.zero.pseudo %s377
    %s379 = smul.f32 %s370, 484.6154
    %s380 = scvt.f32.s32.to.zero.pseudo %s379
    %s381 = smul.u32 %s378, 128
    %s382 = sadd.s32 %s381, %s380
    %s383 = sadd.s32 %s382, 2216
    %s384 = sld [smem:[#allocation7 + %s383]]
    %s385 = scalar_lea.smem [#allocation9], 15
    %386 = sst [smem:[%s385]] %s384
    %s387 = sld [smem:[#allocation2 + %s383]]
    %s388 = sadd.f32 %s370, %s387
    %s389 = sld [smem:[#allocation5 + %s383]]
    %s390 = sadd.f32 %s374, %s389
    %s391 = smax.f32 %s388, -0.08
    %s392 = smin.f32 %s391, 0.05
    %p393 = scmp.gt.f32.partialorder %s390, 0.02
    %s394 = scalar_select %p393, 0.05, %s390
    %p395 = scmp.lt.f32.partialorder %s390, -0.02
    %s396 = scalar_select %p395, -0.02, %s394
    %s397 = scalar_lea.smem [#allocation8], 15
    %398 = sst [smem:[%s397]] %s392
    %s399 = smul.f32 %s396, 775.0
    %s400 = scvt.f32.s32.to.zero.pseudo %s399
    %s401 = smul.f32 %s392, 484.6154
    %s402 = scvt.f32.s32.to.zero.pseudo %s401
    %s403 = smul.u32 %s400, 128
    %s404 = sadd.s32 %s403, %s402
    %s405 = sadd.s32 %s404, 2216
    %s406 = sld [smem:[#allocation7 + %s405]]
    %s407 = scalar_lea.smem [#allocation9], 16
    %408 = sst [smem:[%s407]] %s406
    %s409 = sld [smem:[#allocation2 + %s405]]
    %s410 = sadd.f32 %s392, %s409
    %s411 = sld [smem:[#allocation5 + %s405]]
    %s412 = sadd.f32 %s396, %s411
    %s413 = smax.f32 %s410, -0.08
    %s414 = smin.f32 %s413, 0.05
    %p415 = scmp.gt.f32.partialorder %s412, 0.02
    %s416 = scalar_select %p415, 0.05, %s412
    %p417 = scmp.lt.f32.partialorder %s412, -0.02
    %s418 = scalar_select %p417, -0.02, %s416
    %s419 = scalar_lea.smem [#allocation8], 16
    %420 = sst [smem:[%s419]] %s414
    %s421 = smul.f32 %s418, 775.0
    %s422 = scvt.f32.s32.to.zero.pseudo %s421
    %s423 = smul.f32 %s414, 484.6154
    %s424 = scvt.f32.s32.to.zero.pseudo %s423
    %s425 = smul.u32 %s422, 128
    %s426 = sadd.s32 %s425, %s424
    %s427 = sadd.s32 %s426, 2216
    %s428 = sld [smem:[#allocation7 + %s427]]
    %s429 = scalar_lea.smem [#allocation9], 17
    %430 = sst [smem:[%s429]] %s428
    %s431 = sld [smem:[#allocation2 + %s427]]
    %s432 = sadd.f32 %s414, %s431
    %s433 = sld [smem:[#allocation5 + %s427]]
    %s434 = sadd.f32 %s418, %s433
    %s435 = smax.f32 %s432, -0.08
    %s436 = smin.f32 %s435, 0.05
    %p437 = scmp.gt.f32.partialorder %s434, 0.02
    %s438 = scalar_select %p437, 0.05, %s434
    %p439 = scmp.lt.f32.partialorder %s434, -0.02
    %s440 = scalar_select %p439, -0.02, %s438
    %s441 = scalar_lea.smem [#allocation8], 17
    %442 = sst [smem:[%s441]] %s436
    %s443 = smul.f32 %s440, 775.0
    %s444 = scvt.f32.s32.to.zero.pseudo %s443
    %s445 = smul.f32 %s436, 484.6154
    %s446 = scvt.f32.s32.to.zero.pseudo %s445
    %s447 = smul.u32 %s444, 128
    %s448 = sadd.s32 %s447, %s446
    %s449 = sadd.s32 %s448, 2216
    %s450 = sld [smem:[#allocation7 + %s449]]
    %s451 = scalar_lea.smem [#allocation9], 18
    %452 = sst [smem:[%s451]] %s450
    %s453 = sld [smem:[#allocation2 + %s449]]
    %s454 = sadd.f32 %s436, %s453
    %s455 = sld [smem:[#allocation5 + %s449]]
    %s456 = sadd.f32 %s440, %s455
    %s457 = smax.f32 %s454, -0.08
    %s458 = smin.f32 %s457, 0.05
    %p459 = scmp.gt.f32.partialorder %s456, 0.02
    %s460 = scalar_select %p459, 0.05, %s456
    %p461 = scmp.lt.f32.partialorder %s456, -0.02
    %s462 = scalar_select %p461, -0.02, %s460
    %s463 = scalar_lea.smem [#allocation8], 18
    %464 = sst [smem:[%s463]] %s458
    %s465 = smul.f32 %s462, 775.0
    %s466 = scvt.f32.s32.to.zero.pseudo %s465
    %s467 = smul.f32 %s458, 484.6154
    %s468 = scvt.f32.s32.to.zero.pseudo %s467
    %s469 = smul.u32 %s466, 128
    %s470 = sadd.s32 %s469, %s468
    %s471 = sadd.s32 %s470, 2216
    %s472 = sld [smem:[#allocation7 + %s471]]
    %s473 = scalar_lea.smem [#allocation9], 19
    %474 = sst [smem:[%s473]] %s472
    %s475 = sld [smem:[#allocation2 + %s471]]
    %s476 = sadd.f32 %s458, %s475
    %s477 = sld [smem:[#allocation5 + %s471]]
    %s478 = sadd.f32 %s462, %s477
    %s479 = smax.f32 %s476, -0.08
    %s480 = smin.f32 %s479, 0.05
    %p481 = scmp.gt.f32.partialorder %s478, 0.02
    %s482 = scalar_select %p481, 0.05, %s478
    %p483 = scmp.lt.f32.partialorder %s478, -0.02
    %s484 = scalar_select %p483, -0.02, %s482
    %s485 = scalar_lea.smem [#allocation8], 19
    %486 = sst [smem:[%s485]] %s480
    %s487 = smul.f32 %s484, 775.0
    %s488 = scvt.f32.s32.to.zero.pseudo %s487
    %s489 = smul.f32 %s480, 484.6154
    %s490 = scvt.f32.s32.to.zero.pseudo %s489
    %s491 = smul.u32 %s488, 128
    %s492 = sadd.s32 %s491, %s490
    %s493 = sadd.s32 %s492, 2216
    %s494 = sld [smem:[#allocation7 + %s493]]
    %s495 = scalar_lea.smem [#allocation9], 20
    %496 = sst [smem:[%s495]] %s494
    %s497 = sld [smem:[#allocation2 + %s493]]
    %s498 = sadd.f32 %s480, %s497
    %s499 = sld [smem:[#allocation5 + %s493]]
    %s500 = sadd.f32 %s484, %s499
    %s501 = smax.f32 %s498, -0.08
    %s502 = smin.f32 %s501, 0.05
    %p503 = scmp.gt.f32.partialorder %s500, 0.02
    %s504 = scalar_select %p503, 0.05, %s500
    %p505 = scmp.lt.f32.partialorder %s500, -0.02
    %s506 = scalar_select %p505, -0.02, %s504
    %s507 = scalar_lea.smem [#allocation8], 20
    %508 = sst [smem:[%s507]] %s502
    %s509 = smul.f32 %s506, 775.0
    %s510 = scvt.f32.s32.to.zero.pseudo %s509
    %s511 = smul.f32 %s502, 484.6154
    %s512 = scvt.f32.s32.to.zero.pseudo %s511
    %s513 = smul.u32 %s510, 128
    %s514 = sadd.s32 %s513, %s512
    %s515 = sadd.s32 %s514, 2216
    %s516 = sld [smem:[#allocation7 + %s515]]
    %s517 = scalar_lea.smem [#allocation9], 21
    %518 = sst [smem:[%s517]] %s516
    %s519 = sld [smem:[#allocation2 + %s515]]
    %s520 = sadd.f32 %s502, %s519
    %s521 = sld [smem:[#allocation5 + %s515]]
    %s522 = sadd.f32 %s506, %s521
    %s523 = smax.f32 %s520, -0.08
    %s524 = smin.f32 %s523, 0.05
    %p525 = scmp.gt.f32.partialorder %s522, 0.02
    %s526 = scalar_select %p525, 0.05, %s522
    %p527 = scmp.lt.f32.partialorder %s522, -0.02
    %s528 = scalar_select %p527, -0.02, %s526
    %s529 = scalar_lea.smem [#allocation8], 21
    %530 = sst [smem:[%s529]] %s524
    %s531 = smul.f32 %s528, 775.0
    %s532 = scvt.f32.s32.to.zero.pseudo %s531
    %s533 = smul.f32 %s524, 484.6154
    %s534 = scvt.f32.s32.to.zero.pseudo %s533
    %s535 = smul.u32 %s532, 128
    %s536 = sadd.s32 %s535, %s534
    %s537 = sadd.s32 %s536, 2216
    %s538 = sld [smem:[#allocation7 + %s537]]
    %s539 = scalar_lea.smem [#allocation9], 22
    %540 = sst [smem:[%s539]] %s538
    %s541 = sld [smem:[#allocation2 + %s537]]
    %s542 = sadd.f32 %s524, %s541
    %s543 = sld [smem:[#allocation5 + %s537]]
    %s544 = sadd.f32 %s528, %s543
    %s545 = smax.f32 %s542, -0.08
    %s546 = smin.f32 %s545, 0.05
    %p547 = scmp.gt.f32.partialorder %s544, 0.02
    %s548 = scalar_select %p547, 0.05, %s544
    %p549 = scmp.lt.f32.partialorder %s544, -0.02
    %s550 = scalar_select %p549, -0.02, %s548
    %s551 = scalar_lea.smem [#allocation8], 22
    %552 = sst [smem:[%s551]] %s546
    %s553 = smul.f32 %s550, 775.0
    %s554 = scvt.f32.s32.to.zero.pseudo %s553
    %s555 = smul.f32 %s546, 484.6154
    %s556 = scvt.f32.s32.to.zero.pseudo %s555
    %s557 = smul.u32 %s554, 128
    %s558 = sadd.s32 %s557, %s556
    %s559 = sadd.s32 %s558, 2216
    %s560 = sld [smem:[#allocation7 + %s559]]
    %s561 = scalar_lea.smem [#allocation9], 23
    %562 = sst [smem:[%s561]] %s560
    %s563 = sld [smem:[#allocation2 + %s559]]
    %s564 = sadd.f32 %s546, %s563
    %s565 = sld [smem:[#allocation5 + %s559]]
    %s566 = sadd.f32 %s550, %s565
    %s567 = smax.f32 %s564, -0.08
    %s568 = smin.f32 %s567, 0.05
    %p569 = scmp.gt.f32.partialorder %s566, 0.02
    %s570 = scalar_select %p569, 0.05, %s566
    %p571 = scmp.lt.f32.partialorder %s566, -0.02
    %s572 = scalar_select %p571, -0.02, %s570
    %s573 = scalar_lea.smem [#allocation8], 23
    %574 = sst [smem:[%s573]] %s568
    %s575 = smul.f32 %s572, 775.0
    %s576 = scvt.f32.s32.to.zero.pseudo %s575
    %s577 = smul.f32 %s568, 484.6154
    %s578 = scvt.f32.s32.to.zero.pseudo %s577
    %s579 = smul.u32 %s576, 128
    %s580 = sadd.s32 %s579, %s578
    %s581 = sadd.s32 %s580, 2216
    %s582 = sld [smem:[#allocation7 + %s581]]
    %s583 = scalar_lea.smem [#allocation9], 24
    %584 = sst [smem:[%s583]] %s582
    %s585 = sld [smem:[#allocation2 + %s581]]
    %s586 = sadd.f32 %s568, %s585
    %s587 = sld [smem:[#allocation5 + %s581]]
    %s588 = sadd.f32 %s572, %s587
    %s589 = smax.f32 %s586, -0.08
    %s590 = smin.f32 %s589, 0.05
    %p591 = scmp.gt.f32.partialorder %s588, 0.02
    %s592 = scalar_select %p591, 0.05, %s588
    %p593 = scmp.lt.f32.partialorder %s588, -0.02
    %s594 = scalar_select %p593, -0.02, %s592
    %s595 = scalar_lea.smem [#allocation8], 24
    %596 = sst [smem:[%s595]] %s590
    %s597 = smul.f32 %s594, 775.0
    %s598 = scvt.f32.s32.to.zero.pseudo %s597
    %s599 = smul.f32 %s590, 484.6154
    %s600 = scvt.f32.s32.to.zero.pseudo %s599
    %s601 = smul.u32 %s598, 128
    %s602 = sadd.s32 %s601, %s600
    %s603 = sadd.s32 %s602, 2216
    %s604 = sld [smem:[#allocation7 + %s603]]
    %s605 = scalar_lea.smem [#allocation9], 25
    %606 = sst [smem:[%s605]] %s604
    %s607 = sld [smem:[#allocation2 + %s603]]
    %s608 = sadd.f32 %s590, %s607
    %s609 = sld [smem:[#allocation5 + %s603]]
    %s610 = sadd.f32 %s594, %s609
    %s611 = smax.f32 %s608, -0.08
    %s612 = smin.f32 %s611, 0.05
    %p613 = scmp.gt.f32.partialorder %s610, 0.02
    %s614 = scalar_select %p613, 0.05, %s610
    %p615 = scmp.lt.f32.partialorder %s610, -0.02
    %s616 = scalar_select %p615, -0.02, %s614
    %s617 = scalar_lea.smem [#allocation8], 25
    %618 = sst [smem:[%s617]] %s612
    %s619 = smul.f32 %s616, 775.0
    %s620 = scvt.f32.s32.to.zero.pseudo %s619
    %s621 = smul.f32 %s612, 484.6154
    %s622 = scvt.f32.s32.to.zero.pseudo %s621
    %s623 = smul.u32 %s620, 128
    %s624 = sadd.s32 %s623, %s622
    %s625 = sadd.s32 %s624, 2216
    %s626 = sld [smem:[#allocation7 + %s625]]
    %s627 = scalar_lea.smem [#allocation9], 26
    %628 = sst [smem:[%s627]] %s626
    %s629 = sld [smem:[#allocation2 + %s625]]
    %s630 = sadd.f32 %s612, %s629
    %s631 = sld [smem:[#allocation5 + %s625]]
    %s632 = sadd.f32 %s616, %s631
    %s633 = smax.f32 %s630, -0.08
    %s634 = smin.f32 %s633, 0.05
    %p635 = scmp.gt.f32.partialorder %s632, 0.02
    %s636 = scalar_select %p635, 0.05, %s632
    %p637 = scmp.lt.f32.partialorder %s632, -0.02
    %s638 = scalar_select %p637, -0.02, %s636
    %s639 = scalar_lea.smem [#allocation8], 26
    %640 = sst [smem:[%s639]] %s634
    %s641 = smul.f32 %s638, 775.0
    %s642 = scvt.f32.s32.to.zero.pseudo %s641
    %s643 = smul.f32 %s634, 484.6154
    %s644 = scvt.f32.s32.to.zero.pseudo %s643
    %s645 = smul.u32 %s642, 128
    %s646 = sadd.s32 %s645, %s644
    %s647 = sadd.s32 %s646, 2216
    %s648 = sld [smem:[#allocation7 + %s647]]
    %s649 = scalar_lea.smem [#allocation9], 27
    %650 = sst [smem:[%s649]] %s648
    %s651 = sld [smem:[#allocation2 + %s647]]
    %s652 = sadd.f32 %s634, %s651
    %s653 = sld [smem:[#allocation5 + %s647]]
    %s654 = sadd.f32 %s638, %s653
    %s655 = smax.f32 %s652, -0.08
    %s656 = smin.f32 %s655, 0.05
    %p657 = scmp.gt.f32.partialorder %s654, 0.02
    %s658 = scalar_select %p657, 0.05, %s654
    %p659 = scmp.lt.f32.partialorder %s654, -0.02
    %s660 = scalar_select %p659, -0.02, %s658
    %s661 = scalar_lea.smem [#allocation8], 27
    %662 = sst [smem:[%s661]] %s656
    %s663 = smul.f32 %s660, 775.0
    %s664 = scvt.f32.s32.to.zero.pseudo %s663
    %s665 = smul.f32 %s656, 484.6154
    %s666 = scvt.f32.s32.to.zero.pseudo %s665
    %s667 = smul.u32 %s664, 128
    %s668 = sadd.s32 %s667, %s666
    %s669 = sadd.s32 %s668, 2216
    %s670 = sld [smem:[#allocation7 + %s669]]
    %s671 = scalar_lea.smem [#allocation9], 28
    %672 = sst [smem:[%s671]] %s670
    %s673 = sld [smem:[#allocation2 + %s669]]
    %s674 = sadd.f32 %s656, %s673
    %s675 = sld [smem:[#allocation5 + %s669]]
    %s676 = sadd.f32 %s660, %s675
    %s677 = smax.f32 %s674, -0.08
    %s678 = smin.f32 %s677, 0.05
    %p679 = scmp.gt.f32.partialorder %s676, 0.02
    %s680 = scalar_select %p679, 0.05, %s676
    %p681 = scmp.lt.f32.partialorder %s676, -0.02
    %s682 = scalar_select %p681, -0.02, %s680
    %s683 = scalar_lea.smem [#allocation8], 28
    %684 = sst [smem:[%s683]] %s678
    %s685 = smul.f32 %s682, 775.0
    %s686 = scvt.f32.s32.to.zero.pseudo %s685
    %s687 = smul.f32 %s678, 484.6154
    %s688 = scvt.f32.s32.to.zero.pseudo %s687
    %s689 = smul.u32 %s686, 128
    %s690 = sadd.s32 %s689, %s688
    %s691 = sadd.s32 %s690, 2216
    %s692 = sld [smem:[#allocation7 + %s691]]
    %s693 = scalar_lea.smem [#allocation9], 29
    %694 = sst [smem:[%s693]] %s692
    %s695 = sld [smem:[#allocation2 + %s691]]
    %s696 = sadd.f32 %s678, %s695
    %s697 = sld [smem:[#allocation5 + %s691]]
    %s698 = sadd.f32 %s682, %s697
    %s699 = smax.f32 %s696, -0.08
    %s700 = smin.f32 %s699, 0.05
    %p701 = scmp.gt.f32.partialorder %s698, 0.02
    %s702 = scalar_select %p701, 0.05, %s698
    %p703 = scmp.lt.f32.partialorder %s698, -0.02
    %s704 = scalar_select %p703, -0.02, %s702
    %s705 = scalar_lea.smem [#allocation8], 29
    %706 = sst [smem:[%s705]] %s700
    %s707 = smul.f32 %s704, 775.0
    %s708 = scvt.f32.s32.to.zero.pseudo %s707
    %s709 = smul.f32 %s700, 484.6154
    %s710 = scvt.f32.s32.to.zero.pseudo %s709
    %s711 = smul.u32 %s708, 128
    %s712 = sadd.s32 %s711, %s710
    %s713 = sadd.s32 %s712, 2216
    %s714 = sld [smem:[#allocation7 + %s713]]
    %s715 = scalar_lea.smem [#allocation9], 30
    %716 = sst [smem:[%s715]] %s714
    %s717 = sld [smem:[#allocation2 + %s713]]
    %s718 = sadd.f32 %s700, %s717
    %s719 = sld [smem:[#allocation5 + %s713]]
    %s720 = sadd.f32 %s704, %s719
    %s721 = smax.f32 %s718, -0.08
    %s722 = smin.f32 %s721, 0.05
    %p723 = scmp.gt.f32.partialorder %s720, 0.02
    %s724 = scalar_select %p723, 0.05, %s720
    %p725 = scmp.lt.f32.partialorder %s720, -0.02
    %s726 = scalar_select %p725, -0.02, %s724
    %s727 = scalar_lea.smem [#allocation8], 30
    %728 = sst [smem:[%s727]] %s722
    %s729 = smul.f32 %s726, 775.0
    %s730 = scvt.f32.s32.to.zero.pseudo %s729
    %s731 = smul.f32 %s722, 484.6154
    %s732 = scvt.f32.s32.to.zero.pseudo %s731
    %s733 = smul.u32 %s730, 128
    %s734 = sadd.s32 %s733, %s732
    %s735 = sadd.s32 %s734, 2216
    %s736 = sld [smem:[#allocation7 + %s735]]
    %s737 = scalar_lea.smem [#allocation9], 31
    %738 = sst [smem:[%s737]] %s736
    %s739 = sld [smem:[#allocation2 + %s735]]
    %s740 = sadd.f32 %s722, %s739
    %s741 = sld [smem:[#allocation5 + %s735]]
    %s742 = sadd.f32 %s726, %s741
    %s743 = smax.f32 %s740, -0.08
    %s744 = smin.f32 %s743, 0.05
    %p745 = scmp.gt.f32.partialorder %s742, 0.02
    %s746 = scalar_select %p745, 0.05, %s742
    %p747 = scmp.lt.f32.partialorder %s742, -0.02
    %s748 = scalar_select %p747, -0.02, %s746
    %s749 = scalar_lea.smem [#allocation8], 31
    %750 = sst [smem:[%s749]] %s744
    %s751 = smul.f32 %s748, 775.0
    %s752 = scvt.f32.s32.to.zero.pseudo %s751
    %s753 = smul.f32 %s744, 484.6154
    %s754 = scvt.f32.s32.to.zero.pseudo %s753
    %s755 = smul.u32 %s752, 128
    %s756 = sadd.s32 %s755, %s754
    %s757 = sadd.s32 %s756, 2216
    %s758 = sld [smem:[#allocation7 + %s757]]
    %s759 = scalar_lea.smem [#allocation9], 32
    %760 = sst [smem:[%s759]] %s758
    %s761 = sld [smem:[#allocation2 + %s757]]
    %s762 = sadd.f32 %s744, %s761
    %s763 = sld [smem:[#allocation5 + %s757]]
    %s764 = sadd.f32 %s748, %s763
    %s765 = smax.f32 %s762, -0.08
    %s766 = smin.f32 %s765, 0.05
    %p767 = scmp.gt.f32.partialorder %s764, 0.02
    %s768 = scalar_select %p767, 0.05, %s764
    %p769 = scmp.lt.f32.partialorder %s764, -0.02
    %s770 = scalar_select %p769, -0.02, %s768
    %s771 = scalar_lea.smem [#allocation8], 32
    %772 = sst [smem:[%s771]] %s766
    %s773 = smul.f32 %s770, 775.0
    %s774 = scvt.f32.s32.to.zero.pseudo %s773
    %s775 = smul.f32 %s766, 484.6154
    %s776 = scvt.f32.s32.to.zero.pseudo %s775
    %s777 = smul.u32 %s774, 128
    %s778 = sadd.s32 %s777, %s776
    %s779 = sadd.s32 %s778, 2216
    %s780 = sld [smem:[#allocation7 + %s779]]
    %s781 = scalar_lea.smem [#allocation9], 33
    %782 = sst [smem:[%s781]] %s780
    %s783 = sld [smem:[#allocation2 + %s779]]
    %s784 = sadd.f32 %s766, %s783
    %s785 = sld [smem:[#allocation5 + %s779]]
    %s786 = sadd.f32 %s770, %s785
    %s787 = smax.f32 %s784, -0.08
    %s788 = smin.f32 %s787, 0.05
    %p789 = scmp.gt.f32.partialorder %s786, 0.02
    %s790 = scalar_select %p789, 0.05, %s786
    %p791 = scmp.lt.f32.partialorder %s786, -0.02
    %s792 = scalar_select %p791, -0.02, %s790
    %s793 = scalar_lea.smem [#allocation8], 33
    %794 = sst [smem:[%s793]] %s788
    %s795 = smul.f32 %s792, 775.0
    %s796 = scvt.f32.s32.to.zero.pseudo %s795
    %s797 = smul.f32 %s788, 484.6154
    %s798 = scvt.f32.s32.to.zero.pseudo %s797
    %s799 = smul.u32 %s796, 128
    %s800 = sadd.s32 %s799, %s798
    %s801 = sadd.s32 %s800, 2216
    %s802 = sld [smem:[#allocation7 + %s801]]
    %s803 = scalar_lea.smem [#allocation9], 34
    %804 = sst [smem:[%s803]] %s802
    %s805 = sld [smem:[#allocation2 + %s801]]
    %s806 = sadd.f32 %s788, %s805
    %s807 = sld [smem:[#allocation5 + %s801]]
    %s808 = sadd.f32 %s792, %s807
    %s809 = smax.f32 %s806, -0.08
    %s810 = smin.f32 %s809, 0.05
    %p811 = scmp.gt.f32.partialorder %s808, 0.02
    %s812 = scalar_select %p811, 0.05, %s808
    %p813 = scmp.lt.f32.partialorder %s808, -0.02
    %s814 = scalar_select %p813, -0.02, %s812
    %s815 = scalar_lea.smem [#allocation8], 34
    %816 = sst [smem:[%s815]] %s810
    %s817 = smul.f32 %s814, 775.0
    %s818 = scvt.f32.s32.to.zero.pseudo %s817
    %s819 = smul.f32 %s810, 484.6154
    %s820 = scvt.f32.s32.to.zero.pseudo %s819
    %s821 = smul.u32 %s818, 128
    %s822 = sadd.s32 %s821, %s820
    %s823 = sadd.s32 %s822, 2216
    %s824 = sld [smem:[#allocation7 + %s823]]
    %s825 = scalar_lea.smem [#allocation9], 35
    %826 = sst [smem:[%s825]] %s824
    %s827 = sld [smem:[#allocation2 + %s823]]
    %s828 = sadd.f32 %s810, %s827
    %s829 = sld [smem:[#allocation5 + %s823]]
    %s830 = sadd.f32 %s814, %s829
    %s831 = smax.f32 %s828, -0.08
    %s832 = smin.f32 %s831, 0.05
    %p833 = scmp.gt.f32.partialorder %s830, 0.02
    %s834 = scalar_select %p833, 0.05, %s830
    %p835 = scmp.lt.f32.partialorder %s830, -0.02
    %s836 = scalar_select %p835, -0.02, %s834
    %s837 = scalar_lea.smem [#allocation8], 35
    %838 = sst [smem:[%s837]] %s832
    %s839 = smul.f32 %s836, 775.0
    %s840 = scvt.f32.s32.to.zero.pseudo %s839
    %s841 = smul.f32 %s832, 484.6154
    %s842 = scvt.f32.s32.to.zero.pseudo %s841
    %s843 = smul.u32 %s840, 128
    %s844 = sadd.s32 %s843, %s842
    %s845 = sadd.s32 %s844, 2216
    %s846 = sld [smem:[#allocation7 + %s845]]
    %s847 = scalar_lea.smem [#allocation9], 36
    %848 = sst [smem:[%s847]] %s846
    %s849 = sld [smem:[#allocation2 + %s845]]
    %s850 = sadd.f32 %s832, %s849
    %s851 = sld [smem:[#allocation5 + %s845]]
    %s852 = sadd.f32 %s836, %s851
    %s853 = smax.f32 %s850, -0.08
    %s854 = smin.f32 %s853, 0.05
    %p855 = scmp.gt.f32.partialorder %s852, 0.02
    %s856 = scalar_select %p855, 0.05, %s852
    %p857 = scmp.lt.f32.partialorder %s852, -0.02
    %s858 = scalar_select %p857, -0.02, %s856
    %s859 = scalar_lea.smem [#allocation8], 36
    %860 = sst [smem:[%s859]] %s854
    %s861 = smul.f32 %s858, 775.0
    %s862 = scvt.f32.s32.to.zero.pseudo %s861
    %s863 = smul.f32 %s854, 484.6154
    %s864 = scvt.f32.s32.to.zero.pseudo %s863
    %s865 = smul.u32 %s862, 128
    %s866 = sadd.s32 %s865, %s864
    %s867 = sadd.s32 %s866, 2216
    %s868 = sld [smem:[#allocation7 + %s867]]
    %s869 = scalar_lea.smem [#allocation9], 37
    %870 = sst [smem:[%s869]] %s868
    %s871 = sld [smem:[#allocation2 + %s867]]
    %s872 = sadd.f32 %s854, %s871
    %s873 = sld [smem:[#allocation5 + %s867]]
    %s874 = sadd.f32 %s858, %s873
    %s875 = smax.f32 %s872, -0.08
    %s876 = smin.f32 %s875, 0.05
    %p877 = scmp.gt.f32.partialorder %s874, 0.02
    %s878 = scalar_select %p877, 0.05, %s874
    %p879 = scmp.lt.f32.partialorder %s874, -0.02
    %s880 = scalar_select %p879, -0.02, %s878
    %s881 = scalar_lea.smem [#allocation8], 37
    %882 = sst [smem:[%s881]] %s876
    %s883 = smul.f32 %s880, 775.0
    %s884 = scvt.f32.s32.to.zero.pseudo %s883
    %s885 = smul.f32 %s876, 484.6154
    %s886 = scvt.f32.s32.to.zero.pseudo %s885
    %s887 = smul.u32 %s884, 128
    %s888 = sadd.s32 %s887, %s886
    %s889 = sadd.s32 %s888, 2216
    %s890 = sld [smem:[#allocation7 + %s889]]
    %s891 = scalar_lea.smem [#allocation9], 38
    %892 = sst [smem:[%s891]] %s890
    %s893 = sld [smem:[#allocation2 + %s889]]
    %s894 = sadd.f32 %s876, %s893
    %s895 = sld [smem:[#allocation5 + %s889]]
    %s896 = sadd.f32 %s880, %s895
    %s897 = smax.f32 %s894, -0.08
    %s898 = smin.f32 %s897, 0.05
    %p899 = scmp.gt.f32.partialorder %s896, 0.02
    %s900 = scalar_select %p899, 0.05, %s896
    %p901 = scmp.lt.f32.partialorder %s896, -0.02
    %s902 = scalar_select %p901, -0.02, %s900
    %s903 = scalar_lea.smem [#allocation8], 38
    %904 = sst [smem:[%s903]] %s898
    %s905 = smul.f32 %s902, 775.0
    %s906 = scvt.f32.s32.to.zero.pseudo %s905
    %s907 = smul.f32 %s898, 484.6154
    %s908 = scvt.f32.s32.to.zero.pseudo %s907
    %s909 = smul.u32 %s906, 128
    %s910 = sadd.s32 %s909, %s908
    %s911 = sadd.s32 %s910, 2216
    %s912 = sld [smem:[#allocation7 + %s911]]
    %s913 = scalar_lea.smem [#allocation9], 39
    %914 = sst [smem:[%s913]] %s912
    %s915 = sld [smem:[#allocation2 + %s911]]
    %s916 = sadd.f32 %s898, %s915
    %s917 = sld [smem:[#allocation5 + %s911]]
    %s918 = sadd.f32 %s902, %s917
    %s919 = smax.f32 %s916, -0.08
    %s920 = smin.f32 %s919, 0.05
    %p921 = scmp.gt.f32.partialorder %s918, 0.02
    %s922 = scalar_select %p921, 0.05, %s918
    %p923 = scmp.lt.f32.partialorder %s918, -0.02
    %s924 = scalar_select %p923, -0.02, %s922
    %s925 = scalar_lea.smem [#allocation8], 39
    %926 = sst [smem:[%s925]] %s920
    %s927 = smul.f32 %s924, 775.0
    %s928 = scvt.f32.s32.to.zero.pseudo %s927
    %s929 = smul.f32 %s920, 484.6154
    %s930 = scvt.f32.s32.to.zero.pseudo %s929
    %s931 = smul.u32 %s928, 128
    %s932 = sadd.s32 %s931, %s930
    %s933 = sadd.s32 %s932, 2216
    %s934 = sld [smem:[#allocation7 + %s933]]
    %s935 = scalar_lea.smem [#allocation9], 40
    %936 = sst [smem:[%s935]] %s934
    %s937 = sld [smem:[#allocation2 + %s933]]
    %s938 = sadd.f32 %s920, %s937
    %s939 = sld [smem:[#allocation5 + %s933]]
    %s940 = sadd.f32 %s924, %s939
    %s941 = smax.f32 %s938, -0.08
    %s942 = smin.f32 %s941, 0.05
    %p943 = scmp.gt.f32.partialorder %s940, 0.02
    %s944 = scalar_select %p943, 0.05, %s940
    %p945 = scmp.lt.f32.partialorder %s940, -0.02
    %s946 = scalar_select %p945, -0.02, %s944
    %s947 = scalar_lea.smem [#allocation8], 40
    %948 = sst [smem:[%s947]] %s942
    %s949 = smul.f32 %s946, 775.0
    %s950 = scvt.f32.s32.to.zero.pseudo %s949
    %s951 = smul.f32 %s942, 484.6154
    %s952 = scvt.f32.s32.to.zero.pseudo %s951
    %s953 = smul.u32 %s950, 128
    %s954 = sadd.s32 %s953, %s952
    %s955 = sadd.s32 %s954, 2216
    %s956 = sld [smem:[#allocation7 + %s955]]
    %s957 = scalar_lea.smem [#allocation9], 41
    %958 = sst [smem:[%s957]] %s956
    %s959 = sld [smem:[#allocation2 + %s955]]
    %s960 = sadd.f32 %s942, %s959
    %s961 = sld [smem:[#allocation5 + %s955]]
    %s962 = sadd.f32 %s946, %s961
    %s963 = smax.f32 %s960, -0.08
    %s964 = smin.f32 %s963, 0.05
    %p965 = scmp.gt.f32.partialorder %s962, 0.02
    %s966 = scalar_select %p965, 0.05, %s962
    %p967 = scmp.lt.f32.partialorder %s962, -0.02
    %s968 = scalar_select %p967, -0.02, %s966
    %s969 = scalar_lea.smem [#allocation8], 41
    %970 = sst [smem:[%s969]] %s964
    %s971 = smul.f32 %s968, 775.0
    %s972 = scvt.f32.s32.to.zero.pseudo %s971
    %s973 = smul.f32 %s964, 484.6154
    %s974 = scvt.f32.s32.to.zero.pseudo %s973
    %s975 = smul.u32 %s972, 128
    %s976 = sadd.s32 %s975, %s974
    %s977 = sadd.s32 %s976, 2216
    %s978 = sld [smem:[#allocation7 + %s977]]
    %s979 = scalar_lea.smem [#allocation9], 42
    %980 = sst [smem:[%s979]] %s978
    %s981 = sld [smem:[#allocation2 + %s977]]
    %s982 = sadd.f32 %s964, %s981
    %s983 = sld [smem:[#allocation5 + %s977]]
    %s984 = sadd.f32 %s968, %s983
    %s985 = smax.f32 %s982, -0.08
    %s986 = smin.f32 %s985, 0.05
    %p987 = scmp.gt.f32.partialorder %s984, 0.02
    %s988 = scalar_select %p987, 0.05, %s984
    %p989 = scmp.lt.f32.partialorder %s984, -0.02
    %s990 = scalar_select %p989, -0.02, %s988
    %s991 = scalar_lea.smem [#allocation8], 42
    %992 = sst [smem:[%s991]] %s986
    %s993 = smul.f32 %s990, 775.0
    %s994 = scvt.f32.s32.to.zero.pseudo %s993
    %s995 = smul.f32 %s986, 484.6154
    %s996 = scvt.f32.s32.to.zero.pseudo %s995
    %s997 = smul.u32 %s994, 128
    %s998 = sadd.s32 %s997, %s996
    %s999 = sadd.s32 %s998, 2216
    %s1000 = sld [smem:[#allocation7 + %s999]]
    %s1001 = scalar_lea.smem [#allocation9], 43
    %1002 = sst [smem:[%s1001]] %s1000
    %s1003 = sld [smem:[#allocation2 + %s999]]
    %s1004 = sadd.f32 %s986, %s1003
    %s1005 = sld [smem:[#allocation5 + %s999]]
    %s1006 = sadd.f32 %s990, %s1005
    %s1007 = smax.f32 %s1004, -0.08
    %s1008 = smin.f32 %s1007, 0.05
    %p1009 = scmp.gt.f32.partialorder %s1006, 0.02
    %s1010 = scalar_select %p1009, 0.05, %s1006
    %p1011 = scmp.lt.f32.partialorder %s1006, -0.02
    %s1012 = scalar_select %p1011, -0.02, %s1010
    %s1013 = scalar_lea.smem [#allocation8], 43
    %1014 = sst [smem:[%s1013]] %s1008
    %s1015 = smul.f32 %s1012, 775.0
    %s1016 = scvt.f32.s32.to.zero.pseudo %s1015
    %s1017 = smul.f32 %s1008, 484.6154
    %s1018 = scvt.f32.s32.to.zero.pseudo %s1017
    %s1019 = smul.u32 %s1016, 128
    %s1020 = sadd.s32 %s1019, %s1018
    %s1021 = sadd.s32 %s1020, 2216
    %s1022 = sld [smem:[#allocation7 + %s1021]]
    %s1023 = scalar_lea.smem [#allocation9], 44
    %1024 = sst [smem:[%s1023]] %s1022
    %s1025 = sld [smem:[#allocation2 + %s1021]]
    %s1026 = sadd.f32 %s1008, %s1025
    %s1027 = sld [smem:[#allocation5 + %s1021]]
    %s1028 = sadd.f32 %s1012, %s1027
    %s1029 = smax.f32 %s1026, -0.08
    %s1030 = smin.f32 %s1029, 0.05
    %p1031 = scmp.gt.f32.partialorder %s1028, 0.02
    %s1032 = scalar_select %p1031, 0.05, %s1028
    %p1033 = scmp.lt.f32.partialorder %s1028, -0.02
    %s1034 = scalar_select %p1033, -0.02, %s1032
    %s1035 = scalar_lea.smem [#allocation8], 44
    %1036 = sst [smem:[%s1035]] %s1030
    %s1037 = smul.f32 %s1034, 775.0
    %s1038 = scvt.f32.s32.to.zero.pseudo %s1037
    %s1039 = smul.f32 %s1030, 484.6154
    %s1040 = scvt.f32.s32.to.zero.pseudo %s1039
    %s1041 = smul.u32 %s1038, 128
    %s1042 = sadd.s32 %s1041, %s1040
    %s1043 = sadd.s32 %s1042, 2216
    %s1044 = sld [smem:[#allocation7 + %s1043]]
    %s1045 = scalar_lea.smem [#allocation9], 45
    %1046 = sst [smem:[%s1045]] %s1044
    %s1047 = sld [smem:[#allocation2 + %s1043]]
    %s1048 = sadd.f32 %s1030, %s1047
    %s1049 = sld [smem:[#allocation5 + %s1043]]
    %s1050 = sadd.f32 %s1034, %s1049
    %s1051 = smax.f32 %s1048, -0.08
    %s1052 = smin.f32 %s1051, 0.05
    %p1053 = scmp.gt.f32.partialorder %s1050, 0.02
    %s1054 = scalar_select %p1053, 0.05, %s1050
    %p1055 = scmp.lt.f32.partialorder %s1050, -0.02
    %s1056 = scalar_select %p1055, -0.02, %s1054
    %s1057 = scalar_lea.smem [#allocation8], 45
    %1058 = sst [smem:[%s1057]] %s1052
    %s1059 = smul.f32 %s1056, 775.0
    %s1060 = scvt.f32.s32.to.zero.pseudo %s1059
    %s1061 = smul.f32 %s1052, 484.6154
    %s1062 = scvt.f32.s32.to.zero.pseudo %s1061
    %s1063 = smul.u32 %s1060, 128
    %s1064 = sadd.s32 %s1063, %s1062
    %s1065 = sadd.s32 %s1064, 2216
    %s1066 = sld [smem:[#allocation7 + %s1065]]
    %s1067 = scalar_lea.smem [#allocation9], 46
    %1068 = sst [smem:[%s1067]] %s1066
    %s1069 = sld [smem:[#allocation2 + %s1065]]
    %s1070 = sadd.f32 %s1052, %s1069
    %s1071 = sld [smem:[#allocation5 + %s1065]]
    %s1072 = sadd.f32 %s1056, %s1071
    %s1073 = smax.f32 %s1070, -0.08
    %s1074 = smin.f32 %s1073, 0.05
    %p1075 = scmp.gt.f32.partialorder %s1072, 0.02
    %s1076 = scalar_select %p1075, 0.05, %s1072
    %p1077 = scmp.lt.f32.partialorder %s1072, -0.02
    %s1078 = scalar_select %p1077, -0.02, %s1076
    %s1079 = scalar_lea.smem [#allocation8], 46
    %1080 = sst [smem:[%s1079]] %s1074
    %s1081 = smul.f32 %s1078, 775.0
    %s1082 = scvt.f32.s32.to.zero.pseudo %s1081
    %s1083 = smul.f32 %s1074, 484.6154
    %s1084 = scvt.f32.s32.to.zero.pseudo %s1083
    %s1085 = smul.u32 %s1082, 128
    %s1086 = sadd.s32 %s1085, %s1084
    %s1087 = sadd.s32 %s1086, 2216
    %s1088 = sld [smem:[#allocation7 + %s1087]]
    %s1089 = scalar_lea.smem [#allocation9], 47
    %1090 = sst [smem:[%s1089]] %s1088
    %s1091 = sld [smem:[#allocation2 + %s1087]]
    %s1092 = sadd.f32 %s1074, %s1091
    %s1093 = sld [smem:[#allocation5 + %s1087]]
    %s1094 = sadd.f32 %s1078, %s1093
    %s1095 = smax.f32 %s1092, -0.08
    %s1096 = smin.f32 %s1095, 0.05
    %p1097 = scmp.gt.f32.partialorder %s1094, 0.02
    %s1098 = scalar_select %p1097, 0.05, %s1094
    %p1099 = scmp.lt.f32.partialorder %s1094, -0.02
    %s1100 = scalar_select %p1099, -0.02, %s1098
    %s1101 = scalar_lea.smem [#allocation8], 47
    %1102 = sst [smem:[%s1101]] %s1096
    %s1103 = smul.f32 %s1100, 775.0
    %s1104 = scvt.f32.s32.to.zero.pseudo %s1103
    %s1105 = smul.f32 %s1096, 484.6154
    %s1106 = scvt.f32.s32.to.zero.pseudo %s1105
    %s1107 = smul.u32 %s1104, 128
    %s1108 = sadd.s32 %s1107, %s1106
    %s1109 = sadd.s32 %s1108, 2216
    %s1110 = sld [smem:[#allocation7 + %s1109]]
    %s1111 = scalar_lea.smem [#allocation9], 48
    %1112 = sst [smem:[%s1111]] %s1110
    %s1113 = sld [smem:[#allocation2 + %s1109]]
    %s1114 = sadd.f32 %s1096, %s1113
    %s1115 = sld [smem:[#allocation5 + %s1109]]
    %s1116 = sadd.f32 %s1100, %s1115
    %s1117 = smax.f32 %s1114, -0.08
    %s1118 = smin.f32 %s1117, 0.05
    %p1119 = scmp.gt.f32.partialorder %s1116, 0.02
    %s1120 = scalar_select %p1119, 0.05, %s1116
    %p1121 = scmp.lt.f32.partialorder %s1116, -0.02
    %s1122 = scalar_select %p1121, -0.02, %s1120
    %s1123 = scalar_lea.smem [#allocation8], 48
    %1124 = sst [smem:[%s1123]] %s1118
    %s1125 = smul.f32 %s1122, 775.0
    %s1126 = scvt.f32.s32.to.zero.pseudo %s1125
    %s1127 = smul.f32 %s1118, 484.6154
    %s1128 = scvt.f32.s32.to.zero.pseudo %s1127
    %s1129 = smul.u32 %s1126, 128
    %s1130 = sadd.s32 %s1129, %s1128
    %s1131 = sadd.s32 %s1130, 2216
    %s1132 = sld [smem:[#allocation7 + %s1131]]
    %s1133 = scalar_lea.smem [#allocation9], 49
    %1134 = sst [smem:[%s1133]] %s1132
    %s1135 = sld [smem:[#allocation2 + %s1131]]
    %s1136 = sadd.f32 %s1118, %s1135
    %s1137 = sld [smem:[#allocation5 + %s1131]]
    %s1138 = sadd.f32 %s1122, %s1137
    %s1139 = smax.f32 %s1136, -0.08
    %s1140 = smin.f32 %s1139, 0.05
    %p1141 = scmp.gt.f32.partialorder %s1138, 0.02
    %s1142 = scalar_select %p1141, 0.05, %s1138
    %p1143 = scmp.lt.f32.partialorder %s1138, -0.02
    %s1144 = scalar_select %p1143, -0.02, %s1142
    %s1145 = scalar_lea.smem [#allocation8], 49
    %1146 = sst [smem:[%s1145]] %s1140
    %s1147 = smul.f32 %s1144, 775.0
    %s1148 = scvt.f32.s32.to.zero.pseudo %s1147
    %s1149 = smul.f32 %s1140, 484.6154
    %s1150 = scvt.f32.s32.to.zero.pseudo %s1149
    %s1151 = smul.u32 %s1148, 128
    %s1152 = sadd.s32 %s1151, %s1150
    %s1153 = sadd.s32 %s1152, 2216
    %s1154 = sld [smem:[#allocation7 + %s1153]]
    %s1155 = scalar_lea.smem [#allocation9], 50
    %1156 = sst [smem:[%s1155]] %s1154
    %s1157 = sld [smem:[#allocation2 + %s1153]]
    %s1158 = sadd.f32 %s1140, %s1157
    %s1159 = sld [smem:[#allocation5 + %s1153]]
    %s1160 = sadd.f32 %s1144, %s1159
    %s1161 = smax.f32 %s1158, -0.08
    %s1162 = smin.f32 %s1161, 0.05
    %p1163 = scmp.gt.f32.partialorder %s1160, 0.02
    %s1164 = scalar_select %p1163, 0.05, %s1160
    %p1165 = scmp.lt.f32.partialorder %s1160, -0.02
    %s1166 = scalar_select %p1165, -0.02, %s1164
    %s1167 = scalar_lea.smem [#allocation8], 50
    %1168 = sst [smem:[%s1167]] %s1162
    %s1169 = smul.f32 %s1166, 775.0
    %s1170 = scvt.f32.s32.to.zero.pseudo %s1169
    %s1171 = smul.f32 %s1162, 484.6154
    %s1172 = scvt.f32.s32.to.zero.pseudo %s1171
    %s1173 = smul.u32 %s1170, 128
    %s1174 = sadd.s32 %s1173, %s1172
    %s1175 = sadd.s32 %s1174, 2216
    %s1176 = sld [smem:[#allocation7 + %s1175]]
    %s1177 = scalar_lea.smem [#allocation9], 51
    %1178 = sst [smem:[%s1177]] %s1176
    %s1179 = sld [smem:[#allocation2 + %s1175]]
    %s1180 = sadd.f32 %s1162, %s1179
    %s1181 = sld [smem:[#allocation5 + %s1175]]
    %s1182 = sadd.f32 %s1166, %s1181
    %s1183 = smax.f32 %s1180, -0.08
    %s1184 = smin.f32 %s1183, 0.05
    %p1185 = scmp.gt.f32.partialorder %s1182, 0.02
    %s1186 = scalar_select %p1185, 0.05, %s1182
    %p1187 = scmp.lt.f32.partialorder %s1182, -0.02
    %s1188 = scalar_select %p1187, -0.02, %s1186
    %s1189 = scalar_lea.smem [#allocation8], 51
    %1190 = sst [smem:[%s1189]] %s1184
    %s1191 = smul.f32 %s1188, 775.0
    %s1192 = scvt.f32.s32.to.zero.pseudo %s1191
    %s1193 = smul.f32 %s1184, 484.6154
    %s1194 = scvt.f32.s32.to.zero.pseudo %s1193
    %s1195 = smul.u32 %s1192, 128
    %s1196 = sadd.s32 %s1195, %s1194
    %s1197 = sadd.s32 %s1196, 2216
    %s1198 = sld [smem:[#allocation7 + %s1197]]
    %s1199 = scalar_lea.smem [#allocation9], 52
    %1200 = sst [smem:[%s1199]] %s1198
    %s1201 = sld [smem:[#allocation2 + %s1197]]
    %s1202 = sadd.f32 %s1184, %s1201
    %s1203 = sld [smem:[#allocation5 + %s1197]]
    %s1204 = sadd.f32 %s1188, %s1203
    %s1205 = smax.f32 %s1202, -0.08
    %s1206 = smin.f32 %s1205, 0.05
    %p1207 = scmp.gt.f32.partialorder %s1204, 0.02
    %s1208 = scalar_select %p1207, 0.05, %s1204
    %p1209 = scmp.lt.f32.partialorder %s1204, -0.02
    %s1210 = scalar_select %p1209, -0.02, %s1208
    %s1211 = scalar_lea.smem [#allocation8], 52
    %1212 = sst [smem:[%s1211]] %s1206
    %s1213 = smul.f32 %s1210, 775.0
    %s1214 = scvt.f32.s32.to.zero.pseudo %s1213
    %s1215 = smul.f32 %s1206, 484.6154
    %s1216 = scvt.f32.s32.to.zero.pseudo %s1215
    %s1217 = smul.u32 %s1214, 128
    %s1218 = sadd.s32 %s1217, %s1216
    %s1219 = sadd.s32 %s1218, 2216
    %s1220 = sld [smem:[#allocation7 + %s1219]]
    %s1221 = scalar_lea.smem [#allocation9], 53
    %1222 = sst [smem:[%s1221]] %s1220
    %s1223 = sld [smem:[#allocation2 + %s1219]]
    %s1224 = sadd.f32 %s1206, %s1223
    %s1225 = sld [smem:[#allocation5 + %s1219]]
    %s1226 = sadd.f32 %s1210, %s1225
    %s1227 = smax.f32 %s1224, -0.08
    %s1228 = smin.f32 %s1227, 0.05
    %p1229 = scmp.gt.f32.partialorder %s1226, 0.02
    %s1230 = scalar_select %p1229, 0.05, %s1226
    %p1231 = scmp.lt.f32.partialorder %s1226, -0.02
    %s1232 = scalar_select %p1231, -0.02, %s1230
    %s1233 = scalar_lea.smem [#allocation8], 53
    %1234 = sst [smem:[%s1233]] %s1228
    %s1235 = smul.f32 %s1232, 775.0
    %s1236 = scvt.f32.s32.to.zero.pseudo %s1235
    %s1237 = smul.f32 %s1228, 484.6154
    %s1238 = scvt.f32.s32.to.zero.pseudo %s1237
    %s1239 = smul.u32 %s1236, 128
    %s1240 = sadd.s32 %s1239, %s1238
    %s1241 = sadd.s32 %s1240, 2216
    %s1242 = sld [smem:[#allocation7 + %s1241]]
    %s1243 = scalar_lea.smem [#allocation9], 54
    %1244 = sst [smem:[%s1243]] %s1242
    %s1245 = sld [smem:[#allocation2 + %s1241]]
    %s1246 = sadd.f32 %s1228, %s1245
    %s1247 = sld [smem:[#allocation5 + %s1241]]
    %s1248 = sadd.f32 %s1232, %s1247
    %s1249 = smax.f32 %s1246, -0.08
    %s1250 = smin.f32 %s1249, 0.05
    %p1251 = scmp.gt.f32.partialorder %s1248, 0.02
    %s1252 = scalar_select %p1251, 0.05, %s1248
    %p1253 = scmp.lt.f32.partialorder %s1248, -0.02
    %s1254 = scalar_select %p1253, -0.02, %s1252
    %s1255 = scalar_lea.smem [#allocation8], 54
    %1256 = sst [smem:[%s1255]] %s1250
    %s1257 = smul.f32 %s1254, 775.0
    %s1258 = scvt.f32.s32.to.zero.pseudo %s1257
    %s1259 = smul.f32 %s1250, 484.6154
    %s1260 = scvt.f32.s32.to.zero.pseudo %s1259
    %s1261 = smul.u32 %s1258, 128
    %s1262 = sadd.s32 %s1261, %s1260
    %s1263 = sadd.s32 %s1262, 2216
    %s1264 = sld [smem:[#allocation7 + %s1263]]
    %s1265 = scalar_lea.smem [#allocation9], 55
    %1266 = sst [smem:[%s1265]] %s1264
    %s1267 = sld [smem:[#allocation2 + %s1263]]
    %s1268 = sadd.f32 %s1250, %s1267
    %s1269 = sld [smem:[#allocation5 + %s1263]]
    %s1270 = sadd.f32 %s1254, %s1269
    %s1271 = smax.f32 %s1268, -0.08
    %s1272 = smin.f32 %s1271, 0.05
    %p1273 = scmp.gt.f32.partialorder %s1270, 0.02
    %s1274 = scalar_select %p1273, 0.05, %s1270
    %p1275 = scmp.lt.f32.partialorder %s1270, -0.02
    %s1276 = scalar_select %p1275, -0.02, %s1274
    %s1277 = scalar_lea.smem [#allocation8], 55
    %1278 = sst [smem:[%s1277]] %s1272
    %s1279 = smul.f32 %s1276, 775.0
    %s1280 = scvt.f32.s32.to.zero.pseudo %s1279
    %s1281 = smul.f32 %s1272, 484.6154
    %s1282 = scvt.f32.s32.to.zero.pseudo %s1281
    %s1283 = smul.u32 %s1280, 128
    %s1284 = sadd.s32 %s1283, %s1282
    %s1285 = sadd.s32 %s1284, 2216
    %s1286 = sld [smem:[#allocation7 + %s1285]]
    %s1287 = scalar_lea.smem [#allocation9], 56
    %1288 = sst [smem:[%s1287]] %s1286
    %s1289 = sld [smem:[#allocation2 + %s1285]]
    %s1290 = sadd.f32 %s1272, %s1289
    %s1291 = sld [smem:[#allocation5 + %s1285]]
    %s1292 = sadd.f32 %s1276, %s1291
    %s1293 = smax.f32 %s1290, -0.08
    %s1294 = smin.f32 %s1293, 0.05
    %p1295 = scmp.gt.f32.partialorder %s1292, 0.02
    %s1296 = scalar_select %p1295, 0.05, %s1292
    %p1297 = scmp.lt.f32.partialorder %s1292, -0.02
    %s1298 = scalar_select %p1297, -0.02, %s1296
    %s1299 = scalar_lea.smem [#allocation8], 56
    %1300 = sst [smem:[%s1299]] %s1294
    %s1301 = smul.f32 %s1298, 775.0
    %s1302 = scvt.f32.s32.to.zero.pseudo %s1301
    %s1303 = smul.f32 %s1294, 484.6154
    %s1304 = scvt.f32.s32.to.zero.pseudo %s1303
    %s1305 = smul.u32 %s1302, 128
    %s1306 = sadd.s32 %s1305, %s1304
    %s1307 = sadd.s32 %s1306, 2216
    %s1308 = sld [smem:[#allocation7 + %s1307]]
    %s1309 = scalar_lea.smem [#allocation9], 57
    %1310 = sst [smem:[%s1309]] %s1308
    %s1311 = sld [smem:[#allocation2 + %s1307]]
    %s1312 = sadd.f32 %s1294, %s1311
    %s1313 = sld [smem:[#allocation5 + %s1307]]
    %s1314 = sadd.f32 %s1298, %s1313
    %s1315 = smax.f32 %s1312, -0.08
    %s1316 = smin.f32 %s1315, 0.05
    %p1317 = scmp.gt.f32.partialorder %s1314, 0.02
    %s1318 = scalar_select %p1317, 0.05, %s1314
    %p1319 = scmp.lt.f32.partialorder %s1314, -0.02
    %s1320 = scalar_select %p1319, -0.02, %s1318
    %s1321 = scalar_lea.smem [#allocation8], 57
    %1322 = sst [smem:[%s1321]] %s1316
    %s1323 = smul.f32 %s1320, 775.0
    %s1324 = scvt.f32.s32.to.zero.pseudo %s1323
    %s1325 = smul.f32 %s1316, 484.6154
    %s1326 = scvt.f32.s32.to.zero.pseudo %s1325
    %s1327 = smul.u32 %s1324, 128
    %s1328 = sadd.s32 %s1327, %s1326
    %s1329 = sadd.s32 %s1328, 2216
    %s1330 = sld [smem:[#allocation7 + %s1329]]
    %s1331 = scalar_lea.smem [#allocation9], 58
    %1332 = sst [smem:[%s1331]] %s1330
    %s1333 = sld [smem:[#allocation2 + %s1329]]
    %s1334 = sadd.f32 %s1316, %s1333
    %s1335 = sld [smem:[#allocation5 + %s1329]]
    %s1336 = sadd.f32 %s1320, %s1335
    %s1337 = smax.f32 %s1334, -0.08
    %s1338 = smin.f32 %s1337, 0.05
    %p1339 = scmp.gt.f32.partialorder %s1336, 0.02
    %s1340 = scalar_select %p1339, 0.05, %s1336
    %p1341 = scmp.lt.f32.partialorder %s1336, -0.02
    %s1342 = scalar_select %p1341, -0.02, %s1340
    %s1343 = scalar_lea.smem [#allocation8], 58
    %1344 = sst [smem:[%s1343]] %s1338
    %s1345 = smul.f32 %s1342, 775.0
    %s1346 = scvt.f32.s32.to.zero.pseudo %s1345
    %s1347 = smul.f32 %s1338, 484.6154
    %s1348 = scvt.f32.s32.to.zero.pseudo %s1347
    %s1349 = smul.u32 %s1346, 128
    %s1350 = sadd.s32 %s1349, %s1348
    %s1351 = sadd.s32 %s1350, 2216
    %s1352 = sld [smem:[#allocation7 + %s1351]]
    %s1353 = scalar_lea.smem [#allocation9], 59
    %1354 = sst [smem:[%s1353]] %s1352
    %s1355 = sld [smem:[#allocation2 + %s1351]]
    %s1356 = sadd.f32 %s1338, %s1355
    %s1357 = sld [smem:[#allocation5 + %s1351]]
    %s1358 = sadd.f32 %s1342, %s1357
    %s1359 = smax.f32 %s1356, -0.08
    %s1360 = smin.f32 %s1359, 0.05
    %p1361 = scmp.gt.f32.partialorder %s1358, 0.02
    %s1362 = scalar_select %p1361, 0.05, %s1358
    %p1363 = scmp.lt.f32.partialorder %s1358, -0.02
    %s1364 = scalar_select %p1363, -0.02, %s1362
    %s1365 = scalar_lea.smem [#allocation8], 59
    %1366 = sst [smem:[%s1365]] %s1360
    %s1367 = smul.f32 %s1364, 775.0
    %s1368 = scvt.f32.s32.to.zero.pseudo %s1367
    %s1369 = smul.f32 %s1360, 484.6154
    %s1370 = scvt.f32.s32.to.zero.pseudo %s1369
    %s1371 = smul.u32 %s1368, 128
    %s1372 = sadd.s32 %s1371, %s1370
    %s1373 = sadd.s32 %s1372, 2216
    %s1374 = sld [smem:[#allocation7 + %s1373]]
    %s1375 = scalar_lea.smem [#allocation9], 60
    %1376 = sst [smem:[%s1375]] %s1374
    %s1377 = sld [smem:[#allocation2 + %s1373]]
    %s1378 = sadd.f32 %s1360, %s1377
    %s1379 = sld [smem:[#allocation5 + %s1373]]
    %s1380 = sadd.f32 %s1364, %s1379
    %s1381 = smax.f32 %s1378, -0.08
    %s1382 = smin.f32 %s1381, 0.05
    %p1383 = scmp.gt.f32.partialorder %s1380, 0.02
    %s1384 = scalar_select %p1383, 0.05, %s1380
    %p1385 = scmp.lt.f32.partialorder %s1380, -0.02
    %s1386 = scalar_select %p1385, -0.02, %s1384
    %s1387 = scalar_lea.smem [#allocation8], 60
    %1388 = sst [smem:[%s1387]] %s1382
    %s1389 = smul.f32 %s1386, 775.0
    %s1390 = scvt.f32.s32.to.zero.pseudo %s1389
    %s1391 = smul.f32 %s1382, 484.6154
    %s1392 = scvt.f32.s32.to.zero.pseudo %s1391
    %s1393 = smul.u32 %s1390, 128
    %s1394 = sadd.s32 %s1393, %s1392
    %s1395 = sadd.s32 %s1394, 2216
    %s1396 = sld [smem:[#allocation7 + %s1395]]
    %s1397 = scalar_lea.smem [#allocation9], 61
    %1398 = sst [smem:[%s1397]] %s1396
    %s1399 = sld [smem:[#allocation2 + %s1395]]
    %s1400 = sadd.f32 %s1382, %s1399
    %s1401 = sld [smem:[#allocation5 + %s1395]]
    %s1402 = sadd.f32 %s1386, %s1401
    %s1403 = smax.f32 %s1400, -0.08
    %s1404 = smin.f32 %s1403, 0.05
    %p1405 = scmp.gt.f32.partialorder %s1402, 0.02
    %s1406 = scalar_select %p1405, 0.05, %s1402
    %p1407 = scmp.lt.f32.partialorder %s1402, -0.02
    %s1408 = scalar_select %p1407, -0.02, %s1406
    %s1409 = scalar_lea.smem [#allocation8], 61
    %1410 = sst [smem:[%s1409]] %s1404
    %s1411 = smul.f32 %s1408, 775.0
    %s1412 = scvt.f32.s32.to.zero.pseudo %s1411
    %s1413 = smul.f32 %s1404, 484.6154
    %s1414 = scvt.f32.s32.to.zero.pseudo %s1413
    %s1415 = smul.u32 %s1412, 128
    %s1416 = sadd.s32 %s1415, %s1414
    %s1417 = sadd.s32 %s1416, 2216
    %s1418 = sld [smem:[#allocation7 + %s1417]]
    %s1419 = scalar_lea.smem [#allocation9], 62
    %1420 = sst [smem:[%s1419]] %s1418
    %s1421 = sld [smem:[#allocation2 + %s1417]]
    %s1422 = sadd.f32 %s1404, %s1421
    %s1423 = sld [smem:[#allocation5 + %s1417]]
    %s1424 = sadd.f32 %s1408, %s1423
    %s1425 = smax.f32 %s1422, -0.08
    %s1426 = smin.f32 %s1425, 0.05
    %p1427 = scmp.gt.f32.partialorder %s1424, 0.02
    %s1428 = scalar_select %p1427, 0.05, %s1424
    %p1429 = scmp.lt.f32.partialorder %s1424, -0.02
    %s1430 = scalar_select %p1429, -0.02, %s1428
    %s1431 = scalar_lea.smem [#allocation8], 62
    %1432 = sst [smem:[%s1431]] %s1426
    %s1433 = smul.f32 %s1430, 775.0
    %s1434 = scvt.f32.s32.to.zero.pseudo %s1433
    %s1435 = smul.f32 %s1426, 484.6154
    %s1436 = scvt.f32.s32.to.zero.pseudo %s1435
    %s1437 = smul.u32 %s1434, 128
    %s1438 = sadd.s32 %s1437, %s1436
    %s1439 = sadd.s32 %s1438, 2216
    %s1440 = sld [smem:[#allocation7 + %s1439]]
    %s1441 = scalar_lea.smem [#allocation9], 63
    %1442 = sst [smem:[%s1441]] %s1440
    %s1443 = sld [smem:[#allocation2 + %s1439]]
    %s1444 = sadd.f32 %s1426, %s1443
    %s1445 = sld [smem:[#allocation5 + %s1439]]
    %s1446 = sadd.f32 %s1430, %s1445
    %s1447 = smax.f32 %s1444, -0.08
    %s1448 = smin.f32 %s1447, 0.05
    %p1449 = scmp.gt.f32.partialorder %s1446, 0.02
    %s1450 = scalar_select %p1449, 0.05, %s1446
    %p1451 = scmp.lt.f32.partialorder %s1446, -0.02
    %s1452 = scalar_select %p1451, -0.02, %s1450
    %s1453 = scalar_lea.smem [#allocation8], 63
    %1454 = sst [smem:[%s1453]] %s1448
    %s1455 = smul.f32 %s1452, 775.0
    %s1456 = scvt.f32.s32.to.zero.pseudo %s1455
    %s1457 = smul.f32 %s1448, 484.6154
    %s1458 = scvt.f32.s32.to.zero.pseudo %s1457
    %s1459 = smul.u32 %s1456, 128
    %s1460 = sadd.s32 %s1459, %s1458
    %s1461 = sadd.s32 %s1460, 2216
    %s1462 = sld [smem:[#allocation7 + %s1461]]
    %s1463 = scalar_lea.smem [#allocation9], 64
    %1464 = sst [smem:[%s1463]] %s1462
    %s1465 = sld [smem:[#allocation2 + %s1461]]
    %s1466 = sadd.f32 %s1448, %s1465
    %s1467 = sld [smem:[#allocation5 + %s1461]]
    %s1468 = sadd.f32 %s1452, %s1467
    %s1469 = smax.f32 %s1466, -0.08
    %s1470 = smin.f32 %s1469, 0.05
    %p1471 = scmp.gt.f32.partialorder %s1468, 0.02
    %s1472 = scalar_select %p1471, 0.05, %s1468
    %p1473 = scmp.lt.f32.partialorder %s1468, -0.02
    %s1474 = scalar_select %p1473, -0.02, %s1472
    %s1475 = scalar_lea.smem [#allocation8], 64
    %1476 = sst [smem:[%s1475]] %s1470
    %s1477 = smul.f32 %s1474, 775.0
    %s1478 = scvt.f32.s32.to.zero.pseudo %s1477
    %s1479 = smul.f32 %s1470, 484.6154
    %s1480 = scvt.f32.s32.to.zero.pseudo %s1479
    %s1481 = smul.u32 %s1478, 128
    %s1482 = sadd.s32 %s1481, %s1480
    %s1483 = sadd.s32 %s1482, 2216
    %s1484 = sld [smem:[#allocation7 + %s1483]]
    %s1485 = scalar_lea.smem [#allocation9], 65
    %1486 = sst [smem:[%s1485]] %s1484
    %s1487 = sld [smem:[#allocation2 + %s1483]]
    %s1488 = sadd.f32 %s1470, %s1487
    %s1489 = sld [smem:[#allocation5 + %s1483]]
    %s1490 = sadd.f32 %s1474, %s1489
    %s1491 = smax.f32 %s1488, -0.08
    %s1492 = smin.f32 %s1491, 0.05
    %p1493 = scmp.gt.f32.partialorder %s1490, 0.02
    %s1494 = scalar_select %p1493, 0.05, %s1490
    %p1495 = scmp.lt.f32.partialorder %s1490, -0.02
    %s1496 = scalar_select %p1495, -0.02, %s1494
    %s1497 = scalar_lea.smem [#allocation8], 65
    %1498 = sst [smem:[%s1497]] %s1492
    %s1499 = smul.f32 %s1496, 775.0
    %s1500 = scvt.f32.s32.to.zero.pseudo %s1499
    %s1501 = smul.f32 %s1492, 484.6154
    %s1502 = scvt.f32.s32.to.zero.pseudo %s1501
    %s1503 = smul.u32 %s1500, 128
    %s1504 = sadd.s32 %s1503, %s1502
    %s1505 = sadd.s32 %s1504, 2216
    %s1506 = sld [smem:[#allocation7 + %s1505]]
    %s1507 = scalar_lea.smem [#allocation9], 66
    %1508 = sst [smem:[%s1507]] %s1506
    %s1509 = sld [smem:[#allocation2 + %s1505]]
    %s1510 = sadd.f32 %s1492, %s1509
    %s1511 = sld [smem:[#allocation5 + %s1505]]
    %s1512 = sadd.f32 %s1496, %s1511
    %s1513 = smax.f32 %s1510, -0.08
    %s1514 = smin.f32 %s1513, 0.05
    %p1515 = scmp.gt.f32.partialorder %s1512, 0.02
    %s1516 = scalar_select %p1515, 0.05, %s1512
    %p1517 = scmp.lt.f32.partialorder %s1512, -0.02
    %s1518 = scalar_select %p1517, -0.02, %s1516
    %s1519 = scalar_lea.smem [#allocation8], 66
    %1520 = sst [smem:[%s1519]] %s1514
    %s1521 = smul.f32 %s1518, 775.0
    %s1522 = scvt.f32.s32.to.zero.pseudo %s1521
    %s1523 = smul.f32 %s1514, 484.6154
    %s1524 = scvt.f32.s32.to.zero.pseudo %s1523
    %s1525 = smul.u32 %s1522, 128
    %s1526 = sadd.s32 %s1525, %s1524
    %s1527 = sadd.s32 %s1526, 2216
    %s1528 = sld [smem:[#allocation7 + %s1527]]
    %s1529 = scalar_lea.smem [#allocation9], 67
    %1530 = sst [smem:[%s1529]] %s1528
    %s1531 = sld [smem:[#allocation2 + %s1527]]
    %s1532 = sadd.f32 %s1514, %s1531
    %s1533 = sld [smem:[#allocation5 + %s1527]]
    %s1534 = sadd.f32 %s1518, %s1533
    %s1535 = smax.f32 %s1532, -0.08
    %s1536 = smin.f32 %s1535, 0.05
    %p1537 = scmp.gt.f32.partialorder %s1534, 0.02
    %s1538 = scalar_select %p1537, 0.05, %s1534
    %p1539 = scmp.lt.f32.partialorder %s1534, -0.02
    %s1540 = scalar_select %p1539, -0.02, %s1538
    %s1541 = scalar_lea.smem [#allocation8], 67
    %1542 = sst [smem:[%s1541]] %s1536
    %s1543 = smul.f32 %s1540, 775.0
    %s1544 = scvt.f32.s32.to.zero.pseudo %s1543
    %s1545 = smul.f32 %s1536, 484.6154
    %s1546 = scvt.f32.s32.to.zero.pseudo %s1545
    %s1547 = smul.u32 %s1544, 128
    %s1548 = sadd.s32 %s1547, %s1546
    %s1549 = sadd.s32 %s1548, 2216
    %s1550 = sld [smem:[#allocation7 + %s1549]]
    %s1551 = scalar_lea.smem [#allocation9], 68
    %1552 = sst [smem:[%s1551]] %s1550
    %s1553 = sld [smem:[#allocation2 + %s1549]]
    %s1554 = sadd.f32 %s1536, %s1553
    %s1555 = sld [smem:[#allocation5 + %s1549]]
    %s1556 = sadd.f32 %s1540, %s1555
    %s1557 = smax.f32 %s1554, -0.08
    %s1558 = smin.f32 %s1557, 0.05
    %p1559 = scmp.gt.f32.partialorder %s1556, 0.02
    %s1560 = scalar_select %p1559, 0.05, %s1556
    %p1561 = scmp.lt.f32.partialorder %s1556, -0.02
    %s1562 = scalar_select %p1561, -0.02, %s1560
    %s1563 = scalar_lea.smem [#allocation8], 68
    %1564 = sst [smem:[%s1563]] %s1558
    %s1565 = smul.f32 %s1562, 775.0
    %s1566 = scvt.f32.s32.to.zero.pseudo %s1565
    %s1567 = smul.f32 %s1558, 484.6154
    %s1568 = scvt.f32.s32.to.zero.pseudo %s1567
    %s1569 = smul.u32 %s1566, 128
    %s1570 = sadd.s32 %s1569, %s1568
    %s1571 = sadd.s32 %s1570, 2216
    %s1572 = sld [smem:[#allocation7 + %s1571]]
    %s1573 = scalar_lea.smem [#allocation9], 69
    %1574 = sst [smem:[%s1573]] %s1572
    %s1575 = sld [smem:[#allocation2 + %s1571]]
    %s1576 = sadd.f32 %s1558, %s1575
    %s1577 = sld [smem:[#allocation5 + %s1571]]
    %s1578 = sadd.f32 %s1562, %s1577
    %s1579 = smax.f32 %s1576, -0.08
    %s1580 = smin.f32 %s1579, 0.05
    %p1581 = scmp.gt.f32.partialorder %s1578, 0.02
    %s1582 = scalar_select %p1581, 0.05, %s1578
    %p1583 = scmp.lt.f32.partialorder %s1578, -0.02
    %s1584 = scalar_select %p1583, -0.02, %s1582
    %s1585 = scalar_lea.smem [#allocation8], 69
    %1586 = sst [smem:[%s1585]] %s1580
    %s1587 = smul.f32 %s1584, 775.0
    %s1588 = scvt.f32.s32.to.zero.pseudo %s1587
    %s1589 = smul.f32 %s1580, 484.6154
    %s1590 = scvt.f32.s32.to.zero.pseudo %s1589
    %s1591 = smul.u32 %s1588, 128
    %s1592 = sadd.s32 %s1591, %s1590
    %s1593 = sadd.s32 %s1592, 2216
    %s1594 = sld [smem:[#allocation7 + %s1593]]
    %s1595 = scalar_lea.smem [#allocation9], 70
    %1596 = sst [smem:[%s1595]] %s1594
    %s1597 = sld [smem:[#allocation2 + %s1593]]
    %s1598 = sadd.f32 %s1580, %s1597
    %s1599 = sld [smem:[#allocation5 + %s1593]]
    %s1600 = sadd.f32 %s1584, %s1599
    %s1601 = smax.f32 %s1598, -0.08
    %s1602 = smin.f32 %s1601, 0.05
    %p1603 = scmp.gt.f32.partialorder %s1600, 0.02
    %s1604 = scalar_select %p1603, 0.05, %s1600
    %p1605 = scmp.lt.f32.partialorder %s1600, -0.02
    %s1606 = scalar_select %p1605, -0.02, %s1604
    %s1607 = scalar_lea.smem [#allocation8], 70
    %1608 = sst [smem:[%s1607]] %s1602
    %s1609 = smul.f32 %s1606, 775.0
    %s1610 = scvt.f32.s32.to.zero.pseudo %s1609
    %s1611 = smul.f32 %s1602, 484.6154
    %s1612 = scvt.f32.s32.to.zero.pseudo %s1611
    %s1613 = smul.u32 %s1610, 128
    %s1614 = sadd.s32 %s1613, %s1612
    %s1615 = sadd.s32 %s1614, 2216
    %s1616 = sld [smem:[#allocation7 + %s1615]]
    %s1617 = scalar_lea.smem [#allocation9], 71
    %1618 = sst [smem:[%s1617]] %s1616
    %s1619 = sld [smem:[#allocation2 + %s1615]]
    %s1620 = sadd.f32 %s1602, %s1619
    %s1621 = sld [smem:[#allocation5 + %s1615]]
    %s1622 = sadd.f32 %s1606, %s1621
    %s1623 = smax.f32 %s1620, -0.08
    %s1624 = smin.f32 %s1623, 0.05
    %p1625 = scmp.gt.f32.partialorder %s1622, 0.02
    %s1626 = scalar_select %p1625, 0.05, %s1622
    %p1627 = scmp.lt.f32.partialorder %s1622, -0.02
    %s1628 = scalar_select %p1627, -0.02, %s1626
    %s1629 = scalar_lea.smem [#allocation8], 71
    %1630 = sst [smem:[%s1629]] %s1624
    %s1631 = smul.f32 %s1628, 775.0
    %s1632 = scvt.f32.s32.to.zero.pseudo %s1631
    %s1633 = smul.f32 %s1624, 484.6154
    %s1634 = scvt.f32.s32.to.zero.pseudo %s1633
    %s1635 = smul.u32 %s1632, 128
    %s1636 = sadd.s32 %s1635, %s1634
    %s1637 = sadd.s32 %s1636, 2216
    %s1638 = sld [smem:[#allocation7 + %s1637]]
    %s1639 = scalar_lea.smem [#allocation9], 72
    %1640 = sst [smem:[%s1639]] %s1638
    %s1641 = sld [smem:[#allocation2 + %s1637]]
    %s1642 = sadd.f32 %s1624, %s1641
    %s1643 = sld [smem:[#allocation5 + %s1637]]
    %s1644 = sadd.f32 %s1628, %s1643
    %s1645 = smax.f32 %s1642, -0.08
    %s1646 = smin.f32 %s1645, 0.05
    %p1647 = scmp.gt.f32.partialorder %s1644, 0.02
    %s1648 = scalar_select %p1647, 0.05, %s1644
    %p1649 = scmp.lt.f32.partialorder %s1644, -0.02
    %s1650 = scalar_select %p1649, -0.02, %s1648
    %s1651 = scalar_lea.smem [#allocation8], 72
    %1652 = sst [smem:[%s1651]] %s1646
    %s1653 = smul.f32 %s1650, 775.0
    %s1654 = scvt.f32.s32.to.zero.pseudo %s1653
    %s1655 = smul.f32 %s1646, 484.6154
    %s1656 = scvt.f32.s32.to.zero.pseudo %s1655
    %s1657 = smul.u32 %s1654, 128
    %s1658 = sadd.s32 %s1657, %s1656
    %s1659 = sadd.s32 %s1658, 2216
    %s1660 = sld [smem:[#allocation7 + %s1659]]
    %s1661 = scalar_lea.smem [#allocation9], 73
    %1662 = sst [smem:[%s1661]] %s1660
    %s1663 = sld [smem:[#allocation2 + %s1659]]
    %s1664 = sadd.f32 %s1646, %s1663
    %s1665 = sld [smem:[#allocation5 + %s1659]]
    %s1666 = sadd.f32 %s1650, %s1665
    %s1667 = smax.f32 %s1664, -0.08
    %s1668 = smin.f32 %s1667, 0.05
    %p1669 = scmp.gt.f32.partialorder %s1666, 0.02
    %s1670 = scalar_select %p1669, 0.05, %s1666
    %p1671 = scmp.lt.f32.partialorder %s1666, -0.02
    %s1672 = scalar_select %p1671, -0.02, %s1670
    %s1673 = scalar_lea.smem [#allocation8], 73
    %1674 = sst [smem:[%s1673]] %s1668
    %s1675 = smul.f32 %s1672, 775.0
    %s1676 = scvt.f32.s32.to.zero.pseudo %s1675
    %s1677 = smul.f32 %s1668, 484.6154
    %s1678 = scvt.f32.s32.to.zero.pseudo %s1677
    %s1679 = smul.u32 %s1676, 128
    %s1680 = sadd.s32 %s1679, %s1678
    %s1681 = sadd.s32 %s1680, 2216
    %s1682 = sld [smem:[#allocation7 + %s1681]]
    %s1683 = scalar_lea.smem [#allocation9], 74
    %1684 = sst [smem:[%s1683]] %s1682
    %s1685 = sld [smem:[#allocation2 + %s1681]]
    %s1686 = sadd.f32 %s1668, %s1685
    %s1687 = sld [smem:[#allocation5 + %s1681]]
    %s1688 = sadd.f32 %s1672, %s1687
    %s1689 = smax.f32 %s1686, -0.08
    %s1690 = smin.f32 %s1689, 0.05
    %p1691 = scmp.gt.f32.partialorder %s1688, 0.02
    %s1692 = scalar_select %p1691, 0.05, %s1688
    %p1693 = scmp.lt.f32.partialorder %s1688, -0.02
    %s1694 = scalar_select %p1693, -0.02, %s1692
    %s1695 = scalar_lea.smem [#allocation8], 74
    %1696 = sst [smem:[%s1695]] %s1690
    %s1697 = smul.f32 %s1694, 775.0
    %s1698 = scvt.f32.s32.to.zero.pseudo %s1697
    %s1699 = smul.f32 %s1690, 484.6154
    %s1700 = scvt.f32.s32.to.zero.pseudo %s1699
    %s1701 = smul.u32 %s1698, 128
    %s1702 = sadd.s32 %s1701, %s1700
    %s1703 = sadd.s32 %s1702, 2216
    %s1704 = sld [smem:[#allocation7 + %s1703]]
    %s1705 = scalar_lea.smem [#allocation9], 75
    %1706 = sst [smem:[%s1705]] %s1704
    %s1707 = sld [smem:[#allocation2 + %s1703]]
    %s1708 = sadd.f32 %s1690, %s1707
    %s1709 = sld [smem:[#allocation5 + %s1703]]
    %s1710 = sadd.f32 %s1694, %s1709
    %s1711 = smax.f32 %s1708, -0.08
    %s1712 = smin.f32 %s1711, 0.05
    %p1713 = scmp.gt.f32.partialorder %s1710, 0.02
    %s1714 = scalar_select %p1713, 0.05, %s1710
    %p1715 = scmp.lt.f32.partialorder %s1710, -0.02
    %s1716 = scalar_select %p1715, -0.02, %s1714
    %s1717 = scalar_lea.smem [#allocation8], 75
    %1718 = sst [smem:[%s1717]] %s1712
    %s1719 = smul.f32 %s1716, 775.0
    %s1720 = scvt.f32.s32.to.zero.pseudo %s1719
    %s1721 = smul.f32 %s1712, 484.6154
    %s1722 = scvt.f32.s32.to.zero.pseudo %s1721
    %s1723 = smul.u32 %s1720, 128
    %s1724 = sadd.s32 %s1723, %s1722
    %s1725 = sadd.s32 %s1724, 2216
    %s1726 = sld [smem:[#allocation7 + %s1725]]
    %s1727 = scalar_lea.smem [#allocation9], 76
    %1728 = sst [smem:[%s1727]] %s1726
    %s1729 = sld [smem:[#allocation2 + %s1725]]
    %s1730 = sadd.f32 %s1712, %s1729
    %s1731 = sld [smem:[#allocation5 + %s1725]]
    %s1732 = sadd.f32 %s1716, %s1731
    %s1733 = smax.f32 %s1730, -0.08
    %s1734 = smin.f32 %s1733, 0.05
    %p1735 = scmp.gt.f32.partialorder %s1732, 0.02
    %s1736 = scalar_select %p1735, 0.05, %s1732
    %p1737 = scmp.lt.f32.partialorder %s1732, -0.02
    %s1738 = scalar_select %p1737, -0.02, %s1736
    %s1739 = scalar_lea.smem [#allocation8], 76
    %1740 = sst [smem:[%s1739]] %s1734
    %s1741 = smul.f32 %s1738, 775.0
    %s1742 = scvt.f32.s32.to.zero.pseudo %s1741
    %s1743 = smul.f32 %s1734, 484.6154
    %s1744 = scvt.f32.s32.to.zero.pseudo %s1743
    %s1745 = smul.u32 %s1742, 128
    %s1746 = sadd.s32 %s1745, %s1744
    %s1747 = sadd.s32 %s1746, 2216
    %s1748 = sld [smem:[#allocation7 + %s1747]]
    %s1749 = scalar_lea.smem [#allocation9], 77
    %1750 = sst [smem:[%s1749]] %s1748
    %s1751 = sld [smem:[#allocation2 + %s1747]]
    %s1752 = sadd.f32 %s1734, %s1751
    %s1753 = sld [smem:[#allocation5 + %s1747]]
    %s1754 = sadd.f32 %s1738, %s1753
    %s1755 = smax.f32 %s1752, -0.08
    %s1756 = smin.f32 %s1755, 0.05
    %p1757 = scmp.gt.f32.partialorder %s1754, 0.02
    %s1758 = scalar_select %p1757, 0.05, %s1754
    %p1759 = scmp.lt.f32.partialorder %s1754, -0.02
    %s1760 = scalar_select %p1759, -0.02, %s1758
    %s1761 = scalar_lea.smem [#allocation8], 77
    %1762 = sst [smem:[%s1761]] %s1756
    %s1763 = smul.f32 %s1760, 775.0
    %s1764 = scvt.f32.s32.to.zero.pseudo %s1763
    %s1765 = smul.f32 %s1756, 484.6154
    %s1766 = scvt.f32.s32.to.zero.pseudo %s1765
    %s1767 = smul.u32 %s1764, 128
    %s1768 = sadd.s32 %s1767, %s1766
    %s1769 = sadd.s32 %s1768, 2216
    %s1770 = sld [smem:[#allocation7 + %s1769]]
    %s1771 = scalar_lea.smem [#allocation9], 78
    %1772 = sst [smem:[%s1771]] %s1770
    %s1773 = sld [smem:[#allocation2 + %s1769]]
    %s1774 = sadd.f32 %s1756, %s1773
    %s1775 = sld [smem:[#allocation5 + %s1769]]
    %s1776 = sadd.f32 %s1760, %s1775
    %s1777 = smax.f32 %s1774, -0.08
    %s1778 = smin.f32 %s1777, 0.05
    %p1779 = scmp.gt.f32.partialorder %s1776, 0.02
    %s1780 = scalar_select %p1779, 0.05, %s1776
    %p1781 = scmp.lt.f32.partialorder %s1776, -0.02
    %s1782 = scalar_select %p1781, -0.02, %s1780
    %s1783 = scalar_lea.smem [#allocation8], 78
    %1784 = sst [smem:[%s1783]] %s1778
    %s1785 = smul.f32 %s1782, 775.0
    %s1786 = scvt.f32.s32.to.zero.pseudo %s1785
    %s1787 = smul.f32 %s1778, 484.6154
    %s1788 = scvt.f32.s32.to.zero.pseudo %s1787
    %s1789 = smul.u32 %s1786, 128
    %s1790 = sadd.s32 %s1789, %s1788
    %s1791 = sadd.s32 %s1790, 2216
    %s1792 = sld [smem:[#allocation7 + %s1791]]
    %s1793 = scalar_lea.smem [#allocation9], 79
    %1794 = sst [smem:[%s1793]] %s1792
    %s1795 = sld [smem:[#allocation2 + %s1791]]
    %s1796 = sadd.f32 %s1778, %s1795
    %s1797 = sld [smem:[#allocation5 + %s1791]]
    %s1798 = sadd.f32 %s1782, %s1797
    %s1799 = smax.f32 %s1796, -0.08
    %s1800 = smin.f32 %s1799, 0.05
    %p1801 = scmp.gt.f32.partialorder %s1798, 0.02
    %s1802 = scalar_select %p1801, 0.05, %s1798
    %p1803 = scmp.lt.f32.partialorder %s1798, -0.02
    %s1804 = scalar_select %p1803, -0.02, %s1802
    %s1805 = scalar_lea.smem [#allocation8], 79
    %1806 = sst [smem:[%s1805]] %s1800
    %s1807 = smul.f32 %s1804, 775.0
    %s1808 = scvt.f32.s32.to.zero.pseudo %s1807
    %s1809 = smul.f32 %s1800, 484.6154
    %s1810 = scvt.f32.s32.to.zero.pseudo %s1809
    %s1811 = smul.u32 %s1808, 128
    %s1812 = sadd.s32 %s1811, %s1810
    %s1813 = sadd.s32 %s1812, 2216
    %s1814 = sld [smem:[#allocation7 + %s1813]]
    %s1815 = scalar_lea.smem [#allocation9], 80
    %1816 = sst [smem:[%s1815]] %s1814
    %s1817 = sld [smem:[#allocation2 + %s1813]]
    %s1818 = sadd.f32 %s1800, %s1817
    %s1819 = sld [smem:[#allocation5 + %s1813]]
    %s1820 = sadd.f32 %s1804, %s1819
    %s1821 = smax.f32 %s1818, -0.08
    %s1822 = smin.f32 %s1821, 0.05
    %p1823 = scmp.gt.f32.partialorder %s1820, 0.02
    %s1824 = scalar_select %p1823, 0.05, %s1820
    %p1825 = scmp.lt.f32.partialorder %s1820, -0.02
    %s1826 = scalar_select %p1825, -0.02, %s1824
    %s1827 = scalar_lea.smem [#allocation8], 80
    %1828 = sst [smem:[%s1827]] %s1822
    %s1829 = smul.f32 %s1826, 775.0
    %s1830 = scvt.f32.s32.to.zero.pseudo %s1829
    %s1831 = smul.f32 %s1822, 484.6154
    %s1832 = scvt.f32.s32.to.zero.pseudo %s1831
    %s1833 = smul.u32 %s1830, 128
    %s1834 = sadd.s32 %s1833, %s1832
    %s1835 = sadd.s32 %s1834, 2216
    %s1836 = sld [smem:[#allocation7 + %s1835]]
    %s1837 = scalar_lea.smem [#allocation9], 81
    %1838 = sst [smem:[%s1837]] %s1836
    %s1839 = sld [smem:[#allocation2 + %s1835]]
    %s1840 = sadd.f32 %s1822, %s1839
    %s1841 = sld [smem:[#allocation5 + %s1835]]
    %s1842 = sadd.f32 %s1826, %s1841
    %s1843 = smax.f32 %s1840, -0.08
    %s1844 = smin.f32 %s1843, 0.05
    %p1845 = scmp.gt.f32.partialorder %s1842, 0.02
    %s1846 = scalar_select %p1845, 0.05, %s1842
    %p1847 = scmp.lt.f32.partialorder %s1842, -0.02
    %s1848 = scalar_select %p1847, -0.02, %s1846
    %s1849 = scalar_lea.smem [#allocation8], 81
    %1850 = sst [smem:[%s1849]] %s1844
    %s1851 = smul.f32 %s1848, 775.0
    %s1852 = scvt.f32.s32.to.zero.pseudo %s1851
    %s1853 = smul.f32 %s1844, 484.6154
    %s1854 = scvt.f32.s32.to.zero.pseudo %s1853
    %s1855 = smul.u32 %s1852, 128
    %s1856 = sadd.s32 %s1855, %s1854
    %s1857 = sadd.s32 %s1856, 2216
    %s1858 = sld [smem:[#allocation7 + %s1857]]
    %s1859 = scalar_lea.smem [#allocation9], 82
    %1860 = sst [smem:[%s1859]] %s1858
    %s1861 = sld [smem:[#allocation2 + %s1857]]
    %s1862 = sadd.f32 %s1844, %s1861
    %s1863 = sld [smem:[#allocation5 + %s1857]]
    %s1864 = sadd.f32 %s1848, %s1863
    %s1865 = smax.f32 %s1862, -0.08
    %s1866 = smin.f32 %s1865, 0.05
    %p1867 = scmp.gt.f32.partialorder %s1864, 0.02
    %s1868 = scalar_select %p1867, 0.05, %s1864
    %p1869 = scmp.lt.f32.partialorder %s1864, -0.02
    %s1870 = scalar_select %p1869, -0.02, %s1868
    %s1871 = scalar_lea.smem [#allocation8], 82
    %1872 = sst [smem:[%s1871]] %s1866
    %s1873 = smul.f32 %s1870, 775.0
    %s1874 = scvt.f32.s32.to.zero.pseudo %s1873
    %s1875 = smul.f32 %s1866, 484.6154
    %s1876 = scvt.f32.s32.to.zero.pseudo %s1875
    %s1877 = smul.u32 %s1874, 128
    %s1878 = sadd.s32 %s1877, %s1876
    %s1879 = sadd.s32 %s1878, 2216
    %s1880 = sld [smem:[#allocation7 + %s1879]]
    %s1881 = scalar_lea.smem [#allocation9], 83
    %1882 = sst [smem:[%s1881]] %s1880
    %s1883 = sld [smem:[#allocation2 + %s1879]]
    %s1884 = sadd.f32 %s1866, %s1883
    %s1885 = sld [smem:[#allocation5 + %s1879]]
    %s1886 = sadd.f32 %s1870, %s1885
    %s1887 = smax.f32 %s1884, -0.08
    %s1888 = smin.f32 %s1887, 0.05
    %p1889 = scmp.gt.f32.partialorder %s1886, 0.02
    %s1890 = scalar_select %p1889, 0.05, %s1886
    %p1891 = scmp.lt.f32.partialorder %s1886, -0.02
    %s1892 = scalar_select %p1891, -0.02, %s1890
    %s1893 = scalar_lea.smem [#allocation8], 83
    %1894 = sst [smem:[%s1893]] %s1888
    %s1895 = smul.f32 %s1892, 775.0
    %s1896 = scvt.f32.s32.to.zero.pseudo %s1895
    %s1897 = smul.f32 %s1888, 484.6154
    %s1898 = scvt.f32.s32.to.zero.pseudo %s1897
    %s1899 = smul.u32 %s1896, 128
    %s1900 = sadd.s32 %s1899, %s1898
    %s1901 = sadd.s32 %s1900, 2216
    %s1902 = sld [smem:[#allocation7 + %s1901]]
    %s1903 = scalar_lea.smem [#allocation9], 84
    %1904 = sst [smem:[%s1903]] %s1902
    %s1905 = sld [smem:[#allocation2 + %s1901]]
    %s1906 = sadd.f32 %s1888, %s1905
    %s1907 = sld [smem:[#allocation5 + %s1901]]
    %s1908 = sadd.f32 %s1892, %s1907
    %s1909 = smax.f32 %s1906, -0.08
    %s1910 = smin.f32 %s1909, 0.05
    %p1911 = scmp.gt.f32.partialorder %s1908, 0.02
    %s1912 = scalar_select %p1911, 0.05, %s1908
    %p1913 = scmp.lt.f32.partialorder %s1908, -0.02
    %s1914 = scalar_select %p1913, -0.02, %s1912
    %s1915 = scalar_lea.smem [#allocation8], 84
    %1916 = sst [smem:[%s1915]] %s1910
    %s1917 = smul.f32 %s1914, 775.0
    %s1918 = scvt.f32.s32.to.zero.pseudo %s1917
    %s1919 = smul.f32 %s1910, 484.6154
    %s1920 = scvt.f32.s32.to.zero.pseudo %s1919
    %s1921 = smul.u32 %s1918, 128
    %s1922 = sadd.s32 %s1921, %s1920
    %s1923 = sadd.s32 %s1922, 2216
    %s1924 = sld [smem:[#allocation7 + %s1923]]
    %s1925 = scalar_lea.smem [#allocation9], 85
    %1926 = sst [smem:[%s1925]] %s1924
    %s1927 = sld [smem:[#allocation2 + %s1923]]
    %s1928 = sadd.f32 %s1910, %s1927
    %s1929 = sld [smem:[#allocation5 + %s1923]]
    %s1930 = sadd.f32 %s1914, %s1929
    %s1931 = smax.f32 %s1928, -0.08
    %s1932 = smin.f32 %s1931, 0.05
    %p1933 = scmp.gt.f32.partialorder %s1930, 0.02
    %s1934 = scalar_select %p1933, 0.05, %s1930
    %p1935 = scmp.lt.f32.partialorder %s1930, -0.02
    %s1936 = scalar_select %p1935, -0.02, %s1934
    %s1937 = scalar_lea.smem [#allocation8], 85
    %1938 = sst [smem:[%s1937]] %s1932
    %s1939 = smul.f32 %s1936, 775.0
    %s1940 = scvt.f32.s32.to.zero.pseudo %s1939
    %s1941 = smul.f32 %s1932, 484.6154
    %s1942 = scvt.f32.s32.to.zero.pseudo %s1941
    %s1943 = smul.u32 %s1940, 128
    %s1944 = sadd.s32 %s1943, %s1942
    %s1945 = sadd.s32 %s1944, 2216
    %s1946 = sld [smem:[#allocation7 + %s1945]]
    %s1947 = scalar_lea.smem [#allocation9], 86
    %1948 = sst [smem:[%s1947]] %s1946
    %s1949 = sld [smem:[#allocation2 + %s1945]]
    %s1950 = sadd.f32 %s1932, %s1949
    %s1951 = sld [smem:[#allocation5 + %s1945]]
    %s1952 = sadd.f32 %s1936, %s1951
    %s1953 = smax.f32 %s1950, -0.08
    %s1954 = smin.f32 %s1953, 0.05
    %p1955 = scmp.gt.f32.partialorder %s1952, 0.02
    %s1956 = scalar_select %p1955, 0.05, %s1952
    %p1957 = scmp.lt.f32.partialorder %s1952, -0.02
    %s1958 = scalar_select %p1957, -0.02, %s1956
    %s1959 = scalar_lea.smem [#allocation8], 86
    %1960 = sst [smem:[%s1959]] %s1954
    %s1961 = smul.f32 %s1958, 775.0
    %s1962 = scvt.f32.s32.to.zero.pseudo %s1961
    %s1963 = smul.f32 %s1954, 484.6154
    %s1964 = scvt.f32.s32.to.zero.pseudo %s1963
    %s1965 = smul.u32 %s1962, 128
    %s1966 = sadd.s32 %s1965, %s1964
    %s1967 = sadd.s32 %s1966, 2216
    %s1968 = sld [smem:[#allocation7 + %s1967]]
    %s1969 = scalar_lea.smem [#allocation9], 87
    %1970 = sst [smem:[%s1969]] %s1968
    %s1971 = sld [smem:[#allocation2 + %s1967]]
    %s1972 = sadd.f32 %s1954, %s1971
    %s1973 = sld [smem:[#allocation5 + %s1967]]
    %s1974 = sadd.f32 %s1958, %s1973
    %s1975 = smax.f32 %s1972, -0.08
    %s1976 = smin.f32 %s1975, 0.05
    %p1977 = scmp.gt.f32.partialorder %s1974, 0.02
    %s1978 = scalar_select %p1977, 0.05, %s1974
    %p1979 = scmp.lt.f32.partialorder %s1974, -0.02
    %s1980 = scalar_select %p1979, -0.02, %s1978
    %s1981 = scalar_lea.smem [#allocation8], 87
    %1982 = sst [smem:[%s1981]] %s1976
    %s1983 = smul.f32 %s1980, 775.0
    %s1984 = scvt.f32.s32.to.zero.pseudo %s1983
    %s1985 = smul.f32 %s1976, 484.6154
    %s1986 = scvt.f32.s32.to.zero.pseudo %s1985
    %s1987 = smul.u32 %s1984, 128
    %s1988 = sadd.s32 %s1987, %s1986
    %s1989 = sadd.s32 %s1988, 2216
    %s1990 = sld [smem:[#allocation7 + %s1989]]
    %s1991 = scalar_lea.smem [#allocation9], 88
    %1992 = sst [smem:[%s1991]] %s1990
    %s1993 = sld [smem:[#allocation2 + %s1989]]
    %s1994 = sadd.f32 %s1976, %s1993
    %s1995 = sld [smem:[#allocation5 + %s1989]]
    %s1996 = sadd.f32 %s1980, %s1995
    %s1997 = smax.f32 %s1994, -0.08
    %s1998 = smin.f32 %s1997, 0.05
    %p1999 = scmp.gt.f32.partialorder %s1996, 0.02
    %s2000 = scalar_select %p1999, 0.05, %s1996
    %p2001 = scmp.lt.f32.partialorder %s1996, -0.02
    %s2002 = scalar_select %p2001, -0.02, %s2000
    %s2003 = scalar_lea.smem [#allocation8], 88
    %2004 = sst [smem:[%s2003]] %s1998
    %s2005 = smul.f32 %s2002, 775.0
    %s2006 = scvt.f32.s32.to.zero.pseudo %s2005
    %s2007 = smul.f32 %s1998, 484.6154
    %s2008 = scvt.f32.s32.to.zero.pseudo %s2007
    %s2009 = smul.u32 %s2006, 128
    %s2010 = sadd.s32 %s2009, %s2008
    %s2011 = sadd.s32 %s2010, 2216
    %s2012 = sld [smem:[#allocation7 + %s2011]]
    %s2013 = scalar_lea.smem [#allocation9], 89
    %2014 = sst [smem:[%s2013]] %s2012
    %s2015 = sld [smem:[#allocation2 + %s2011]]
    %s2016 = sadd.f32 %s1998, %s2015
    %s2017 = sld [smem:[#allocation5 + %s2011]]
    %s2018 = sadd.f32 %s2002, %s2017
    %s2019 = smax.f32 %s2016, -0.08
    %s2020 = smin.f32 %s2019, 0.05
    %p2021 = scmp.gt.f32.partialorder %s2018, 0.02
    %s2022 = scalar_select %p2021, 0.05, %s2018
    %p2023 = scmp.lt.f32.partialorder %s2018, -0.02
    %s2024 = scalar_select %p2023, -0.02, %s2022
    %s2025 = scalar_lea.smem [#allocation8], 89
    %2026 = sst [smem:[%s2025]] %s2020
    %s2027 = smul.f32 %s2024, 775.0
    %s2028 = scvt.f32.s32.to.zero.pseudo %s2027
    %s2029 = smul.f32 %s2020, 484.6154
    %s2030 = scvt.f32.s32.to.zero.pseudo %s2029
    %s2031 = smul.u32 %s2028, 128
    %s2032 = sadd.s32 %s2031, %s2030
    %s2033 = sadd.s32 %s2032, 2216
    %s2034 = sld [smem:[#allocation7 + %s2033]]
    %s2035 = scalar_lea.smem [#allocation9], 90
    %2036 = sst [smem:[%s2035]] %s2034
    %s2037 = sld [smem:[#allocation2 + %s2033]]
    %s2038 = sadd.f32 %s2020, %s2037
    %s2039 = sld [smem:[#allocation5 + %s2033]]
    %s2040 = sadd.f32 %s2024, %s2039
    %s2041 = smax.f32 %s2038, -0.08
    %s2042 = smin.f32 %s2041, 0.05
    %p2043 = scmp.gt.f32.partialorder %s2040, 0.02
    %s2044 = scalar_select %p2043, 0.05, %s2040
    %p2045 = scmp.lt.f32.partialorder %s2040, -0.02
    %s2046 = scalar_select %p2045, -0.02, %s2044
    %s2047 = scalar_lea.smem [#allocation8], 90
    %2048 = sst [smem:[%s2047]] %s2042
    %s2049 = smul.f32 %s2046, 775.0
    %s2050 = scvt.f32.s32.to.zero.pseudo %s2049
    %s2051 = smul.f32 %s2042, 484.6154
    %s2052 = scvt.f32.s32.to.zero.pseudo %s2051
    %s2053 = smul.u32 %s2050, 128
    %s2054 = sadd.s32 %s2053, %s2052
    %s2055 = sadd.s32 %s2054, 2216
    %s2056 = sld [smem:[#allocation7 + %s2055]]
    %s2057 = scalar_lea.smem [#allocation9], 91
    %2058 = sst [smem:[%s2057]] %s2056
    %s2059 = sld [smem:[#allocation2 + %s2055]]
    %s2060 = sadd.f32 %s2042, %s2059
    %s2061 = sld [smem:[#allocation5 + %s2055]]
    %s2062 = sadd.f32 %s2046, %s2061
    %s2063 = smax.f32 %s2060, -0.08
    %s2064 = smin.f32 %s2063, 0.05
    %p2065 = scmp.gt.f32.partialorder %s2062, 0.02
    %s2066 = scalar_select %p2065, 0.05, %s2062
    %p2067 = scmp.lt.f32.partialorder %s2062, -0.02
    %s2068 = scalar_select %p2067, -0.02, %s2066
    %s2069 = scalar_lea.smem [#allocation8], 91
    %2070 = sst [smem:[%s2069]] %s2064
    %s2071 = smul.f32 %s2068, 775.0
    %s2072 = scvt.f32.s32.to.zero.pseudo %s2071
    %s2073 = smul.f32 %s2064, 484.6154
    %s2074 = scvt.f32.s32.to.zero.pseudo %s2073
    %s2075 = smul.u32 %s2072, 128
    %s2076 = sadd.s32 %s2075, %s2074
    %s2077 = sadd.s32 %s2076, 2216
    %s2078 = sld [smem:[#allocation7 + %s2077]]
    %s2079 = scalar_lea.smem [#allocation9], 92
    %2080 = sst [smem:[%s2079]] %s2078
    %s2081 = sld [smem:[#allocation2 + %s2077]]
    %s2082 = sadd.f32 %s2064, %s2081
    %s2083 = sld [smem:[#allocation5 + %s2077]]
    %s2084 = sadd.f32 %s2068, %s2083
    %s2085 = smax.f32 %s2082, -0.08
    %s2086 = smin.f32 %s2085, 0.05
    %p2087 = scmp.gt.f32.partialorder %s2084, 0.02
    %s2088 = scalar_select %p2087, 0.05, %s2084
    %p2089 = scmp.lt.f32.partialorder %s2084, -0.02
    %s2090 = scalar_select %p2089, -0.02, %s2088
    %s2091 = scalar_lea.smem [#allocation8], 92
    %2092 = sst [smem:[%s2091]] %s2086
    %s2093 = smul.f32 %s2090, 775.0
    %s2094 = scvt.f32.s32.to.zero.pseudo %s2093
    %s2095 = smul.f32 %s2086, 484.6154
    %s2096 = scvt.f32.s32.to.zero.pseudo %s2095
    %s2097 = smul.u32 %s2094, 128
    %s2098 = sadd.s32 %s2097, %s2096
    %s2099 = sadd.s32 %s2098, 2216
    %s2100 = sld [smem:[#allocation7 + %s2099]]
    %s2101 = scalar_lea.smem [#allocation9], 93
    %2102 = sst [smem:[%s2101]] %s2100
    %s2103 = sld [smem:[#allocation2 + %s2099]]
    %s2104 = sadd.f32 %s2086, %s2103
    %s2105 = sld [smem:[#allocation5 + %s2099]]
    %s2106 = sadd.f32 %s2090, %s2105
    %s2107 = smax.f32 %s2104, -0.08
    %s2108 = smin.f32 %s2107, 0.05
    %p2109 = scmp.gt.f32.partialorder %s2106, 0.02
    %s2110 = scalar_select %p2109, 0.05, %s2106
    %p2111 = scmp.lt.f32.partialorder %s2106, -0.02
    %s2112 = scalar_select %p2111, -0.02, %s2110
    %s2113 = scalar_lea.smem [#allocation8], 93
    %2114 = sst [smem:[%s2113]] %s2108
    %s2115 = smul.f32 %s2112, 775.0
    %s2116 = scvt.f32.s32.to.zero.pseudo %s2115
    %s2117 = smul.f32 %s2108, 484.6154
    %s2118 = scvt.f32.s32.to.zero.pseudo %s2117
    %s2119 = smul.u32 %s2116, 128
    %s2120 = sadd.s32 %s2119, %s2118
    %s2121 = sadd.s32 %s2120, 2216
    %s2122 = sld [smem:[#allocation7 + %s2121]]
    %s2123 = scalar_lea.smem [#allocation9], 94
    %2124 = sst [smem:[%s2123]] %s2122
    %s2125 = sld [smem:[#allocation2 + %s2121]]
    %s2126 = sadd.f32 %s2108, %s2125
    %s2127 = sld [smem:[#allocation5 + %s2121]]
    %s2128 = sadd.f32 %s2112, %s2127
    %s2129 = smax.f32 %s2126, -0.08
    %s2130 = smin.f32 %s2129, 0.05
    %p2131 = scmp.gt.f32.partialorder %s2128, 0.02
    %s2132 = scalar_select %p2131, 0.05, %s2128
    %p2133 = scmp.lt.f32.partialorder %s2128, -0.02
    %s2134 = scalar_select %p2133, -0.02, %s2132
    %s2135 = scalar_lea.smem [#allocation8], 94
    %2136 = sst [smem:[%s2135]] %s2130
    %s2137 = smul.f32 %s2134, 775.0
    %s2138 = scvt.f32.s32.to.zero.pseudo %s2137
    %s2139 = smul.f32 %s2130, 484.6154
    %s2140 = scvt.f32.s32.to.zero.pseudo %s2139
    %s2141 = smul.u32 %s2138, 128
    %s2142 = sadd.s32 %s2141, %s2140
    %s2143 = sadd.s32 %s2142, 2216
    %s2144 = sld [smem:[#allocation7 + %s2143]]
    %s2145 = scalar_lea.smem [#allocation9], 95
    %2146 = sst [smem:[%s2145]] %s2144
    %s2147 = sld [smem:[#allocation2 + %s2143]]
    %s2148 = sadd.f32 %s2130, %s2147
    %s2149 = sld [smem:[#allocation5 + %s2143]]
    %s2150 = sadd.f32 %s2134, %s2149
    %s2151 = smax.f32 %s2148, -0.08
    %s2152 = smin.f32 %s2151, 0.05
    %p2153 = scmp.gt.f32.partialorder %s2150, 0.02
    %s2154 = scalar_select %p2153, 0.05, %s2150
    %p2155 = scmp.lt.f32.partialorder %s2150, -0.02
    %s2156 = scalar_select %p2155, -0.02, %s2154
    %s2157 = scalar_lea.smem [#allocation8], 95
    %2158 = sst [smem:[%s2157]] %s2152
    %s2159 = smul.f32 %s2156, 775.0
    %s2160 = scvt.f32.s32.to.zero.pseudo %s2159
    %s2161 = smul.f32 %s2152, 484.6154
    %s2162 = scvt.f32.s32.to.zero.pseudo %s2161
    %s2163 = smul.u32 %s2160, 128
    %s2164 = sadd.s32 %s2163, %s2162
    %s2165 = sadd.s32 %s2164, 2216
    %s2166 = sld [smem:[#allocation7 + %s2165]]
    %s2167 = scalar_lea.smem [#allocation9], 96
    %2168 = sst [smem:[%s2167]] %s2166
    %s2169 = sld [smem:[#allocation2 + %s2165]]
    %s2170 = sadd.f32 %s2152, %s2169
    %s2171 = sld [smem:[#allocation5 + %s2165]]
    %s2172 = sadd.f32 %s2156, %s2171
    %s2173 = smax.f32 %s2170, -0.08
    %s2174 = smin.f32 %s2173, 0.05
    %p2175 = scmp.gt.f32.partialorder %s2172, 0.02
    %s2176 = scalar_select %p2175, 0.05, %s2172
    %p2177 = scmp.lt.f32.partialorder %s2172, -0.02
    %s2178 = scalar_select %p2177, -0.02, %s2176
    %s2179 = scalar_lea.smem [#allocation8], 96
    %2180 = sst [smem:[%s2179]] %s2174
    %s2181 = smul.f32 %s2178, 775.0
    %s2182 = scvt.f32.s32.to.zero.pseudo %s2181
    %s2183 = smul.f32 %s2174, 484.6154
    %s2184 = scvt.f32.s32.to.zero.pseudo %s2183
    %s2185 = smul.u32 %s2182, 128
    %s2186 = sadd.s32 %s2185, %s2184
    %s2187 = sadd.s32 %s2186, 2216
    %s2188 = sld [smem:[#allocation7 + %s2187]]
    %s2189 = scalar_lea.smem [#allocation9], 97
    %2190 = sst [smem:[%s2189]] %s2188
    %s2191 = sld [smem:[#allocation2 + %s2187]]
    %s2192 = sadd.f32 %s2174, %s2191
    %s2193 = sld [smem:[#allocation5 + %s2187]]
    %s2194 = sadd.f32 %s2178, %s2193
    %s2195 = smax.f32 %s2192, -0.08
    %s2196 = smin.f32 %s2195, 0.05
    %p2197 = scmp.gt.f32.partialorder %s2194, 0.02
    %s2198 = scalar_select %p2197, 0.05, %s2194
    %p2199 = scmp.lt.f32.partialorder %s2194, -0.02
    %s2200 = scalar_select %p2199, -0.02, %s2198
    %s2201 = scalar_lea.smem [#allocation8], 97
    %2202 = sst [smem:[%s2201]] %s2196
    %s2203 = smul.f32 %s2200, 775.0
    %s2204 = scvt.f32.s32.to.zero.pseudo %s2203
    %s2205 = smul.f32 %s2196, 484.6154
    %s2206 = scvt.f32.s32.to.zero.pseudo %s2205
    %s2207 = smul.u32 %s2204, 128
    %s2208 = sadd.s32 %s2207, %s2206
    %s2209 = sadd.s32 %s2208, 2216
    %s2210 = sld [smem:[#allocation7 + %s2209]]
    %s2211 = scalar_lea.smem [#allocation9], 98
    %2212 = sst [smem:[%s2211]] %s2210
    %s2213 = sld [smem:[#allocation2 + %s2209]]
    %s2214 = sadd.f32 %s2196, %s2213
    %s2215 = sld [smem:[#allocation5 + %s2209]]
    %s2216 = sadd.f32 %s2200, %s2215
    %s2217 = smax.f32 %s2214, -0.08
    %s2218 = smin.f32 %s2217, 0.05
    %p2219 = scmp.gt.f32.partialorder %s2216, 0.02
    %s2220 = scalar_select %p2219, 0.05, %s2216
    %p2221 = scmp.lt.f32.partialorder %s2216, -0.02
    %s2222 = scalar_select %p2221, -0.02, %s2220
    %s2223 = scalar_lea.smem [#allocation8], 98
    %2224 = sst [smem:[%s2223]] %s2218
    %s2225 = smul.f32 %s2222, 775.0
    %s2226 = scvt.f32.s32.to.zero.pseudo %s2225
    %s2227 = smul.f32 %s2218, 484.6154
    %s2228 = scvt.f32.s32.to.zero.pseudo %s2227
    %s2229 = smul.u32 %s2226, 128
    %s2230 = sadd.s32 %s2229, %s2228
    %s2231 = sadd.s32 %s2230, 2216
    %s2232 = sld [smem:[#allocation7 + %s2231]]
    %s2233 = scalar_lea.smem [#allocation9], 99
    %2234 = sst [smem:[%s2233]] %s2232
    %s2235 = sld [smem:[#allocation2 + %s2231]]
    %s2236 = sadd.f32 %s2218, %s2235
    %s2237 = sld [smem:[#allocation5 + %s2231]]
    %s2238 = sadd.f32 %s2222, %s2237
    %s2239 = smax.f32 %s2236, -0.08
    %s2240 = smin.f32 %s2239, 0.05
    %p2241 = scmp.gt.f32.partialorder %s2238, 0.02
    %s2242 = scalar_select %p2241, 0.05, %s2238
    %p2243 = scmp.lt.f32.partialorder %s2238, -0.02
    %s2244 = scalar_select %p2243, -0.02, %s2242
    %s2245 = scalar_lea.smem [#allocation8], 99
    %2246 = sst [smem:[%s2245]] %s2240
    %s2247 = smul.f32 %s2244, 775.0
    %s2248 = scvt.f32.s32.to.zero.pseudo %s2247
    %s2249 = smul.f32 %s2240, 484.6154
    %s2250 = scvt.f32.s32.to.zero.pseudo %s2249
    %s2251 = smul.u32 %s2248, 128
    %s2252 = sadd.s32 %s2251, %s2250
    %s2253 = sadd.s32 %s2252, 2216
    %s2254 = sld [smem:[#allocation7 + %s2253]]
    %s2255 = scalar_lea.smem [#allocation9], 100
    %2256 = sst [smem:[%s2255]] %s2254
    %s2257 = sld [smem:[#allocation2 + %s2253]]
    %s2258 = sadd.f32 %s2240, %s2257
    %s2259 = smax.f32 %s2258, -0.08
    %s2260 = smin.f32 %s2259, 0.05
    %s2261 = scalar_lea.smem [#allocation8], 100
    %2262 = sst [smem:[%s2261]] %s2260
    // Predicated region
    $region26: #{spiking_net.1} parent=1 // pred_check
      _
    $region27: #{spiking_net.1} parent=1 // pred_check_branch
      %2264 = sbr.rel (0) target = $region29
    $region28: #{spiking_net.1} parent=1 // pred_region
      %2266 = vsyncadd [#allocation3], 0
      %s2268 = sshll.u32 %s3, 4
      %s2269 = int_to_ptr.hbm [resolvable:$true] %s2268
      %2271 = dma.smem_to_hbm [#allocation8], 16, %s2269, [#allocation3]
    $region29: #{spiking_net.1} parent=1 // pred_fallthru
      _
    // Predicated region
    $region30: #{spiking_net.1} parent=1 // pred_check
      _
    $region31: #{spiking_net.1} parent=1 // pred_check_branch
      %2273 = sbr.rel (0) target = $region33
    $region32: #{spiking_net.1} parent=1 // pred_region
      %2275 = vsyncadd [#allocation10], 0
      %s2277 = sshll.u32 %s4, 4
      %s2278 = int_to_ptr.hbm [resolvable:$true] %s2277
      %2280 = dma.smem_to_hbm [#allocation9], 16, %s2278, [#allocation10]
    $region33: #{spiking_net.1} parent=1 // pred_fallthru
      _
    // Predicated region
    $region34: #{spiking_net.1} parent=1 // pred_check
      _
    $region35: #{spiking_net.1} parent=1 // pred_check_branch
      %2282 = sbr.rel (0) target = $region37
    $region36: #{spiking_net.1} parent=1 // pred_region
      %2284 = dma.done [#allocation3], 16
    $region37: #{spiking_net.1} parent=1 // pred_fallthru
      _
    // Predicated region
    $region38: #{spiking_net.1} parent=1 // pred_check
      _
    $region39: #{spiking_net.1} parent=1 // pred_check_branch
      %2286 = sbr.rel (0) target = $region41
    $region40: #{spiking_net.1} parent=1 // pred_region
      %2288 = dma.done [#allocation10], 16
    $region41: #{spiking_net.1} parent=1 // pred_fallthru
      _
    %2289 = sfence
    %2290 = vsyncpa [#allocation3], 1
    %2291 = vsyncpa [#allocation10], 1
    %2292 = vsyncpa [#allocation4], 1
    %2293 = vsyncpa [#allocation6], 1

</llo_original>
